<compile_context>
chip_gen: v5e
topology: v5e:2x2
jax: 0.10.0
libtpu: 0.0.40
codegen_flags: <defaults>
</compile_context>

<pallas_src>
import functools

import jax
import jax.numpy as jnp
from jax import lax
from jax.experimental import pallas as pl
from jax.experimental.pallas import tpu as pltpu

_LN_EPS = 1e-5          # nn.LayerNorm default
_LRELU_SLOPE = 0.01     # F.leaky_relu default


def _round_up(n, m):
    return ((n + m - 1) // m) * m


def _idx0_2d(i):
    return (0, 0)


def _idx0_3d(i):
    return (0, 0, 0)


def _choose_batch_tile(B, T, cin_p, cout_p, vmem_budget=24 << 20):
    """Largest batch tile that fits a conservative VMEM budget (headroom for
    v7x's 64 MiB), preferring >=256 matmul rows and an even grid (2 TCs)."""
    def est_bytes(tb):
        rows = tb * T
        io = 2 * rows * cin_p * 4 + 2 * rows * 2 * cout_p * 4     # x + y blocks, double-buffered
        inter = 7 * rows * cin_p * 4 + rows * 3 * cin_p * 2       # live f32 temps + bf16 tap concat
        w = (2 * 3 * cin_p * cin_p + 2 * 2 * cin_p * cout_p) * 2  # bf16 weights
        return io + inter + w

    divisors = [d for d in range(1, B + 1) if B % d == 0]
    fitting = [d for d in divisors if est_bytes(d) <= vmem_budget] or [1]

    def score(d):
        grid = B // d
        return (d * T >= 256,                 # enough M rows to fill the MXU
                grid >= 2 and grid % 2 == 0,  # even grid -> both v7x TensorCores busy
                d)                            # otherwise: biggest tile (amortize step overhead)
    return max(fitting, key=score)


def _upblock_kernel(x_ref,
                    g1_ref, b1_ref, g2_ref, b2_ref, g3_ref, b3_ref,
                    w1_ref, w2_ref, wue_ref, wuo_ref,
                    y_ref, *, t_len, inv_c, matmul_dtype):
    TB, T, Cp = x_ref.shape
    M = TB * T
    x = x_ref[...].astype(jnp.float32).reshape(M, Cp)   # flatten (TB,T)->rows: big matmul M

    # Per-row time position (rows = flattened batch*time); boundary masks for the
    # k=3 "same" padding.  Rolls that wrap across batch items land exactly on the
    # masked boundary rows, so flattening is safe.
    rows = lax.broadcasted_iota(jnp.int32, (M, 1), 0)
    tpos = rows % t_len
    has_prev = tpos != 0
    has_next = tpos != (t_len - 1)

    def layernorm(v, g_ref, b_ref):
        # Two independent reductions; divide by the TRUE channel count so the
        # zero-padded lanes do not perturb the statistics.
        g = g_ref[...].astype(jnp.float32)               # (1, Cp), zero on padded lanes
        b = b_ref[...].astype(jnp.float32)
        s1 = jnp.sum(v, axis=-1, keepdims=True)
        s2 = jnp.sum(v * v, axis=-1, keepdims=True)
        mu = s1 * inv_c
        var = s2 * inv_c - mu * mu
        return (v - mu) * lax.rsqrt(var + _LN_EPS) * g + b

    def leaky_relu(v):
        return jnp.maximum(v, _LRELU_SLOPE * v)

    def taps(v):
        # prev[t] = v[t-1], next[t] = v[t+1], zero at sequence boundaries.
        # pltpu.roll -> XLU slot; no concat-with-zero-row temporaries.
        prev = jnp.where(has_prev, pltpu.roll(v, shift=1, axis=0), 0.0)
        nxt = jnp.where(has_next, pltpu.roll(v, shift=M - 1, axis=0), 0.0)
        return (prev.astype(matmul_dtype), v.astype(matmul_dtype),
                nxt.astype(matmul_dtype))

    def residual(v, g_ref, b_ref, w_ref):
        p, c, n = taps(leaky_relu(layernorm(v, g_ref, b_ref)))
        zcat = jnp.concatenate([p, c, n], axis=-1)        # (M, 3*Cp) -> one K=3*Cp matmul
        return v + jnp.dot(zcat, w_ref[...], preferred_element_type=jnp.float32)

    # ResNetBlock = two residual blocks (all in f32 on the residual path)
    h = residual(x, g1_ref, b1_ref, w1_ref)
    h = residual(h, g2_ref, b2_ref, w2_ref)

    # UpsampleBlock: norm -> leaky_relu -> (nearest x2 + conv3) folded into even/odd
    # matmuls with pre-combined weights:
    #   y[2t]   = W0 z[t-1] + (W1+W2) z[t]
    #   y[2t+1] = (W0+W1) z[t] + W2 z[t+1]
    p, c, n = taps(leaky_relu(layernorm(h, g3_ref, b3_ref)))
    y_even = jnp.dot(jnp.concatenate([p, c], axis=-1), wue_ref[...],
                     preferred_element_type=jnp.float32)
    y_odd = jnp.dot(jnp.concatenate([c, n], axis=-1), wuo_ref[...],
                    preferred_element_type=jnp.float32)

    # Single lane-dense output block: even channels in lanes [0:Coutp), odd in
    # [Coutp:2*Coutp).  The wrapper's contiguous reshape interleaves time for free.
    y = jnp.concatenate([y_even, y_odd], axis=-1)          # (M, 2*Coutp)
    y_ref[...] = y.reshape(TB, T, y.shape[-1]).astype(y_ref.dtype)


def upblock_forward(x, params, *, batch_tile=None, pad_channels=True,
                    single_buffer_weights=True, matmul_dtype=jnp.bfloat16):
    """x: (B, C_in, T) float32.

    params (PyTorch layouts):
      g1,b1,g2,b2,g3,b3: (C_in,)          LayerNorm affine params (res1, res2, upsample)
      w1,w2:             (C_in, C_in, 3)  residual conv weights
      wu:                (C_out, C_in, 3) upsample conv weight
    Returns y: (B, C_out, 2*T).
    """
    B, Cin, T = x.shape
    Cout, cin_w, k = params["wu"].shape
    assert cin_w == Cin and k == 3

    cin_p = _round_up(Cin, 128) if pad_channels else Cin
    cout_p = _round_up(Cout, 128) if pad_channels else Cout

    if batch_tile is None:
        batch_tile = _choose_batch_tile(B, T, cin_p, cout_p)
    assert B % batch_tile == 0
    TB = batch_tile

    # ---------------- hoisted, grid-invariant prep (runs once) ----------------
    # channels-last activations with zero-padded channel lanes
    x_btc = jnp.transpose(x, (0, 2, 1))                           # (B, T, Cin)
    if cin_p != Cin:
        x_btc = jnp.pad(x_btc, ((0, 0), (0, 0), (0, cin_p - Cin)))

    def ln_param(p):
        v = p.reshape(1, Cin).astype(jnp.float32)
        if cin_p != Cin:
            v = jnp.pad(v, ((0, 0), (0, cin_p - Cin)))            # zero gain/bias on padded lanes
        return v

    def conv_taps(w, ncols):                                      # (Cout', Cin, 3) -> (3, cin_p, ncols)
        wt = jnp.transpose(w, (2, 1, 0)).astype(jnp.float32)      # (3, Cin, Cout')
        return jnp.pad(wt, ((0, 0), (0, cin_p - Cin), (0, ncols - w.shape[0])))

    w1t = conv_taps(params["w1"], cin_p)
    w2t = conv_taps(params["w2"], cin_p)
    wut = conv_taps(params["wu"], cout_p)

    # fused conv taps: rows [0:Cp)=W0 (prev), [Cp:2Cp)=W1 (cur), [2Cp:3Cp)=W2 (next)
    w1c = w1t.reshape(3 * cin_p, cin_p).astype(matmul_dtype)
    w2c = w2t.reshape(3 * cin_p, cin_p).astype(matmul_dtype)
    # nearest-x2 upsample + conv3 folding (even/odd weights)
    wue = jnp.concatenate([wut[0], wut[1] + wut[2]], axis=0).astype(matmul_dtype)
    wuo = jnp.concatenate([wut[0] + wut[1], wut[2]], axis=0).astype(matmul_dtype)

    g1, b1 = ln_param(params["g1"]), ln_param(params["b1"])
    g2, b2 = ln_param(params["g2"]), ln_param(params["b2"])
    g3, b3 = ln_param(params["g3"]), ln_param(params["b3"])

    kernel = functools.partial(_upblock_kernel, t_len=T, inv_c=1.0 / Cin,
                               matmul_dtype=matmul_dtype)

    def _call(use_single_buffer):
        def const_spec(shape):
            idx = _idx0_2d if len(shape) == 2 else _idx0_3d
            if use_single_buffer:
                # grid-invariant operand: single-buffered (saves VMEM, esp. v7x 64 MiB)
                return pl.BlockSpec(shape, idx, pipeline_mode=pl.Buffered(1))
            return pl.BlockSpec(shape, idx)

        grid_spec = pltpu.PrefetchScalarGridSpec(
            num_scalar_prefetch=0,
            grid=(B // TB,),
            in_specs=[
                pl.BlockSpec((TB, T, cin_p), lambda i: (i, 0, 0)),     # x tile
                const_spec((1, cin_p)), const_spec((1, cin_p)),        # g1, b1
                const_spec((1, cin_p)), const_spec((1, cin_p)),        # g2, b2
                const_spec((1, cin_p)), const_spec((1, cin_p)),        # g3, b3
                const_spec((3 * cin_p, cin_p)),                        # w1 (taps stacked)
                const_spec((3 * cin_p, cin_p)),                        # w2 (taps stacked)
                const_spec((2 * cin_p, cout_p)),                       # wu even (folded)
                const_spec((2 * cin_p, cout_p)),                       # wu odd  (folded)
            ],
            out_specs=pl.BlockSpec((TB, T, 2 * cout_p), lambda i: (i, 0, 0)),
        )
        return pl.pallas_call(
            kernel,
            out_shape=jax.ShapeDtypeStruct((B, T, 2 * cout_p), x.dtype),
            grid_spec=grid_spec,
            compiler_params=pltpu.CompilerParams(
                dimension_semantics=("parallel",),        # megacore: shard batch tiles
                vmem_limit_bytes=48 * 1024 * 1024),       # explicit; tile chooser stays well under
        )(x_btc, g1, b1, g2, b2, g3, b3, w1c, w2c, wue, wuo)

    if single_buffer_weights:
        try:
            y = _call(True)
        except Exception:
            # Fallback if this JAX/Mosaic version rejects buffer_count=1.
            y = _call(False)
    else:
        y = _call(False)

    # (B, T, 2*cout_p) -> (B, 2T, cout_p): contiguous reshape performs the even/odd
    # time interleave for free (no stack copy / extra HBM pass); then drop padded
    # output channels.
    y = y.reshape(B, 2 * T, cout_p)[:, :, :Cout]
    # TODO(synk): keep the surrounding model channels-last (NTC) end-to-end to drop
    # this NTC->NCT transpose and the NCT->NTC transpose on the input.
    # TODO(synk): for very long T on v7x (64 MiB VMEM), add an inner time-tiled
    # pipeline (1-row halos) to bound live intermediates instead of whole-T blocks.
    return jnp.transpose(y, (0, 2, 1))


def _reference(x, p):
    """Pure-JAX f32 reference matching the PyTorch module (NCT layout)."""
    def ln(v, g, b):
        vt = jnp.transpose(v, (0, 2, 1))
        mu = jnp.mean(vt, axis=-1, keepdims=True)
        var = jnp.mean((vt - mu) ** 2, axis=-1, keepdims=True)
        out = (vt - mu) / jnp.sqrt(var + _LN_EPS) * g + b
        return jnp.transpose(out, (0, 2, 1))

    def lrelu(v):
        return jnp.where(v >= 0, v, _LRELU_SLOPE * v)

    def conv3(v, w):
        return lax.conv_general_dilated(v, w, window_strides=(1,), padding=[(1, 1)],
                                        dimension_numbers=("NCH", "OIH", "NCH"))

    h = x
    h = h + conv3(lrelu(ln(h, p["g1"], p["b1"])), p["w1"])
    h = h + conv3(lrelu(ln(h, p["g2"], p["b2"])), p["w2"])
    z = lrelu(ln(h, p["g3"], p["b3"]))
    z = jnp.repeat(z, 2, axis=2)                 # nearest upsample x2 along time
    return conv3(z, p["wu"])


if __name__ == "__main__":
    key = jax.random.PRNGKey(0)
    ks = jax.random.split(key, 10)

    B, Cin, Cout, T = 2, 32, 16, 16

    x = jax.random.normal(ks[0], (B, Cin, T), dtype=jnp.float32)
    params = {
        "g1": 1.0 + 0.1 * jax.random.normal(ks[1], (Cin,), dtype=jnp.float32),
        "b1": 0.1 * jax.random.normal(ks[2], (Cin,), dtype=jnp.float32),
        "g2": 1.0 + 0.1 * jax.random.normal(ks[3], (Cin,), dtype=jnp.float32),
        "b2": 0.1 * jax.random.normal(ks[4], (Cin,), dtype=jnp.float32),
        "g3": 1.0 + 0.1 * jax.random.normal(ks[5], (Cin,), dtype=jnp.float32),
        "b3": 0.1 * jax.random.normal(ks[6], (Cin,), dtype=jnp.float32),
        "w1": 0.1 * jax.random.normal(ks[7], (Cin, Cin, 3), dtype=jnp.float32),
        "w2": 0.1 * jax.random.normal(ks[8], (Cin, Cin, 3), dtype=jnp.float32),
        "wu": 0.1 * jax.random.normal(ks[9], (Cout, Cin, 3), dtype=jnp.float32),
    }

    y = upblock_forward(x, params)
    jax.block_until_ready(y)

    y_ref = _reference(x, params)
    assert y.shape == (B, Cout, 2 * T)
    # bf16 MXU operands (f32 accumulation): loosened but still meaningful tolerance.
    max_err = float(jnp.max(jnp.abs(y - y_ref)))
    mean_err = float(jnp.mean(jnp.abs(y - y_ref)))
    assert max_err < 7.5e-2, f"max abs err {max_err}"
    assert mean_err < 1e-2, f"mean abs err {mean_err}"

    print("KERNEL_OK")
</pallas_src>

<mosaic_0001>
module attributes {stable_mosaic.version = 11 : i64} {
  func.func @_upblock_kernel(%arg0: i32, %arg1: memref<1x16x128xf32, #tpu.memory_space<vmem>>, %arg2: memref<1x128xf32, #tpu.memory_space<vmem>>, %arg3: memref<1x128xf32, #tpu.memory_space<vmem>>, %arg4: memref<1x128xf32, #tpu.memory_space<vmem>>, %arg5: memref<1x128xf32, #tpu.memory_space<vmem>>, %arg6: memref<1x128xf32, #tpu.memory_space<vmem>>, %arg7: memref<1x128xf32, #tpu.memory_space<vmem>>, %arg8: memref<384x128xbf16, #tpu.memory_space<vmem>>, %arg9: memref<384x128xbf16, #tpu.memory_space<vmem>>, %arg10: memref<256x128xbf16, #tpu.memory_space<vmem>>, %arg11: memref<256x128xbf16, #tpu.memory_space<vmem>>, %arg12: memref<1x16x256xf32, #tpu.memory_space<vmem>>) attributes {dimension_semantics = [#tpu.dimension_semantics<parallel>], iteration_bounds = array<i64: 2>, scalar_prefetch = 0 : i64, scratch_operands = 0 : i64, tpu.core_type = #tpu.core_type<tc>, window_params = [{transform_indices = @transform_0, window_bounds = array<i64: 1, 16, 128>}, {pipeline_mode = #tpu.pipeline_mode<synchronous>, transform_indices = @transform_1, window_bounds = array<i64: 1, 128>}, {pipeline_mode = #tpu.pipeline_mode<synchronous>, transform_indices = @transform_2, window_bounds = array<i64: 1, 128>}, {pipeline_mode = #tpu.pipeline_mode<synchronous>, transform_indices = @transform_3, window_bounds = array<i64: 1, 128>}, {pipeline_mode = #tpu.pipeline_mode<synchronous>, transform_indices = @transform_4, window_bounds = array<i64: 1, 128>}, {pipeline_mode = #tpu.pipeline_mode<synchronous>, transform_indices = @transform_5, window_bounds = array<i64: 1, 128>}, {pipeline_mode = #tpu.pipeline_mode<synchronous>, transform_indices = @transform_6, window_bounds = array<i64: 1, 128>}, {pipeline_mode = #tpu.pipeline_mode<synchronous>, transform_indices = @transform_7, window_bounds = array<i64: 384, 128>}, {pipeline_mode = #tpu.pipeline_mode<synchronous>, transform_indices = @transform_8, window_bounds = array<i64: 384, 128>}, {pipeline_mode = #tpu.pipeline_mode<synchronous>, transform_indices = @transform_9, window_bounds = array<i64: 256, 128>}, {pipeline_mode = #tpu.pipeline_mode<synchronous>, transform_indices = @transform_10, window_bounds = array<i64: 256, 128>}, {transform_indices = @transform_11, window_bounds = array<i64: 1, 16, 256>}]} {
    %c0 = arith.constant 0 : index
    %c0_0 = arith.constant 0 : index
    %c0_1 = arith.constant 0 : index
    %0 = vector.load %arg1[%c0, %c0_0, %c0_1] : memref<1x16x128xf32, #tpu.memory_space<vmem>>, vector<1x16x128xf32>
    %1 = vector.shape_cast %0 : vector<1x16x128xf32> to vector<16x128xf32>
    %2 = tpu.iota {dimensions = array<i32: 0>} : vector<16x1xi32>
    %c16_i32 = arith.constant 16 : i32
    %c0_i32 = arith.constant 0 : i32
    %3 = arith.cmpi eq, %c16_i32, %c0_i32 : i32
    %c1_i32 = arith.constant 1 : i32
    %4 = arith.select %3, %c1_i32, %c16_i32 : i32
    %5 = vector.broadcast %4 : i32 to vector<16x1xi32>
    %6 = arith.remsi %2, %5 : vector<16x1xi32>
    %c0_i32_2 = arith.constant 0 : i32
    %7 = vector.broadcast %c0_i32_2 : i32 to vector<16x1xi32>
    %8 = arith.cmpi ne, %6, %7 : vector<16x1xi32>
    %c0_i32_3 = arith.constant 0 : i32
    %9 = vector.broadcast %c0_i32_3 : i32 to vector<16x1xi32>
    %10 = arith.cmpi slt, %6, %9 : vector<16x1xi32>
    %c0_i32_4 = arith.constant 0 : i32
    %11 = arith.cmpi slt, %4, %c0_i32_4 : i32
    %12 = vector.broadcast %11 : i1 to vector<16x1xi1>
    %13 = vector.broadcast %12 : vector<16x1xi1> to vector<16x1xi1>
    %14 = arith.xori %10, %13 : vector<16x1xi1>
    %15 = arith.andi %14, %8 : vector<16x1xi1>
    %16 = vector.broadcast %4 : i32 to vector<16x1xi32>
    %17 = arith.addi %6, %16 : vector<16x1xi32>
    %18 = arith.select %15, %17, %6 : vector<16x1xi1>, vector<16x1xi32>
    %c0_i32_5 = arith.constant 0 : i32
    %19 = vector.broadcast %c0_i32_5 : i32 to vector<16x1xi32>
    %20 = arith.cmpi ne, %18, %19 : vector<16x1xi32>
    %c15_i32 = arith.constant 15 : i32
    %21 = vector.broadcast %c15_i32 : i32 to vector<16x1xi32>
    %22 = arith.cmpi ne, %18, %21 : vector<16x1xi32>
    %c0_6 = arith.constant 0 : index
    %c0_7 = arith.constant 0 : index
    %23 = vector.load %arg2[%c0_6, %c0_7] : memref<1x128xf32, #tpu.memory_space<vmem>>, vector<1x128xf32>
    %c0_8 = arith.constant 0 : index
    %c0_9 = arith.constant 0 : index
    %24 = vector.load %arg3[%c0_8, %c0_9] : memref<1x128xf32, #tpu.memory_space<vmem>>, vector<1x128xf32>
    %cst = arith.constant dense<0.000000e+00> : vector<16xf32>
    %25 = vector.multi_reduction <add>, %1, %cst [1] : vector<16x128xf32> to vector<16xf32>
    %26 = vector.shape_cast %25 : vector<16xf32> to vector<16x1xf32>
    %27 = arith.mulf %1, %1 : vector<16x128xf32>
    %cst_10 = arith.constant dense<0.000000e+00> : vector<16xf32>
    %28 = vector.multi_reduction <add>, %27, %cst_10 [1] : vector<16x128xf32> to vector<16xf32>
    %29 = vector.shape_cast %28 : vector<16xf32> to vector<16x1xf32>
    %cst_11 = arith.constant 3.125000e-02 : f32
    %30 = vector.broadcast %cst_11 : f32 to vector<16x1xf32>
    %31 = arith.mulf %26, %30 : vector<16x1xf32>
    %cst_12 = arith.constant 3.125000e-02 : f32
    %32 = vector.broadcast %cst_12 : f32 to vector<16x1xf32>
    %33 = arith.mulf %29, %32 : vector<16x1xf32>
    %34 = arith.mulf %31, %31 : vector<16x1xf32>
    %35 = arith.subf %33, %34 : vector<16x1xf32>
    %36 = vector.broadcast %31 : vector<16x1xf32> to vector<16x128xf32>
    %37 = arith.subf %1, %36 : vector<16x128xf32>
    %cst_13 = arith.constant 9.99999974E-6 : f32
    %38 = vector.broadcast %cst_13 : f32 to vector<16x1xf32>
    %39 = arith.addf %35, %38 : vector<16x1xf32>
    %40 = math.rsqrt %39 : vector<16x1xf32>
    %41 = vector.broadcast %40 : vector<16x1xf32> to vector<16x128xf32>
    %42 = arith.mulf %37, %41 : vector<16x128xf32>
    %43 = vector.broadcast %23 : vector<1x128xf32> to vector<16x128xf32>
    %44 = arith.mulf %42, %43 : vector<16x128xf32>
    %45 = vector.broadcast %24 : vector<1x128xf32> to vector<16x128xf32>
    %46 = arith.addf %44, %45 : vector<16x128xf32>
    %cst_14 = arith.constant 0.00999999977 : f32
    %47 = vector.broadcast %cst_14 : f32 to vector<16x128xf32>
    %48 = arith.mulf %47, %46 : vector<16x128xf32>
    %49 = arith.maximumf %46, %48 : vector<16x128xf32>
    %c1_i32_15 = arith.constant 1 : i32
    %50 = tpu.dynamic_rotate %49 by %c1_i32_15 dim 0 : vector<16x128xf32>, i32 -> vector<16x128xf32>
    %cst_16 = arith.constant 0.000000e+00 : f32
    %51 = vector.shape_cast %20 : vector<16x1xi1> to vector<16x1xi1>
    %52 = vector.broadcast %51 : vector<16x1xi1> to vector<16x128xi1>
    %53 = vector.broadcast %cst_16 : f32 to vector<16x128xf32>
    %54 = arith.select %52, %50, %53 : vector<16x128xi1>, vector<16x128xf32>
    %c15_i32_17 = arith.constant 15 : i32
    %55 = tpu.dynamic_rotate %49 by %c15_i32_17 dim 0 : vector<16x128xf32>, i32 -> vector<16x128xf32>
    %cst_18 = arith.constant 0.000000e+00 : f32
    %56 = vector.shape_cast %22 : vector<16x1xi1> to vector<16x1xi1>
    %57 = vector.broadcast %56 : vector<16x1xi1> to vector<16x128xi1>
    %58 = vector.broadcast %cst_18 : f32 to vector<16x128xf32>
    %59 = arith.select %57, %55, %58 : vector<16x128xi1>, vector<16x128xf32>
    %60 = arith.truncf %54 : vector<16x128xf32> to vector<16x128xbf16>
    %61 = arith.truncf %49 : vector<16x128xf32> to vector<16x128xbf16>
    %62 = arith.truncf %59 : vector<16x128xf32> to vector<16x128xbf16>
    %63 = tpu.concatenate %60, %61, %62 in 1 : vector<16x128xbf16>, vector<16x128xbf16>, vector<16x128xbf16> -> vector<16x384xbf16>
    %c0_19 = arith.constant 0 : index
    %c0_20 = arith.constant 0 : index
    %64 = vector.load %arg8[%c0_19, %c0_20] : memref<384x128xbf16, #tpu.memory_space<vmem>>, vector<384x128xbf16>
    %cst_21 = arith.constant dense<0.000000e+00> : vector<16x128xf32>
    %65 = tpu.matmul %63, %64, %cst_21 {dimension_numbers = #tpu.dot_dimension_numbers<[1], [0], [0], [1], [0, 0, 1, 1], [], []>} : vector<16x384xbf16>, vector<384x128xbf16>, vector<16x128xf32> -> vector<16x128xf32>
    %66 = arith.addf %1, %65 : vector<16x128xf32>
    %c0_22 = arith.constant 0 : index
    %c0_23 = arith.constant 0 : index
    %67 = vector.load %arg4[%c0_22, %c0_23] : memref<1x128xf32, #tpu.memory_space<vmem>>, vector<1x128xf32>
    %c0_24 = arith.constant 0 : index
    %c0_25 = arith.constant 0 : index
    %68 = vector.load %arg5[%c0_24, %c0_25] : memref<1x128xf32, #tpu.memory_space<vmem>>, vector<1x128xf32>
    %cst_26 = arith.constant dense<0.000000e+00> : vector<16xf32>
    %69 = vector.multi_reduction <add>, %66, %cst_26 [1] : vector<16x128xf32> to vector<16xf32>
    %70 = vector.shape_cast %69 : vector<16xf32> to vector<16x1xf32>
    %71 = arith.mulf %66, %66 : vector<16x128xf32>
    %cst_27 = arith.constant dense<0.000000e+00> : vector<16xf32>
    %72 = vector.multi_reduction <add>, %71, %cst_27 [1] : vector<16x128xf32> to vector<16xf32>
    %73 = vector.shape_cast %72 : vector<16xf32> to vector<16x1xf32>
    %cst_28 = arith.constant 3.125000e-02 : f32
    %74 = vector.broadcast %cst_28 : f32 to vector<16x1xf32>
    %75 = arith.mulf %70, %74 : vector<16x1xf32>
    %cst_29 = arith.constant 3.125000e-02 : f32
    %76 = vector.broadcast %cst_29 : f32 to vector<16x1xf32>
    %77 = arith.mulf %73, %76 : vector<16x1xf32>
    %78 = arith.mulf %75, %75 : vector<16x1xf32>
    %79 = arith.subf %77, %78 : vector<16x1xf32>
    %80 = vector.broadcast %75 : vector<16x1xf32> to vector<16x128xf32>
    %81 = arith.subf %66, %80 : vector<16x128xf32>
    %cst_30 = arith.constant 9.99999974E-6 : f32
    %82 = vector.broadcast %cst_30 : f32 to vector<16x1xf32>
    %83 = arith.addf %79, %82 : vector<16x1xf32>
    %84 = math.rsqrt %83 : vector<16x1xf32>
    %85 = vector.broadcast %84 : vector<16x1xf32> to vector<16x128xf32>
    %86 = arith.mulf %81, %85 : vector<16x128xf32>
    %87 = vector.broadcast %67 : vector<1x128xf32> to vector<16x128xf32>
    %88 = arith.mulf %86, %87 : vector<16x128xf32>
    %89 = vector.broadcast %68 : vector<1x128xf32> to vector<16x128xf32>
    %90 = arith.addf %88, %89 : vector<16x128xf32>
    %cst_31 = arith.constant 0.00999999977 : f32
    %91 = vector.broadcast %cst_31 : f32 to vector<16x128xf32>
    %92 = arith.mulf %91, %90 : vector<16x128xf32>
    %93 = arith.maximumf %90, %92 : vector<16x128xf32>
    %c1_i32_32 = arith.constant 1 : i32
    %94 = tpu.dynamic_rotate %93 by %c1_i32_32 dim 0 : vector<16x128xf32>, i32 -> vector<16x128xf32>
    %cst_33 = arith.constant 0.000000e+00 : f32
    %95 = vector.shape_cast %20 : vector<16x1xi1> to vector<16x1xi1>
    %96 = vector.broadcast %95 : vector<16x1xi1> to vector<16x128xi1>
    %97 = vector.broadcast %cst_33 : f32 to vector<16x128xf32>
    %98 = arith.select %96, %94, %97 : vector<16x128xi1>, vector<16x128xf32>
    %c15_i32_34 = arith.constant 15 : i32
    %99 = tpu.dynamic_rotate %93 by %c15_i32_34 dim 0 : vector<16x128xf32>, i32 -> vector<16x128xf32>
    %cst_35 = arith.constant 0.000000e+00 : f32
    %100 = vector.shape_cast %22 : vector<16x1xi1> to vector<16x1xi1>
    %101 = vector.broadcast %100 : vector<16x1xi1> to vector<16x128xi1>
    %102 = vector.broadcast %cst_35 : f32 to vector<16x128xf32>
    %103 = arith.select %101, %99, %102 : vector<16x128xi1>, vector<16x128xf32>
    %104 = arith.truncf %98 : vector<16x128xf32> to vector<16x128xbf16>
    %105 = arith.truncf %93 : vector<16x128xf32> to vector<16x128xbf16>
    %106 = arith.truncf %103 : vector<16x128xf32> to vector<16x128xbf16>
    %107 = tpu.concatenate %104, %105, %106 in 1 : vector<16x128xbf16>, vector<16x128xbf16>, vector<16x128xbf16> -> vector<16x384xbf16>
    %c0_36 = arith.constant 0 : index
    %c0_37 = arith.constant 0 : index
    %108 = vector.load %arg9[%c0_36, %c0_37] : memref<384x128xbf16, #tpu.memory_space<vmem>>, vector<384x128xbf16>
    %cst_38 = arith.constant dense<0.000000e+00> : vector<16x128xf32>
    %109 = tpu.matmul %107, %108, %cst_38 {dimension_numbers = #tpu.dot_dimension_numbers<[1], [0], [0], [1], [0, 0, 1, 1], [], []>} : vector<16x384xbf16>, vector<384x128xbf16>, vector<16x128xf32> -> vector<16x128xf32>
    %110 = arith.addf %66, %109 : vector<16x128xf32>
    %c0_39 = arith.constant 0 : index
    %c0_40 = arith.constant 0 : index
    %111 = vector.load %arg6[%c0_39, %c0_40] : memref<1x128xf32, #tpu.memory_space<vmem>>, vector<1x128xf32>
    %c0_41 = arith.constant 0 : index
    %c0_42 = arith.constant 0 : index
    %112 = vector.load %arg7[%c0_41, %c0_42] : memref<1x128xf32, #tpu.memory_space<vmem>>, vector<1x128xf32>
    %cst_43 = arith.constant dense<0.000000e+00> : vector<16xf32>
    %113 = vector.multi_reduction <add>, %110, %cst_43 [1] : vector<16x128xf32> to vector<16xf32>
    %114 = vector.shape_cast %113 : vector<16xf32> to vector<16x1xf32>
    %115 = arith.mulf %110, %110 : vector<16x128xf32>
    %cst_44 = arith.constant dense<0.000000e+00> : vector<16xf32>
    %116 = vector.multi_reduction <add>, %115, %cst_44 [1] : vector<16x128xf32> to vector<16xf32>
    %117 = vector.shape_cast %116 : vector<16xf32> to vector<16x1xf32>
    %cst_45 = arith.constant 3.125000e-02 : f32
    %118 = vector.broadcast %cst_45 : f32 to vector<16x1xf32>
    %119 = arith.mulf %114, %118 : vector<16x1xf32>
    %cst_46 = arith.constant 3.125000e-02 : f32
    %120 = vector.broadcast %cst_46 : f32 to vector<16x1xf32>
    %121 = arith.mulf %117, %120 : vector<16x1xf32>
    %122 = arith.mulf %119, %119 : vector<16x1xf32>
    %123 = arith.subf %121, %122 : vector<16x1xf32>
    %124 = vector.broadcast %119 : vector<16x1xf32> to vector<16x128xf32>
    %125 = arith.subf %110, %124 : vector<16x128xf32>
    %cst_47 = arith.constant 9.99999974E-6 : f32
    %126 = vector.broadcast %cst_47 : f32 to vector<16x1xf32>
    %127 = arith.addf %123, %126 : vector<16x1xf32>
    %128 = math.rsqrt %127 : vector<16x1xf32>
    %129 = vector.broadcast %128 : vector<16x1xf32> to vector<16x128xf32>
    %130 = arith.mulf %125, %129 : vector<16x128xf32>
    %131 = vector.broadcast %111 : vector<1x128xf32> to vector<16x128xf32>
    %132 = arith.mulf %130, %131 : vector<16x128xf32>
    %133 = vector.broadcast %112 : vector<1x128xf32> to vector<16x128xf32>
    %134 = arith.addf %132, %133 : vector<16x128xf32>
    %cst_48 = arith.constant 0.00999999977 : f32
    %135 = vector.broadcast %cst_48 : f32 to vector<16x128xf32>
    %136 = arith.mulf %135, %134 : vector<16x128xf32>
    %137 = arith.maximumf %134, %136 : vector<16x128xf32>
    %c1_i32_49 = arith.constant 1 : i32
    %138 = tpu.dynamic_rotate %137 by %c1_i32_49 dim 0 : vector<16x128xf32>, i32 -> vector<16x128xf32>
    %cst_50 = arith.constant 0.000000e+00 : f32
    %139 = vector.shape_cast %20 : vector<16x1xi1> to vector<16x1xi1>
    %140 = vector.broadcast %139 : vector<16x1xi1> to vector<16x128xi1>
    %141 = vector.broadcast %cst_50 : f32 to vector<16x128xf32>
    %142 = arith.select %140, %138, %141 : vector<16x128xi1>, vector<16x128xf32>
    %c15_i32_51 = arith.constant 15 : i32
    %143 = tpu.dynamic_rotate %137 by %c15_i32_51 dim 0 : vector<16x128xf32>, i32 -> vector<16x128xf32>
    %cst_52 = arith.constant 0.000000e+00 : f32
    %144 = vector.shape_cast %22 : vector<16x1xi1> to vector<16x1xi1>
    %145 = vector.broadcast %144 : vector<16x1xi1> to vector<16x128xi1>
    %146 = vector.broadcast %cst_52 : f32 to vector<16x128xf32>
    %147 = arith.select %145, %143, %146 : vector<16x128xi1>, vector<16x128xf32>
    %148 = arith.truncf %142 : vector<16x128xf32> to vector<16x128xbf16>
    %149 = arith.truncf %137 : vector<16x128xf32> to vector<16x128xbf16>
    %150 = arith.truncf %147 : vector<16x128xf32> to vector<16x128xbf16>
    %151 = tpu.concatenate %148, %149 in 1 : vector<16x128xbf16>, vector<16x128xbf16> -> vector<16x256xbf16>
    %c0_53 = arith.constant 0 : index
    %c0_54 = arith.constant 0 : index
    %152 = vector.load %arg10[%c0_53, %c0_54] : memref<256x128xbf16, #tpu.memory_space<vmem>>, vector<256x128xbf16>
    %cst_55 = arith.constant dense<0.000000e+00> : vector<16x128xf32>
    %153 = tpu.matmul %151, %152, %cst_55 {dimension_numbers = #tpu.dot_dimension_numbers<[1], [0], [0], [1], [0, 0, 1, 1], [], []>} : vector<16x256xbf16>, vector<256x128xbf16>, vector<16x128xf32> -> vector<16x128xf32>
    %154 = tpu.concatenate %149, %150 in 1 : vector<16x128xbf16>, vector<16x128xbf16> -> vector<16x256xbf16>
    %c0_56 = arith.constant 0 : index
    %c0_57 = arith.constant 0 : index
    %155 = vector.load %arg11[%c0_56, %c0_57] : memref<256x128xbf16, #tpu.memory_space<vmem>>, vector<256x128xbf16>
    %cst_58 = arith.constant dense<0.000000e+00> : vector<16x128xf32>
    %156 = tpu.matmul %154, %155, %cst_58 {dimension_numbers = #tpu.dot_dimension_numbers<[1], [0], [0], [1], [0, 0, 1, 1], [], []>} : vector<16x256xbf16>, vector<256x128xbf16>, vector<16x128xf32> -> vector<16x128xf32>
    %157 = tpu.concatenate %153, %156 in 1 : vector<16x128xf32>, vector<16x128xf32> -> vector<16x256xf32>
    %158 = vector.shape_cast %157 : vector<16x256xf32> to vector<1x16x256xf32>
    %c0_59 = arith.constant 0 : index
    %c0_60 = arith.constant 0 : index
    %c0_61 = arith.constant 0 : index
    %159 = vector.load %arg12[%c0_59, %c0_60, %c0_61] : memref<1x16x256xf32, #tpu.memory_space<vmem>>, vector<1x16x256xf32>
    tpu.vector_store %arg12[%c0_59, %c0_60, %c0_61], %158 {strides = array<i32>} : memref<1x16x256xf32, #tpu.memory_space<vmem>>, vector<1x16x256xf32>,
    return
  }
  func.func @transform_0(%arg0: i32) -> (i32, i32, i32) {
    %c0_i32 = arith.constant 0 : i32
    %c0_i32_0 = arith.constant 0 : i32
    %c0_i32_1 = arith.constant 0 : i32
    return %arg0, %c0_i32, %c0_i32_0 : i32, i32, i32
  }
  func.func @transform_1(%arg0: i32) -> (i32, i32) {
    %c0_i32 = arith.constant 0 : i32
    %c0_i32_0 = arith.constant 0 : i32
    %c0_i32_1 = arith.constant 0 : i32
    return %c0_i32, %c0_i32_0 : i32, i32
  }
  func.func @transform_2(%arg0: i32) -> (i32, i32) {
    %c0_i32 = arith.constant 0 : i32
    %c0_i32_0 = arith.constant 0 : i32
    %c0_i32_1 = arith.constant 0 : i32
    return %c0_i32, %c0_i32_0 : i32, i32
  }
  func.func @transform_3(%arg0: i32) -> (i32, i32) {
    %c0_i32 = arith.constant 0 : i32
    %c0_i32_0 = arith.constant 0 : i32
    %c0_i32_1 = arith.constant 0 : i32
    return %c0_i32, %c0_i32_0 : i32, i32
  }
  func.func @transform_4(%arg0: i32) -> (i32, i32) {
    %c0_i32 = arith.constant 0 : i32
    %c0_i32_0 = arith.constant 0 : i32
    %c0_i32_1 = arith.constant 0 : i32
    return %c0_i32, %c0_i32_0 : i32, i32
  }
  func.func @transform_5(%arg0: i32) -> (i32, i32) {
    %c0_i32 = arith.constant 0 : i32
    %c0_i32_0 = arith.constant 0 : i32
    %c0_i32_1 = arith.constant 0 : i32
    return %c0_i32, %c0_i32_0 : i32, i32
  }
  func.func @transform_6(%arg0: i32) -> (i32, i32) {
    %c0_i32 = arith.constant 0 : i32
    %c0_i32_0 = arith.constant 0 : i32
    %c0_i32_1 = arith.constant 0 : i32
    return %c0_i32, %c0_i32_0 : i32, i32
  }
  func.func @transform_7(%arg0: i32) -> (i32, i32) {
    %c0_i32 = arith.constant 0 : i32
    %c0_i32_0 = arith.constant 0 : i32
    %c0_i32_1 = arith.constant 0 : i32
    return %c0_i32, %c0_i32_0 : i32, i32
  }
  func.func @transform_8(%arg0: i32) -> (i32, i32) {
    %c0_i32 = arith.constant 0 : i32
    %c0_i32_0 = arith.constant 0 : i32
    %c0_i32_1 = arith.constant 0 : i32
    return %c0_i32, %c0_i32_0 : i32, i32
  }
  func.func @transform_9(%arg0: i32) -> (i32, i32) {
    %c0_i32 = arith.constant 0 : i32
    %c0_i32_0 = arith.constant 0 : i32
    %c0_i32_1 = arith.constant 0 : i32
    return %c0_i32, %c0_i32_0 : i32, i32
  }
  func.func @transform_10(%arg0: i32) -> (i32, i32) {
    %c0_i32 = arith.constant 0 : i32
    %c0_i32_0 = arith.constant 0 : i32
    %c0_i32_1 = arith.constant 0 : i32
    return %c0_i32, %c0_i32_0 : i32, i32
  }
  func.func @transform_11(%arg0: i32) -> (i32, i32, i32) {
    %c0_i32 = arith.constant 0 : i32
    %c0_i32_0 = arith.constant 0 : i32
    %c0_i32_1 = arith.constant 0 : i32
    return %arg0, %c0_i32, %c0_i32_0 : i32, i32, i32
  }
}

module attributes {stable_mosaic.version = 11 : i64} {
  func.func @_upblock_kernel(%arg0: i32, %arg1: memref<1x16x128xf32, #tpu.memory_space<vmem>>, %arg2: memref<1x128xf32, #tpu.memory_space<vmem>>, %arg3: memref<1x128xf32, #tpu.memory_space<vmem>>, %arg4: memref<1x128xf32, #tpu.memory_space<vmem>>, %arg5: memref<1x128xf32, #tpu.memory_space<vmem>>, %arg6: memref<1x128xf32, #tpu.memory_space<vmem>>, %arg7: memref<1x128xf32, #tpu.memory_space<vmem>>, %arg8: memref<384x128xbf16, #tpu.memory_space<vmem>>, %arg9: memref<384x128xbf16, #tpu.memory_space<vmem>>, %arg10: memref<256x128xbf16, #tpu.memory_space<vmem>>, %arg11: memref<256x128xbf16, #tpu.memory_space<vmem>>, %arg12: memref<1x16x256xf32, #tpu.memory_space<vmem>>) attributes {dimension_semantics = [#tpu.dimension_semantics<parallel>], iteration_bounds = array<i64: 2>, scalar_prefetch = 0 : i64, scratch_operands = 0 : i64, tpu.core_type = #tpu.core_type<tc>, window_params = [{transform_indices = @transform_0, window_bounds = array<i64: 1, 16, 128>}, {pipeline_mode = #tpu.pipeline_mode<synchronous>, transform_indices = @transform_1, window_bounds = array<i64: 1, 128>}, {pipeline_mode = #tpu.pipeline_mode<synchronous>, transform_indices = @transform_2, window_bounds = array<i64: 1, 128>}, {pipeline_mode = #tpu.pipeline_mode<synchronous>, transform_indices = @transform_3, window_bounds = array<i64: 1, 128>}, {pipeline_mode = #tpu.pipeline_mode<synchronous>, transform_indices = @transform_4, window_bounds = array<i64: 1, 128>}, {pipeline_mode = #tpu.pipeline_mode<synchronous>, transform_indices = @transform_5, window_bounds = array<i64: 1, 128>}, {pipeline_mode = #tpu.pipeline_mode<synchronous>, transform_indices = @transform_6, window_bounds = array<i64: 1, 128>}, {pipeline_mode = #tpu.pipeline_mode<synchronous>, transform_indices = @transform_7, window_bounds = array<i64: 384, 128>}, {pipeline_mode = #tpu.pipeline_mode<synchronous>, transform_indices = @transform_8, window_bounds = array<i64: 384, 128>}, {pipeline_mode = #tpu.pipeline_mode<synchronous>, transform_indices = @transform_9, window_bounds = array<i64: 256, 128>}, {pipeline_mode = #tpu.pipeline_mode<synchronous>, transform_indices = @transform_10, window_bounds = array<i64: 256, 128>}, {transform_indices = @transform_11, window_bounds = array<i64: 1, 16, 256>}]} {
    %c0 = arith.constant 0 : index
    %c0_0 = arith.constant 0 : index
    %c0_1 = arith.constant 0 : index
    %0 = vector.load %arg1[%c0, %c0_0, %c0_1] : memref<1x16x128xf32, #tpu.memory_space<vmem>>, vector<1x16x128xf32>
    %1 = vector.shape_cast %0 : vector<1x16x128xf32> to vector<16x128xf32>
    %2 = tpu.iota {dimensions = array<i32: 0>} : vector<16x1xi32>
    %c16_i32 = arith.constant 16 : i32
    %c0_i32 = arith.constant 0 : i32
    %3 = arith.cmpi eq, %c16_i32, %c0_i32 : i32
    %c1_i32 = arith.constant 1 : i32
    %4 = arith.select %3, %c1_i32, %c16_i32 : i32
    %5 = vector.broadcast %4 : i32 to vector<16x1xi32>
    %6 = arith.remsi %2, %5 : vector<16x1xi32>
    %c0_i32_2 = arith.constant 0 : i32
    %7 = vector.broadcast %c0_i32_2 : i32 to vector<16x1xi32>
    %8 = arith.cmpi ne, %6, %7 : vector<16x1xi32>
    %c0_i32_3 = arith.constant 0 : i32
    %9 = vector.broadcast %c0_i32_3 : i32 to vector<16x1xi32>
    %10 = arith.cmpi slt, %6, %9 : vector<16x1xi32>
    %c0_i32_4 = arith.constant 0 : i32
    %11 = arith.cmpi slt, %4, %c0_i32_4 : i32
    %12 = vector.broadcast %11 : i1 to vector<16x1xi1>
    %13 = vector.broadcast %12 : vector<16x1xi1> to vector<16x1xi1>
    %14 = arith.xori %10, %13 : vector<16x1xi1>
    %15 = arith.andi %14, %8 : vector<16x1xi1>
    %16 = vector.broadcast %4 : i32 to vector<16x1xi32>
    %17 = arith.addi %6, %16 : vector<16x1xi32>
    %18 = arith.select %15, %17, %6 : vector<16x1xi1>, vector<16x1xi32>
    %c0_i32_5 = arith.constant 0 : i32
    %19 = vector.broadcast %c0_i32_5 : i32 to vector<16x1xi32>
    %20 = arith.cmpi ne, %18, %19 : vector<16x1xi32>
    %c15_i32 = arith.constant 15 : i32
    %21 = vector.broadcast %c15_i32 : i32 to vector<16x1xi32>
    %22 = arith.cmpi ne, %18, %21 : vector<16x1xi32>
    %c0_6 = arith.constant 0 : index
    %c0_7 = arith.constant 0 : index
    %23 = vector.load %arg2[%c0_6, %c0_7] : memref<1x128xf32, #tpu.memory_space<vmem>>, vector<1x128xf32>
    %c0_8 = arith.constant 0 : index
    %c0_9 = arith.constant 0 : index
    %24 = vector.load %arg3[%c0_8, %c0_9] : memref<1x128xf32, #tpu.memory_space<vmem>>, vector<1x128xf32>
    %cst = arith.constant dense<0.000000e+00> : vector<16xf32>
    %25 = vector.multi_reduction <add>, %1, %cst [1] : vector<16x128xf32> to vector<16xf32>
    %26 = vector.shape_cast %25 : vector<16xf32> to vector<16x1xf32>
    %27 = arith.mulf %1, %1 : vector<16x128xf32>
    %cst_10 = arith.constant dense<0.000000e+00> : vector<16xf32>
    %28 = vector.multi_reduction <add>, %27, %cst_10 [1] : vector<16x128xf32> to vector<16xf32>
    %29 = vector.shape_cast %28 : vector<16xf32> to vector<16x1xf32>
    %cst_11 = arith.constant 3.125000e-02 : f32
    %30 = vector.broadcast %cst_11 : f32 to vector<16x1xf32>
    %31 = arith.mulf %26, %30 : vector<16x1xf32>
    %cst_12 = arith.constant 3.125000e-02 : f32
    %32 = vector.broadcast %cst_12 : f32 to vector<16x1xf32>
    %33 = arith.mulf %29, %32 : vector<16x1xf32>
    %34 = arith.mulf %31, %31 : vector<16x1xf32>
    %35 = arith.subf %33, %34 : vector<16x1xf32>
    %36 = vector.broadcast %31 : vector<16x1xf32> to vector<16x128xf32>
    %37 = arith.subf %1, %36 : vector<16x128xf32>
    %cst_13 = arith.constant 9.99999974E-6 : f32
    %38 = vector.broadcast %cst_13 : f32 to vector<16x1xf32>
    %39 = arith.addf %35, %38 : vector<16x1xf32>
    %40 = math.rsqrt %39 : vector<16x1xf32>
    %41 = vector.broadcast %40 : vector<16x1xf32> to vector<16x128xf32>
    %42 = arith.mulf %37, %41 : vector<16x128xf32>
    %43 = vector.broadcast %23 : vector<1x128xf32> to vector<16x128xf32>
    %44 = arith.mulf %42, %43 : vector<16x128xf32>
    %45 = vector.broadcast %24 : vector<1x128xf32> to vector<16x128xf32>
    %46 = arith.addf %44, %45 : vector<16x128xf32>
    %cst_14 = arith.constant 0.00999999977 : f32
    %47 = vector.broadcast %cst_14 : f32 to vector<16x128xf32>
    %48 = arith.mulf %47, %46 : vector<16x128xf32>
    %49 = arith.maximumf %46, %48 : vector<16x128xf32>
    %c1_i32_15 = arith.constant 1 : i32
    %50 = tpu.dynamic_rotate %49 by %c1_i32_15 dim 0 : vector<16x128xf32>, i32 -> vector<16x128xf32>
    %cst_16 = arith.constant 0.000000e+00 : f32
    %51 = vector.shape_cast %20 : vector<16x1xi1> to vector<16x1xi1>
    %52 = vector.broadcast %51 : vector<16x1xi1> to vector<16x128xi1>
    %53 = vector.broadcast %cst_16 : f32 to vector<16x128xf32>
    %54 = arith.select %52, %50, %53 : vector<16x128xi1>, vector<16x128xf32>
    %c15_i32_17 = arith.constant 15 : i32
    %55 = tpu.dynamic_rotate %49 by %c15_i32_17 dim 0 : vector<16x128xf32>, i32 -> vector<16x128xf32>
    %cst_18 = arith.constant 0.000000e+00 : f32
    %56 = vector.shape_cast %22 : vector<16x1xi1> to vector<16x1xi1>
    %57 = vector.broadcast %56 : vector<16x1xi1> to vector<16x128xi1>
    %58 = vector.broadcast %cst_18 : f32 to vector<16x128xf32>
    %59 = arith.select %57, %55, %58 : vector<16x128xi1>, vector<16x128xf32>
    %60 = arith.truncf %54 : vector<16x128xf32> to vector<16x128xbf16>
    %61 = arith.truncf %49 : vector<16x128xf32> to vector<16x128xbf16>
    %62 = arith.truncf %59 : vector<16x128xf32> to vector<16x128xbf16>
    %63 = tpu.concatenate %60, %61, %62 in 1 : vector<16x128xbf16>, vector<16x128xbf16>, vector<16x128xbf16> -> vector<16x384xbf16>
    %c0_19 = arith.constant 0 : index
    %c0_20 = arith.constant 0 : index
    %64 = vector.load %arg8[%c0_19, %c0_20] : memref<384x128xbf16, #tpu.memory_space<vmem>>, vector<384x128xbf16>
    %cst_21 = arith.constant dense<0.000000e+00> : vector<16x128xf32>
    %65 = tpu.matmul %63, %64, %cst_21 {dimension_numbers = #tpu.dot_dimension_numbers<[1], [0], [0], [1], [0, 0, 1, 1], [], []>} : vector<16x384xbf16>, vector<384x128xbf16>, vector<16x128xf32> -> vector<16x128xf32>
    %66 = arith.addf %1, %65 : vector<16x128xf32>
    %c0_22 = arith.constant 0 : index
    %c0_23 = arith.constant 0 : index
    %67 = vector.load %arg4[%c0_22, %c0_23] : memref<1x128xf32, #tpu.memory_space<vmem>>, vector<1x128xf32>
    %c0_24 = arith.constant 0 : index
    %c0_25 = arith.constant 0 : index
    %68 = vector.load %arg5[%c0_24, %c0_25] : memref<1x128xf32, #tpu.memory_space<vmem>>, vector<1x128xf32>
    %cst_26 = arith.constant dense<0.000000e+00> : vector<16xf32>
    %69 = vector.multi_reduction <add>, %66, %cst_26 [1] : vector<16x128xf32> to vector<16xf32>
    %70 = vector.shape_cast %69 : vector<16xf32> to vector<16x1xf32>
    %71 = arith.mulf %66, %66 : vector<16x128xf32>
    %cst_27 = arith.constant dense<0.000000e+00> : vector<16xf32>
    %72 = vector.multi_reduction <add>, %71, %cst_27 [1] : vector<16x128xf32> to vector<16xf32>
    %73 = vector.shape_cast %72 : vector<16xf32> to vector<16x1xf32>
    %cst_28 = arith.constant 3.125000e-02 : f32
    %74 = vector.broadcast %cst_28 : f32 to vector<16x1xf32>
    %75 = arith.mulf %70, %74 : vector<16x1xf32>
    %cst_29 = arith.constant 3.125000e-02 : f32
    %76 = vector.broadcast %cst_29 : f32 to vector<16x1xf32>
    %77 = arith.mulf %73, %76 : vector<16x1xf32>
    %78 = arith.mulf %75, %75 : vector<16x1xf32>
    %79 = arith.subf %77, %78 : vector<16x1xf32>
    %80 = vector.broadcast %75 : vector<16x1xf32> to vector<16x128xf32>
    %81 = arith.subf %66, %80 : vector<16x128xf32>
    %cst_30 = arith.constant 9.99999974E-6 : f32
    %82 = vector.broadcast %cst_30 : f32 to vector<16x1xf32>
    %83 = arith.addf %79, %82 : vector<16x1xf32>
    %84 = math.rsqrt %83 : vector<16x1xf32>
    %85 = vector.broadcast %84 : vector<16x1xf32> to vector<16x128xf32>
    %86 = arith.mulf %81, %85 : vector<16x128xf32>
    %87 = vector.broadcast %67 : vector<1x128xf32> to vector<16x128xf32>
    %88 = arith.mulf %86, %87 : vector<16x128xf32>
    %89 = vector.broadcast %68 : vector<1x128xf32> to vector<16x128xf32>
    %90 = arith.addf %88, %89 : vector<16x128xf32>
    %cst_31 = arith.constant 0.00999999977 : f32
    %91 = vector.broadcast %cst_31 : f32 to vector<16x128xf32>
    %92 = arith.mulf %91, %90 : vector<16x128xf32>
    %93 = arith.maximumf %90, %92 : vector<16x128xf32>
    %c1_i32_32 = arith.constant 1 : i32
    %94 = tpu.dynamic_rotate %93 by %c1_i32_32 dim 0 : vector<16x128xf32>, i32 -> vector<16x128xf32>
    %cst_33 = arith.constant 0.000000e+00 : f32
    %95 = vector.shape_cast %20 : vector<16x1xi1> to vector<16x1xi1>
    %96 = vector.broadcast %95 : vector<16x1xi1> to vector<16x128xi1>
    %97 = vector.broadcast %cst_33 : f32 to vector<16x128xf32>
    %98 = arith.select %96, %94, %97 : vector<16x128xi1>, vector<16x128xf32>
    %c15_i32_34 = arith.constant 15 : i32
    %99 = tpu.dynamic_rotate %93 by %c15_i32_34 dim 0 : vector<16x128xf32>, i32 -> vector<16x128xf32>
    %cst_35 = arith.constant 0.000000e+00 : f32
    %100 = vector.shape_cast %22 : vector<16x1xi1> to vector<16x1xi1>
    %101 = vector.broadcast %100 : vector<16x1xi1> to vector<16x128xi1>
    %102 = vector.broadcast %cst_35 : f32 to vector<16x128xf32>
    %103 = arith.select %101, %99, %102 : vector<16x128xi1>, vector<16x128xf32>
    %104 = arith.truncf %98 : vector<16x128xf32> to vector<16x128xbf16>
    %105 = arith.truncf %93 : vector<16x128xf32> to vector<16x128xbf16>
    %106 = arith.truncf %103 : vector<16x128xf32> to vector<16x128xbf16>
    %107 = tpu.concatenate %104, %105, %106 in 1 : vector<16x128xbf16>, vector<16x128xbf16>, vector<16x128xbf16> -> vector<16x384xbf16>
    %c0_36 = arith.constant 0 : index
    %c0_37 = arith.constant 0 : index
    %108 = vector.load %arg9[%c0_36, %c0_37] : memref<384x128xbf16, #tpu.memory_space<vmem>>, vector<384x128xbf16>
    %cst_38 = arith.constant dense<0.000000e+00> : vector<16x128xf32>
    %109 = tpu.matmul %107, %108, %cst_38 {dimension_numbers = #tpu.dot_dimension_numbers<[1], [0], [0], [1], [0, 0, 1, 1], [], []>} : vector<16x384xbf16>, vector<384x128xbf16>, vector<16x128xf32> -> vector<16x128xf32>
    %110 = arith.addf %66, %109 : vector<16x128xf32>
    %c0_39 = arith.constant 0 : index
    %c0_40 = arith.constant 0 : index
    %111 = vector.load %arg6[%c0_39, %c0_40] : memref<1x128xf32, #tpu.memory_space<vmem>>, vector<1x128xf32>
    %c0_41 = arith.constant 0 : index
    %c0_42 = arith.constant 0 : index
    %112 = vector.load %arg7[%c0_41, %c0_42] : memref<1x128xf32, #tpu.memory_space<vmem>>, vector<1x128xf32>
    %cst_43 = arith.constant dense<0.000000e+00> : vector<16xf32>
    %113 = vector.multi_reduction <add>, %110, %cst_43 [1] : vector<16x128xf32> to vector<16xf32>
    %114 = vector.shape_cast %113 : vector<16xf32> to vector<16x1xf32>
    %115 = arith.mulf %110, %110 : vector<16x128xf32>
    %cst_44 = arith.constant dense<0.000000e+00> : vector<16xf32>
    %116 = vector.multi_reduction <add>, %115, %cst_44 [1] : vector<16x128xf32> to vector<16xf32>
    %117 = vector.shape_cast %116 : vector<16xf32> to vector<16x1xf32>
    %cst_45 = arith.constant 3.125000e-02 : f32
    %118 = vector.broadcast %cst_45 : f32 to vector<16x1xf32>
    %119 = arith.mulf %114, %118 : vector<16x1xf32>
    %cst_46 = arith.constant 3.125000e-02 : f32
    %120 = vector.broadcast %cst_46 : f32 to vector<16x1xf32>
    %121 = arith.mulf %117, %120 : vector<16x1xf32>
    %122 = arith.mulf %119, %119 : vector<16x1xf32>
    %123 = arith.subf %121, %122 : vector<16x1xf32>
    %124 = vector.broadcast %119 : vector<16x1xf32> to vector<16x128xf32>
    %125 = arith.subf %110, %124 : vector<16x128xf32>
    %cst_47 = arith.constant 9.99999974E-6 : f32
    %126 = vector.broadcast %cst_47 : f32 to vector<16x1xf32>
    %127 = arith.addf %123, %126 : vector<16x1xf32>
    %128 = math.rsqrt %127 : vector<16x1xf32>
    %129 = vector.broadcast %128 : vector<16x1xf32> to vector<16x128xf32>
    %130 = arith.mulf %125, %129 : vector<16x128xf32>
    %131 = vector.broadcast %111 : vector<1x128xf32> to vector<16x128xf32>
    %132 = arith.mulf %130, %131 : vector<16x128xf32>
    %133 = vector.broadcast %112 : vector<1x128xf32> to vector<16x128xf32>
    %134 = arith.addf %132, %133 : vector<16x128xf32>
    %cst_48 = arith.constant 0.00999999977 : f32
    %135 = vector.broadcast %cst_48 : f32 to vector<16x128xf32>
    %136 = arith.mulf %135, %134 : vector<16x128xf32>
    %137 = arith.maximumf %134, %136 : vector<16x128xf32>
    %c1_i32_49 = arith.constant 1 : i32
    %138 = tpu.dynamic_rotate %137 by %c1_i32_49 dim 0 : vector<16x128xf32>, i32 -> vector<16x128xf32>
    %cst_50 = arith.constant 0.000000e+00 : f32
    %139 = vector.shape_cast %20 : vector<16x1xi1> to vector<16x1xi1>
    %140 = vector.broadcast %139 : vector<16x1xi1> to vector<16x128xi1>
    %141 = vector.broadcast %cst_50 : f32 to vector<16x128xf32>
    %142 = arith.select %140, %138, %141 : vector<16x128xi1>, vector<16x128xf32>
    %c15_i32_51 = arith.constant 15 : i32
    %143 = tpu.dynamic_rotate %137 by %c15_i32_51 dim 0 : vector<16x128xf32>, i32 -> vector<16x128xf32>
    %cst_52 = arith.constant 0.000000e+00 : f32
    %144 = vector.shape_cast %22 : vector<16x1xi1> to vector<16x1xi1>
    %145 = vector.broadcast %144 : vector<16x1xi1> to vector<16x128xi1>
    %146 = vector.broadcast %cst_52 : f32 to vector<16x128xf32>
    %147 = arith.select %145, %143, %146 : vector<16x128xi1>, vector<16x128xf32>
    %148 = arith.truncf %142 : vector<16x128xf32> to vector<16x128xbf16>
    %149 = arith.truncf %137 : vector<16x128xf32> to vector<16x128xbf16>
    %150 = arith.truncf %147 : vector<16x128xf32> to vector<16x128xbf16>
    %151 = tpu.concatenate %148, %149 in 1 : vector<16x128xbf16>, vector<16x128xbf16> -> vector<16x256xbf16>
    %c0_53 = arith.constant 0 : index
    %c0_54 = arith.constant 0 : index
    %152 = vector.load %arg10[%c0_53, %c0_54] : memref<256x128xbf16, #tpu.memory_space<vmem>>, vector<256x128xbf16>
    %cst_55 = arith.constant dense<0.000000e+00> : vector<16x128xf32>
    %153 = tpu.matmul %151, %152, %cst_55 {dimension_numbers = #tpu.dot_dimension_numbers<[1], [0], [0], [1], [0, 0, 1, 1], [], []>} : vector<16x256xbf16>, vector<256x128xbf16>, vector<16x128xf32> -> vector<16x128xf32>
    %154 = tpu.concatenate %149, %150 in 1 : vector<16x128xbf16>, vector<16x128xbf16> -> vector<16x256xbf16>
    %c0_56 = arith.constant 0 : index
    %c0_57 = arith.constant 0 : index
    %155 = vector.load %arg11[%c0_56, %c0_57] : memref<256x128xbf16, #tpu.memory_space<vmem>>, vector<256x128xbf16>
    %cst_58 = arith.constant dense<0.000000e+00> : vector<16x128xf32>
    %156 = tpu.matmul %154, %155, %cst_58 {dimension_numbers = #tpu.dot_dimension_numbers<[1], [0], [0], [1], [0, 0, 1, 1], [], []>} : vector<16x256xbf16>, vector<256x128xbf16>, vector<16x128xf32> -> vector<16x128xf32>
    %157 = tpu.concatenate %153, %156 in 1 : vector<16x128xf32>, vector<16x128xf32> -> vector<16x256xf32>
    %158 = vector.shape_cast %157 : vector<16x256xf32> to vector<1x16x256xf32>
    %c0_59 = arith.constant 0 : index
    %c0_60 = arith.constant 0 : index
    %c0_61 = arith.constant 0 : index
    %159 = vector.load %arg12[%c0_59, %c0_60, %c0_61] : memref<1x16x256xf32, #tpu.memory_space<vmem>>, vector<1x16x256xf32>
    tpu.vector_store %arg12[%c0_59, %c0_60, %c0_61], %158 {strides = array<i32>} : memref<1x16x256xf32, #tpu.memory_space<vmem>>, vector<1x16x256xf32>,
    return
  }
  func.func @transform_0(%arg0: i32) -> (i32, i32, i32) {
    %c0_i32 = arith.constant 0 : i32
    %c0_i32_0 = arith.constant 0 : i32
    %c0_i32_1 = arith.constant 0 : i32
    return %arg0, %c0_i32, %c0_i32_0 : i32, i32, i32
  }
  func.func @transform_1(%arg0: i32) -> (i32, i32) {
    %c0_i32 = arith.constant 0 : i32
    %c0_i32_0 = arith.constant 0 : i32
    %c0_i32_1 = arith.constant 0 : i32
    return %c0_i32, %c0_i32_0 : i32, i32
  }
  func.func @transform_2(%arg0: i32) -> (i32, i32) {
    %c0_i32 = arith.constant 0 : i32
    %c0_i32_0 = arith.constant 0 : i32
    %c0_i32_1 = arith.constant 0 : i32
    return %c0_i32, %c0_i32_0 : i32, i32
  }
  func.func @transform_3(%arg0: i32) -> (i32, i32) {
    %c0_i32 = arith.constant 0 : i32
    %c0_i32_0 = arith.constant 0 : i32
    %c0_i32_1 = arith.constant 0 : i32
    return %c0_i32, %c0_i32_0 : i32, i32
  }
  func.func @transform_4(%arg0: i32) -> (i32, i32) {
    %c0_i32 = arith.constant 0 : i32
    %c0_i32_0 = arith.constant 0 : i32
    %c0_i32_1 = arith.constant 0 : i32
    return %c0_i32, %c0_i32_0 : i32, i32
  }
  func.func @transform_5(%arg0: i32) -> (i32, i32) {
    %c0_i32 = arith.constant 0 : i32
    %c0_i32_0 = arith.constant 0 : i32
    %c0_i32_1 = arith.constant 0 : i32
    return %c0_i32, %c0_i32_0 : i32, i32
  }
  func.func @transform_6(%arg0: i32) -> (i32, i32) {
    %c0_i32 = arith.constant 0 : i32
    %c0_i32_0 = arith.constant 0 : i32
    %c0_i32_1 = arith.constant 0 : i32
    return %c0_i32, %c0_i32_0 : i32, i32
  }
  func.func @transform_7(%arg0: i32) -> (i32, i32) {
    %c0_i32 = arith.constant 0 : i32
    %c0_i32_0 = arith.constant 0 : i32
    %c0_i32_1 = arith.constant 0 : i32
    return %c0_i32, %c0_i32_0 : i32, i32
  }
  func.func @transform_8(%arg0: i32) -> (i32, i32) {
    %c0_i32 = arith.constant 0 : i32
    %c0_i32_0 = arith.constant 0 : i32
    %c0_i32_1 = arith.constant 0 : i32
    return %c0_i32, %c0_i32_0 : i32, i32
  }
  func.func @transform_9(%arg0: i32) -> (i32, i32) {
    %c0_i32 = arith.constant 0 : i32
    %c0_i32_0 = arith.constant 0 : i32
    %c0_i32_1 = arith.constant 0 : i32
    return %c0_i32, %c0_i32_0 : i32, i32
  }
  func.func @transform_10(%arg0: i32) -> (i32, i32) {
    %c0_i32 = arith.constant 0 : i32
    %c0_i32_0 = arith.constant 0 : i32
    %c0_i32_1 = arith.constant 0 : i32
    return %c0_i32, %c0_i32_0 : i32, i32
  }
  func.func @transform_11(%arg0: i32) -> (i32, i32, i32) {
    %c0_i32 = arith.constant 0 : i32
    %c0_i32_0 = arith.constant 0 : i32
    %c0_i32_1 = arith.constant 0 : i32
    return %arg0, %c0_i32, %c0_i32_0 : i32, i32, i32
  }
}

</mosaic_0001>

<llo_original>
// kernel: tpu_custom_call.1
$region0: #{tpu_custom_call.1}
  #allocation0 [shape = 'u32[]', space=smem, size = 0x4, offset = 0x4, fixed_abs, tag = 'smem constant byte address 0x4 - core index']
  #allocation1 [shape = 'u32[72,128]{1,0:T(1,128)}', space=vmem, size = 0x9000, scoped, tag = 'internal scratch']
  %s0 = inlined_call_operand.hbm [shape: f32[2,16,128], index: 0, kind: input, shape index: {}]
  %s1 = inlined_call_operand.hbm [shape: f32[1,128], index: 1, kind: input, shape index: {}]
  %s2 = inlined_call_operand.vmem [shape: f32[1,128], index: 2, kind: input, shape index: {}]
  %s3 = inlined_call_operand.vmem [shape: f32[1,128], index: 3, kind: input, shape index: {}]
  %s4 = inlined_call_operand.vmem [shape: f32[1,128], index: 4, kind: input, shape index: {}]
  %s5 = inlined_call_operand.vmem [shape: f32[1,128], index: 5, kind: input, shape index: {}]
  %s6 = inlined_call_operand.vmem [shape: f32[1,128], index: 6, kind: input, shape index: {}]
  %s7 = inlined_call_operand.hbm [shape: bf16[384,128], index: 7, kind: input, shape index: {}]
  %s8 = inlined_call_operand.hbm [shape: bf16[384,128], index: 8, kind: input, shape index: {}]
  %s9 = inlined_call_operand.hbm [shape: bf16[256,128], index: 9, kind: input, shape index: {}]
  %s10 = inlined_call_operand.hbm [shape: bf16[256,128], index: 10, kind: input, shape index: {}]
  %s11 = inlined_call_operand.hbm [shape: f32[2,16,256], index: 11, kind: output, shape index: {}]
  %s12 = sld [smem:[#allocation0]]
  $region101: #{tpu_custom_call.1} parent=0
    _
  %s14 = ssub.s32 1, %s12
  %s15 = scalar_select 0, %s14, %s12
  $region1: #{tpu_custom_call.1} parent=0
    #allocation2 [shape = 'u8[16384]{0}', space=vmem, size = 0x4000, scoped, tag = 'input window, operand 0']
    #allocation3 [shape = 's32[2]{0}', space=sflag, size = 0x8, scoped, tag = 'scoped memory for tpu_custom_call.1']
    #allocation4 [shape = 's32[2]{0}', space=sflag, size = 0x8, scoped, tag = 'scoped memory for tpu_custom_call.1']
    #allocation5 [shape = 'u8[512]{0}', space=vmem, size = 0x400, scoped, tag = 'input window, operand 1, single buffered']
    #allocation6 [shape = 's32[1]{0}', space=sflag, size = 0x4, scoped, tag = 'scoped memory for tpu_custom_call.1']
    #allocation7 [shape = 'u8[98304]{0}', space=vmem, size = 0x18000, scoped, tag = 'input window, operand 7, single buffered']
    #allocation8 [shape = 'u8[98304]{0}', space=vmem, size = 0x18000, scoped, tag = 'input window, operand 8, single buffered']
    #allocation9 [shape = 's32[1]{0}', space=sflag, size = 0x4, scoped, tag = 'scoped memory for tpu_custom_call.1']
    #allocation10 [shape = 'u8[65536]{0}', space=vmem, size = 0x10000, scoped, tag = 'input window, operand 9, single buffered']
    #allocation11 [shape = 'u8[65536]{0}', space=vmem, size = 0x10000, scoped, tag = 'input window, operand 10, single buffered']
    #allocation12 [shape = 's32[1]{0}', space=sflag, size = 0x4, scoped, tag = 'scoped memory for tpu_custom_call.1']
    #allocation13 [shape = 'u8[32768]{0}', space=vmem, size = 0x8000, scoped, tag = 'output window, operand 0']
    %16 = vsyncpa [#allocation3], 0
    %s17 = scalar_lea.sflag [#allocation3], 1
    %18 = vsyncpa %s17, 0
    %19 = vsyncpa [#allocation6], 0
    %20 = vsyncpa [#allocation9], 0
    %21 = vsyncpa [#allocation12], 0
    %22 = vsyncpa [#allocation4], 0
    %s23 = scalar_lea.sflag [#allocation4], 1
    %24 = vsyncpa %s23, 0
    loop: start=0, step=1, limit=4
    $region2: #{tpu_custom_call.1} parent=1 // loop_pre_header
      _
    $region3: #{tpu_custom_call.1} parent=1 // loop_header
      %s26 = sphi 0, %s30
      %p27 = scmp.ge.s32.totalorder %s26, 4
      %s36 = sphi 0, %s38
      %s39 = sphi 0, %s36
      %s40 = sphi 0, %s39
      %s56 = sphi 0, %s40
      %s60 = sphi 0, %s60
      %s62 = sphi 0, %s60
      %s63 = sphi 0, %s62
      %s77 = sphi 0, %s63
      %s81 = sphi 0, %s81
      %s83 = sphi 0, %s81
      %s84 = sphi 0, %s83
      %s98 = sphi 0, %s84
      %s102 = sphi 0, %s102
      %s104 = sphi 0, %s102
      %s105 = sphi 0, %s104
      %s119 = sphi 0, %s105
      %s123 = sphi 0, %s123
      %s125 = sphi 0, %s123
      %s126 = sphi 0, %s125
      %s140 = sphi 0, %s126
      %s144 = sphi 0, %s144
      %s146 = sphi 0, %s144
      %s147 = sphi 0, %s146
      %s161 = sphi 0, %s147
      %s165 = sphi 0, %s165
      %s167 = sphi 0, %s165
      %s168 = sphi 0, %s167
      %s182 = sphi 0, %s168
      %s186 = sphi 0, %s186
      %s188 = sphi 0, %s186
      %s189 = sphi 0, %s188
      %s203 = sphi 0, %s189
      %s207 = sphi 0, %s207
      %s209 = sphi 0, %s207
      %s210 = sphi 0, %s209
      %s224 = sphi 0, %s210
      %s228 = sphi 0, %s228
      %s230 = sphi 0, %s228
      %s231 = sphi 0, %s230
      %s245 = sphi 0, %s231
      %s249 = sphi 0, %s249
      %s251 = sphi 0, %s249
      %s252 = sphi 0, %s251
      %s266 = sphi 0, %s252
      %s272 = sphi 0, %s274
      %s275 = sphi 0, %s272
      %s276 = sphi 0, %s275
      %s292 = sphi 0, %s276
    $region4: #{tpu_custom_call.1} parent=1 // loop_header_branch
      %29 = sbr.rel (%p27) target = $region8
    $region5: #{tpu_custom_call.1} parent=1 // loop_body
      %s31 = ssub.s32 %s26, 1
      %s32 = ssub.s32 %s26, 2
      %s33 = sadd.s32 %s26, 1
      %s34 = ssub.s32 %s26, %s33
      %p35 = scmp.eq.s32.totalorder %s34, 0
      %s37 = sadd.s32 %s36, 1
      %s38 = scalar_select %p35, %s36, %s37
      %p41 = pneg %p35
      %p42 = scmp.eq.s32.totalorder %s26, 1
      %p43 = por %p41, %p42
      %p44 = scmp.ne.s32.totalorder %s36, %s39
      %p45 = scmp.eq.s32.totalorder %s26, 0
      %p46 = por %p44, %p45
      %p47 = scmp.ne.s32.totalorder %s36, %s39
      %p48 = scmp.eq.s32.totalorder %s31, 1
      %p49 = por %p47, %p48
      %p50 = scmp.ne.s32.totalorder %s39, %s40
      %p51 = scmp.eq.s32.totalorder %s31, 0
      %p52 = por %p50, %p51
      %p53 = scmp.ne.s32.totalorder %s39, %s40
      %p54 = scmp.eq.s32.totalorder %s32, 1
      %p55 = por %p53, %p54
      %p57 = scmp.ne.s32.totalorder %s40, %s56
      %p58 = scmp.eq.s32.totalorder %s32, 0
      %p59 = por %p57, %p58
      %s61 = sadd.s32 %s60, 1
      %p64 = scmp.eq.s32.totalorder %s26, 1
      %p65 = scmp.ne.s32.totalorder %s60, %s62
      %p66 = scmp.eq.s32.totalorder %s26, 0
      %p67 = por %p65, %p66
      %p68 = scmp.ne.s32.totalorder %s60, %s62
      %p69 = scmp.eq.s32.totalorder %s31, 1
      %p70 = por %p68, %p69
      %p71 = scmp.ne.s32.totalorder %s62, %s63
      %p72 = scmp.eq.s32.totalorder %s31, 0
      %p73 = por %p71, %p72
      %p74 = scmp.ne.s32.totalorder %s62, %s63
      %p75 = scmp.eq.s32.totalorder %s32, 1
      %p76 = por %p74, %p75
      %p78 = scmp.ne.s32.totalorder %s63, %s77
      %p79 = scmp.eq.s32.totalorder %s32, 0
      %p80 = por %p78, %p79
      %s82 = sadd.s32 %s81, 1
      %p85 = scmp.eq.s32.totalorder %s26, 1
      %p86 = scmp.ne.s32.totalorder %s81, %s83
      %p87 = scmp.eq.s32.totalorder %s26, 0
      %p88 = por %p86, %p87
      %p89 = scmp.ne.s32.totalorder %s81, %s83
      %p90 = scmp.eq.s32.totalorder %s31, 1
      %p91 = por %p89, %p90
      %p92 = scmp.ne.s32.totalorder %s83, %s84
      %p93 = scmp.eq.s32.totalorder %s31, 0
      %p94 = por %p92, %p93
      %p95 = scmp.ne.s32.totalorder %s83, %s84
      %p96 = scmp.eq.s32.totalorder %s32, 1
      %p97 = por %p95, %p96
      %p99 = scmp.ne.s32.totalorder %s84, %s98
      %p100 = scmp.eq.s32.totalorder %s32, 0
      %p101 = por %p99, %p100
      %s103 = sadd.s32 %s102, 1
      %p106 = scmp.eq.s32.totalorder %s26, 1
      %p107 = scmp.ne.s32.totalorder %s102, %s104
      %p108 = scmp.eq.s32.totalorder %s26, 0
      %p109 = por %p107, %p108
      %p110 = scmp.ne.s32.totalorder %s102, %s104
      %p111 = scmp.eq.s32.totalorder %s31, 1
      %p112 = por %p110, %p111
      %p113 = scmp.ne.s32.totalorder %s104, %s105
      %p114 = scmp.eq.s32.totalorder %s31, 0
      %p115 = por %p113, %p114
      %p116 = scmp.ne.s32.totalorder %s104, %s105
      %p117 = scmp.eq.s32.totalorder %s32, 1
      %p118 = por %p116, %p117
      %p120 = scmp.ne.s32.totalorder %s105, %s119
      %p121 = scmp.eq.s32.totalorder %s32, 0
      %p122 = por %p120, %p121
      %s124 = sadd.s32 %s123, 1
      %p127 = scmp.eq.s32.totalorder %s26, 1
      %p128 = scmp.ne.s32.totalorder %s123, %s125
      %p129 = scmp.eq.s32.totalorder %s26, 0
      %p130 = por %p128, %p129
      %p131 = scmp.ne.s32.totalorder %s123, %s125
      %p132 = scmp.eq.s32.totalorder %s31, 1
      %p133 = por %p131, %p132
      %p134 = scmp.ne.s32.totalorder %s125, %s126
      %p135 = scmp.eq.s32.totalorder %s31, 0
      %p136 = por %p134, %p135
      %p137 = scmp.ne.s32.totalorder %s125, %s126
      %p138 = scmp.eq.s32.totalorder %s32, 1
      %p139 = por %p137, %p138
      %p141 = scmp.ne.s32.totalorder %s126, %s140
      %p142 = scmp.eq.s32.totalorder %s32, 0
      %p143 = por %p141, %p142
      %s145 = sadd.s32 %s144, 1
      %p148 = scmp.eq.s32.totalorder %s26, 1
      %p149 = scmp.ne.s32.totalorder %s144, %s146
      %p150 = scmp.eq.s32.totalorder %s26, 0
      %p151 = por %p149, %p150
      %p152 = scmp.ne.s32.totalorder %s144, %s146
      %p153 = scmp.eq.s32.totalorder %s31, 1
      %p154 = por %p152, %p153
      %p155 = scmp.ne.s32.totalorder %s146, %s147
      %p156 = scmp.eq.s32.totalorder %s31, 0
      %p157 = por %p155, %p156
      %p158 = scmp.ne.s32.totalorder %s146, %s147
      %p159 = scmp.eq.s32.totalorder %s32, 1
      %p160 = por %p158, %p159
      %p162 = scmp.ne.s32.totalorder %s147, %s161
      %p163 = scmp.eq.s32.totalorder %s32, 0
      %p164 = por %p162, %p163
      %s166 = sadd.s32 %s165, 1
      %p169 = scmp.eq.s32.totalorder %s26, 1
      %p170 = scmp.ne.s32.totalorder %s165, %s167
      %p171 = scmp.eq.s32.totalorder %s26, 0
      %p172 = por %p170, %p171
      %p173 = scmp.ne.s32.totalorder %s165, %s167
      %p174 = scmp.eq.s32.totalorder %s31, 1
      %p175 = por %p173, %p174
      %p176 = scmp.ne.s32.totalorder %s167, %s168
      %p177 = scmp.eq.s32.totalorder %s31, 0
      %p178 = por %p176, %p177
      %p179 = scmp.ne.s32.totalorder %s167, %s168
      %p180 = scmp.eq.s32.totalorder %s32, 1
      %p181 = por %p179, %p180
      %p183 = scmp.ne.s32.totalorder %s168, %s182
      %p184 = scmp.eq.s32.totalorder %s32, 0
      %p185 = por %p183, %p184
      %s187 = sadd.s32 %s186, 1
      %p190 = scmp.eq.s32.totalorder %s26, 1
      %p191 = scmp.ne.s32.totalorder %s186, %s188
      %p192 = scmp.eq.s32.totalorder %s26, 0
      %p193 = por %p191, %p192
      %p194 = scmp.ne.s32.totalorder %s186, %s188
      %p195 = scmp.eq.s32.totalorder %s31, 1
      %p196 = por %p194, %p195
      %p197 = scmp.ne.s32.totalorder %s188, %s189
      %p198 = scmp.eq.s32.totalorder %s31, 0
      %p199 = por %p197, %p198
      %p200 = scmp.ne.s32.totalorder %s188, %s189
      %p201 = scmp.eq.s32.totalorder %s32, 1
      %p202 = por %p200, %p201
      %p204 = scmp.ne.s32.totalorder %s189, %s203
      %p205 = scmp.eq.s32.totalorder %s32, 0
      %p206 = por %p204, %p205
      %s208 = sadd.s32 %s207, 1
      %p211 = scmp.eq.s32.totalorder %s26, 1
      %p212 = scmp.ne.s32.totalorder %s207, %s209
      %p213 = scmp.eq.s32.totalorder %s26, 0
      %p214 = por %p212, %p213
      %p215 = scmp.ne.s32.totalorder %s207, %s209
      %p216 = scmp.eq.s32.totalorder %s31, 1
      %p217 = por %p215, %p216
      %p218 = scmp.ne.s32.totalorder %s209, %s210
      %p219 = scmp.eq.s32.totalorder %s31, 0
      %p220 = por %p218, %p219
      %p221 = scmp.ne.s32.totalorder %s209, %s210
      %p222 = scmp.eq.s32.totalorder %s32, 1
      %p223 = por %p221, %p222
      %p225 = scmp.ne.s32.totalorder %s210, %s224
      %p226 = scmp.eq.s32.totalorder %s32, 0
      %p227 = por %p225, %p226
      %s229 = sadd.s32 %s228, 1
      %p232 = scmp.eq.s32.totalorder %s26, 1
      %p233 = scmp.ne.s32.totalorder %s228, %s230
      %p234 = scmp.eq.s32.totalorder %s26, 0
      %p235 = por %p233, %p234
      %p236 = scmp.ne.s32.totalorder %s228, %s230
      %p237 = scmp.eq.s32.totalorder %s31, 1
      %p238 = por %p236, %p237
      %p239 = scmp.ne.s32.totalorder %s230, %s231
      %p240 = scmp.eq.s32.totalorder %s31, 0
      %p241 = por %p239, %p240
      %p242 = scmp.ne.s32.totalorder %s230, %s231
      %p243 = scmp.eq.s32.totalorder %s32, 1
      %p244 = por %p242, %p243
      %p246 = scmp.ne.s32.totalorder %s231, %s245
      %p247 = scmp.eq.s32.totalorder %s32, 0
      %p248 = por %p246, %p247
      %s250 = sadd.s32 %s249, 1
      %p253 = scmp.eq.s32.totalorder %s26, 1
      %p254 = scmp.ne.s32.totalorder %s249, %s251
      %p255 = scmp.eq.s32.totalorder %s26, 0
      %p256 = por %p254, %p255
      %p257 = scmp.ne.s32.totalorder %s249, %s251
      %p258 = scmp.eq.s32.totalorder %s31, 1
      %p259 = por %p257, %p258
      %p260 = scmp.ne.s32.totalorder %s251, %s252
      %p261 = scmp.eq.s32.totalorder %s31, 0
      %p262 = por %p260, %p261
      %p263 = scmp.ne.s32.totalorder %s251, %s252
      %p264 = scmp.eq.s32.totalorder %s32, 1
      %p265 = por %p263, %p264
      %p267 = scmp.ne.s32.totalorder %s252, %s266
      %p268 = scmp.eq.s32.totalorder %s32, 0
      %p269 = por %p267, %p268
      %s270 = ssub.s32 %s26, %s33
      %p271 = scmp.eq.s32.totalorder %s270, 0
      %s273 = sadd.s32 %s272, 1
      %s274 = scalar_select %p271, %s272, %s273
      %p277 = pneg %p271
      %p278 = scmp.eq.s32.totalorder %s26, 1
      %p279 = por %p277, %p278
      %p280 = scmp.ne.s32.totalorder %s272, %s275
      %p281 = scmp.eq.s32.totalorder %s26, 0
      %p282 = por %p280, %p281
      %p283 = scmp.ne.s32.totalorder %s272, %s275
      %p284 = scmp.eq.s32.totalorder %s31, 1
      %p285 = por %p283, %p284
      %p286 = scmp.ne.s32.totalorder %s275, %s276
      %p287 = scmp.eq.s32.totalorder %s31, 0
      %p288 = por %p286, %p287
      %p289 = scmp.ne.s32.totalorder %s275, %s276
      %p290 = scmp.eq.s32.totalorder %s32, 1
      %p291 = por %p289, %p290
      %p293 = scmp.ne.s32.totalorder %s276, %s292
      %p294 = scmp.eq.s32.totalorder %s32, 0
      %p295 = por %p293, %p294
      %p296 = scmp.le.s32.totalorder 1, %s26
      %p297 = scmp.lt.s32.totalorder %s26, 3
      %p298 = pnand %p296, %p297
      %p299 = pneg %p298
      // Predicated region
      $region9: #{tpu_custom_call.1} parent=5 // pred_check
        _
      $region10: #{tpu_custom_call.1} parent=5 // pred_check_branch
        %301 = sbr.rel (%p298) target = $region12
      $region11: #{tpu_custom_call.1} parent=5 // pred_region
        %s302 = ssub.s32 %s26, 1
        // Predicated region
        $region13: #{tpu_custom_call.1} parent=11 // pred_check
          %p303 = pneg %p73
        $region14: #{tpu_custom_call.1} parent=11 // pred_check_branch
          %305 = sbr.rel (%p303) target = $region16
        $region15: #{tpu_custom_call.1} parent=11 // pred_region
          %307 = vsyncadd [#allocation6], 0
          %s309 = sshll.u32 %s1, 4
          %s310 = int_to_ptr.hbm [resolvable:$true] %s309
          %s311 = sshll.u32 [#allocation5], 4
          %s312 = int_to_ptr.vmem [resolvable:$true] %s311
          %314 = dma.hbm_to_vmem [thread:$0]  %s310, 16, %s312, [#allocation6]
        $region16: #{tpu_custom_call.1} parent=11 // pred_fallthru
          _
        // Predicated region
        $region17: #{tpu_custom_call.1} parent=11 // pred_check
          %p315 = pneg %p94
        $region18: #{tpu_custom_call.1} parent=11 // pred_check_branch
          %317 = sbr.rel (%p315) target = $region20
        $region19: #{tpu_custom_call.1} parent=11 // pred_region
          _
        $region20: #{tpu_custom_call.1} parent=11 // pred_fallthru
          _
        // Predicated region
        $region21: #{tpu_custom_call.1} parent=11 // pred_check
          %p318 = pneg %p115
        $region22: #{tpu_custom_call.1} parent=11 // pred_check_branch
          %320 = sbr.rel (%p318) target = $region24
        $region23: #{tpu_custom_call.1} parent=11 // pred_region
          _
        $region24: #{tpu_custom_call.1} parent=11 // pred_fallthru
          _
        // Predicated region
        $region25: #{tpu_custom_call.1} parent=11 // pred_check
          %p321 = pneg %p136
        $region26: #{tpu_custom_call.1} parent=11 // pred_check_branch
          %323 = sbr.rel (%p321) target = $region28
        $region27: #{tpu_custom_call.1} parent=11 // pred_region
          _
        $region28: #{tpu_custom_call.1} parent=11 // pred_fallthru
          _
        // Predicated region
        $region29: #{tpu_custom_call.1} parent=11 // pred_check
          %p324 = pneg %p157
        $region30: #{tpu_custom_call.1} parent=11 // pred_check_branch
          %326 = sbr.rel (%p324) target = $region32
        $region31: #{tpu_custom_call.1} parent=11 // pred_region
          _
        $region32: #{tpu_custom_call.1} parent=11 // pred_fallthru
          _
        // Predicated region
        $region33: #{tpu_custom_call.1} parent=11 // pred_check
          %p327 = pneg %p178
        $region34: #{tpu_custom_call.1} parent=11 // pred_check_branch
          %329 = sbr.rel (%p327) target = $region36
        $region35: #{tpu_custom_call.1} parent=11 // pred_region
          _
        $region36: #{tpu_custom_call.1} parent=11 // pred_fallthru
          _
        // Predicated region
        $region37: #{tpu_custom_call.1} parent=11 // pred_check
          %p330 = pneg %p199
        $region38: #{tpu_custom_call.1} parent=11 // pred_check_branch
          %332 = sbr.rel (%p330) target = $region40
        $region39: #{tpu_custom_call.1} parent=11 // pred_region
          %334 = vsyncadd [#allocation6], 0
          %s335 = sshll.u32 %s7, 4
          %s336 = int_to_ptr.hbm [resolvable:$true] %s335
          %s337 = sshll.u32 [#allocation7], 4
          %s338 = int_to_ptr.vmem [resolvable:$true] %s337
          %343 = dma.hbm_to_vmem [thread:$0]  %s336, 3072, %s338, [#allocation6], 64, 64, 4
        $region40: #{tpu_custom_call.1} parent=11 // pred_fallthru
          _
        // Predicated region
        $region41: #{tpu_custom_call.1} parent=11 // pred_check
          %p344 = pneg %p220
        $region42: #{tpu_custom_call.1} parent=11 // pred_check_branch
          %346 = sbr.rel (%p344) target = $region44
        $region43: #{tpu_custom_call.1} parent=11 // pred_region
          %348 = vsyncadd [#allocation9], 0
          %s349 = sshll.u32 %s8, 4
          %s350 = int_to_ptr.hbm [resolvable:$true] %s349
          %s351 = sshll.u32 [#allocation8], 4
          %s352 = int_to_ptr.vmem [resolvable:$true] %s351
          %357 = dma.hbm_to_vmem [thread:$0]  %s350, 3072, %s352, [#allocation9], 64, 64, 4
        $region44: #{tpu_custom_call.1} parent=11 // pred_fallthru
          _
        // Predicated region
        $region45: #{tpu_custom_call.1} parent=11 // pred_check
          %p358 = pneg %p241
        $region46: #{tpu_custom_call.1} parent=11 // pred_check_branch
          %360 = sbr.rel (%p358) target = $region48
        $region47: #{tpu_custom_call.1} parent=11 // pred_region
          %362 = vsyncadd [#allocation9], 0
          %s363 = sshll.u32 %s9, 4
          %s364 = int_to_ptr.hbm [resolvable:$true] %s363
          %s365 = sshll.u32 [#allocation10], 4
          %s366 = int_to_ptr.vmem [resolvable:$true] %s365
          %371 = dma.hbm_to_vmem [thread:$0]  %s364, 2048, %s366, [#allocation9], 64, 64, 4
        $region48: #{tpu_custom_call.1} parent=11 // pred_fallthru
          _
        // Predicated region
        $region49: #{tpu_custom_call.1} parent=11 // pred_check
          %p372 = pneg %p262
        $region50: #{tpu_custom_call.1} parent=11 // pred_check_branch
          %374 = sbr.rel (%p372) target = $region52
        $region51: #{tpu_custom_call.1} parent=11 // pred_region
          %376 = vsyncadd [#allocation12], 0
          %s377 = sshll.u32 %s10, 4
          %s378 = int_to_ptr.hbm [resolvable:$true] %s377
          %s379 = sshll.u32 [#allocation11], 4
          %s380 = int_to_ptr.vmem [resolvable:$true] %s379
          %385 = dma.hbm_to_vmem [thread:$0]  %s378, 2048, %s380, [#allocation12], 64, 64, 4
        $region52: #{tpu_custom_call.1} parent=11 // pred_fallthru
          _
      $region12: #{tpu_custom_call.1} parent=5 // pred_fallthru
        _
      %p386 = scmp.lt.s32.totalorder %s26, 2
      // Predicated region
      $region53: #{tpu_custom_call.1} parent=5 // pred_check
        %p387 = pneg %p386
      $region54: #{tpu_custom_call.1} parent=5 // pred_check_branch
        %389 = sbr.rel (%p387) target = $region56
      $region55: #{tpu_custom_call.1} parent=5 // pred_region
        // Predicated region
        $region57: #{tpu_custom_call.1} parent=55 // pred_check
          %p390 = pneg %p46
        $region58: #{tpu_custom_call.1} parent=55 // pred_check_branch
          %392 = sbr.rel (%p390) target = $region60
        $region59: #{tpu_custom_call.1} parent=55 // pred_region
          %s393 = sand.u32 %s36, 1
          %s394 = scalar_lea.sflag [#allocation3], %s393
          %s395 = sand.u32 %s36, 1
          %s396 = smul.addr %s395, 16
          %s397 = scalar_lea.vmem [#allocation2], %s396
          %399 = vsyncadd %s394, 0
          %s400 = smul.addr %s26, 2
          %s401 = smul.addr %s400, 8
          %s402 = scalar_lea.hbm %s0, %s401
          %s403 = sshll.u32 %s402, 4
          %s404 = int_to_ptr.hbm [resolvable:$true] %s403
          %s405 = sshll.u32 %s397, 4
          %s406 = int_to_ptr.vmem [resolvable:$true] %s405
          %411 = dma.hbm_to_vmem [thread:$0]  %s404, 256, %s406, %s394, 128, 128, 8
        $region60: #{tpu_custom_call.1} parent=55 // pred_fallthru
          _
      $region56: #{tpu_custom_call.1} parent=5 // pred_fallthru
        _
      %p412 = scmp.le.s32.totalorder 1, %s26
      %p413 = scmp.lt.s32.totalorder %s26, 3
      %p414 = pnand %p412, %p413
      %p415 = pneg %p414
      // Predicated region
      $region61: #{tpu_custom_call.1} parent=5 // pred_check
        _
      $region62: #{tpu_custom_call.1} parent=5 // pred_check_branch
        %417 = sbr.rel (%p414) target = $region64
      $region63: #{tpu_custom_call.1} parent=5 // pred_region
        %s418 = ssub.s32 %s26, 1
        %s419 = sand.u32 %s39, 1
        %s420 = scalar_lea.sflag [#allocation3], %s419
        %s421 = sand.u32 %s39, 1
        %s422 = smul.addr %s421, 16
        %s423 = scalar_lea.vmem [#allocation2], %s422
        // Predicated region
        $region65: #{tpu_custom_call.1} parent=63 // pred_check
          %p424 = pneg %p52
        $region66: #{tpu_custom_call.1} parent=63 // pred_check_branch
          %426 = sbr.rel (%p424) target = $region68
        $region67: #{tpu_custom_call.1} parent=63 // pred_region
          %428 = dma.done %s420, 256
        $region68: #{tpu_custom_call.1} parent=63 // pred_fallthru
          _
        // Predicated region
        $region69: #{tpu_custom_call.1} parent=63 // pred_check
          %p429 = pneg %p73
        $region70: #{tpu_custom_call.1} parent=63 // pred_check_branch
          %431 = sbr.rel (%p429) target = $region72
        $region71: #{tpu_custom_call.1} parent=63 // pred_region
          %433 = dma.done [#allocation6], 16
        $region72: #{tpu_custom_call.1} parent=63 // pred_fallthru
          _
        // Predicated region
        $region73: #{tpu_custom_call.1} parent=63 // pred_check
          %p434 = pneg %p199
        $region74: #{tpu_custom_call.1} parent=63 // pred_check_branch
          %436 = sbr.rel (%p434) target = $region76
        $region75: #{tpu_custom_call.1} parent=63 // pred_region
          %438 = dma.done [#allocation6], 3072
        $region76: #{tpu_custom_call.1} parent=63 // pred_fallthru
          _
        // Predicated region
        $region77: #{tpu_custom_call.1} parent=63 // pred_check
          %p439 = pneg %p220
        $region78: #{tpu_custom_call.1} parent=63 // pred_check_branch
          %441 = sbr.rel (%p439) target = $region80
        $region79: #{tpu_custom_call.1} parent=63 // pred_region
          %443 = dma.done [#allocation9], 3072
        $region80: #{tpu_custom_call.1} parent=63 // pred_fallthru
          _
        // Predicated region
        $region81: #{tpu_custom_call.1} parent=63 // pred_check
          %p444 = pneg %p241
        $region82: #{tpu_custom_call.1} parent=63 // pred_check_branch
          %446 = sbr.rel (%p444) target = $region84
        $region83: #{tpu_custom_call.1} parent=63 // pred_region
          %448 = dma.done [#allocation9], 2048
        $region84: #{tpu_custom_call.1} parent=63 // pred_fallthru
          _
        // Predicated region
        $region85: #{tpu_custom_call.1} parent=63 // pred_check
          %p449 = pneg %p262
        $region86: #{tpu_custom_call.1} parent=63 // pred_check_branch
          %451 = sbr.rel (%p449) target = $region88
        $region87: #{tpu_custom_call.1} parent=63 // pred_region
          %453 = dma.done [#allocation12], 2048
        $region88: #{tpu_custom_call.1} parent=63 // pred_fallthru
          _
        %s454 = sand.u32 %s39, 1
        %s455 = scalar_lea.sflag [#allocation3], %s454
        %s456 = sand.u32 %s39, 1
        %s457 = smul.addr %s456, 16
        %s458 = scalar_lea.vmem [#allocation2], %s457
        %p459 = pneg %p52
        %p460 = pneg %p49
        %p461 = pneg %p73
        %p462 = pneg %p70
        %p463 = pneg %p94
        %p464 = pneg %p91
        %p465 = pneg %p115
        %p466 = pneg %p112
        %p467 = pneg %p136
        %p468 = pneg %p133
        %p469 = pneg %p157
        %p470 = pneg %p154
        %p471 = pneg %p178
        %p472 = pneg %p175
        %p473 = pneg %p199
        %p474 = pneg %p196
        %p475 = pneg %p220
        %p476 = pneg %p217
        %p477 = pneg %p241
        %p478 = pneg %p238
        %p479 = pneg %p262
        %p480 = pneg %p259
        %p481 = pneg %p288
        %p482 = pneg %p285
        %s483 = sand.u32 %s275, 1
        %s484 = scalar_lea.sflag [#allocation4], %s483
        %s485 = sand.u32 %s275, 1
        %s486 = smul.addr %s485, 32
        %s487 = scalar_lea.vmem [#allocation13], %s486
        %v488 = vld [vmem:[%s423] sm:$0xff]
        %v489 = vld [vmem:[%s423 + $0x8] sm:$0xff]
        %v490 = vlaneseq
        %v491 = vshrl.u32 %v490, 7
        %v492 = vadd.s32 %v491, 8
        %vm493 = vcmp.lt.s32.totalorder %v491, 0
        %v494 = vsub.s32 0, %v491
        %v495 = vsel %vm493, %v494, %v491
        %v496 = vshrl.u32 %v495, 4
        %v497 = vand.u32 %v495, 15
        %v498 = vsub.s32 0, %v497
        %v499 = vsel %vm493, %v498, %v497
        %vm500 = vcmp.lt.s32.totalorder %v492, 0
        %v501 = vsub.s32 0, %v492
        %v502 = vsel %vm500, %v501, %v492
        %v503 = vshrl.u32 %v502, 4
        %v504 = vand.u32 %v502, 15
        %v505 = vsub.s32 0, %v504
        %v506 = vsel %vm500, %v505, %v504
        %vm507 = vcmp.ne.s32.totalorder %v499, 0
        %vm508 = vcmp.ne.s32.totalorder %v506, 0
        %vm509 = vcmp.lt.s32.totalorder %v499, 0
        %vm510 = vcmp.lt.s32.totalorder %v506, 0
        %vm511 = vmand %vm509, %vm507
        %vm512 = vmand %vm510, %vm508
        %v513 = vadd.s32 %v499, 16
        %v514 = vadd.s32 %v506, 16
        %v515 = vsel %vm511, %v513, %v499
        %v516 = vsel %vm512, %v514, %v506
        %vm517 = vcmp.ne.s32.totalorder %v515, 0
        %vm518 = vcmp.ne.s32.totalorder %v516, 0
        %vm519 = vcmp.ne.s32.totalorder %v515, 15
        %vm520 = vcmp.ne.s32.totalorder %v516, 15
        %v521 = vld [vmem:[#allocation5] sm:$0x1]
        %v522 = vld [vmem:[%s2] sm:$0x1]
        %523 = vadd.xlane.f32.xlu0 %v488
        %v524 = vpop.xlane.xlu0 %523
        %525 = vadd.xlane.f32.xlu0 %v489
        %v526 = vpop.xlane.xlu0 %525
        %v527 = vmul.f32 %v488, %v488
        %v528 = vmul.f32 %v489, %v489
        %529 = vadd.xlane.f32.xlu0 %v527
        %v530 = vpop.xlane.xlu0 %529
        %531 = vadd.xlane.f32.xlu0 %v528
        %v532 = vpop.xlane.xlu0 %531
        %v533 = vmul.f32 %v524, 0.03125
        %v534 = vmul.f32 %v526, 0.03125
        %v535 = vmul.f32 %v530, 0.03125
        %v536 = vmul.f32 %v532, 0.03125
        %v537 = vmul.f32 %v533, %v533
        %v538 = vmul.f32 %v534, %v534
        %v539 = vsub.f32 %v535, %v537
        %v540 = vsub.f32 %v536, %v538
        %v541 = vsub.f32 %v488, %v533
        %v542 = vsub.f32 %v489, %v534
        %v543 = vadd.f32 %v539, 1e-05
        %v544 = vadd.f32 %v540, 1e-05
        %v545 = vrsqrt.pop %v543
        %v546 = vmul.f32 %v545, %v543
        %v547 = vmul.f32 %v546, %v545
        %v548 = vmul.f32 0.5, %v547
        %v549 = vsub.f32 1.5, %v548
        %v550 = vmul.f32 %v545, %v549
        %vm551 = vweird.f32 %v543
        %vm552 = vweird.f32 %v545
        %vm553 = vmor %vm551, %vm552
        %v554 = vsel %vm553, %v545, %v550
        %v555 = vrsqrt.pop %v544
        %v556 = vmul.f32 %v555, %v544
        %v557 = vmul.f32 %v556, %v555
        %v558 = vmul.f32 0.5, %v557
        %v559 = vsub.f32 1.5, %v558
        %v560 = vmul.f32 %v555, %v559
        %vm561 = vweird.f32 %v544
        %vm562 = vweird.f32 %v555
        %vm563 = vmor %vm561, %vm562
        %v564 = vsel %vm563, %v555, %v560
        %v565 = vmul.f32 %v541, %v554
        %v566 = vmul.f32 %v542, %v564
        %v568 = vperm.slane %v521, 0
        %v570 = vmul.f32 %v565, %v568
        %v571 = vmul.f32 %v566, %v568
        %v573 = vperm.slane %v522, 0
        %v575 = vadd.f32 %v570, %v573
        %v576 = vadd.f32 %v571, %v573
        %v577 = vmul.f32 %v575, 0.01
        %v578 = vmul.f32 %v576, 0.01
        %v579 = vmax.f32 %v575, %v577
        %v580 = vmax.f32 %v576, %v578
        %v581 = vrot.slane %v579, 7
        %v582 = vrot.slane %v580, 7
        %vm583 = vcmp.lt.s32.totalorder %v491, 1
        %v584 = vsel %vm583, %v581, %v582
        %v585 = vsel %vm583, %v582, %v581
        %v586 = vsel %vm517, 1, 0
        %v587 = vsel %vm518, 1, 0
        %vm588 = vcmp.eq.s32.totalorder %v586, 1
        %vm589 = vcmp.eq.s32.totalorder %v587, 1
        %v590 = vsel %vm588, %v585, 0.0
        %v591 = vsel %vm589, %v584, 0.0
        %v592 = vrot.slane %v579, 1
        %v593 = vrot.slane %v580, 1
        %vm594 = vcmp.lt.s32.totalorder %v491, 7
        %v595 = vsel %vm594, %v592, %v593
        %v596 = vsel %vm594, %v593, %v592
        %v597 = vsel %vm519, 1, 0
        %v598 = vsel %vm520, 1, 0
        %vm599 = vcmp.eq.s32.totalorder %v597, 1
        %vm600 = vcmp.eq.s32.totalorder %v598, 1
        %v601 = vsel %vm599, %v595, 0.0
        %v602 = vsel %vm600, %v596, 0.0
        %v603 = vpack.c.bf16 %v590, %v590
        %v604 = vpack.c.bf16 %v591, %v591
        %v605 = vpack.c.bf16 %v579, %v579
        %v606 = vpack.c.bf16 %v580, %v580
        %v607 = vpack.c.bf16 %v601, %v601
        %v608 = vpack.c.bf16 %v602, %v602
        %v611 = vunpack.c.l.b16 %v603
        %v612 = vunpack.c.l.b16 %v604
        %v613 = vpack.c.b16 %v612, %v611
        %v617 = vunpack.c.l.b16 %v605
        %v618 = vunpack.c.l.b16 %v606
        %v619 = vpack.c.b16 %v618, %v617
        %v623 = vunpack.c.l.b16 %v607
        %v624 = vunpack.c.l.b16 %v608
        %v625 = vpack.c.b16 %v624, %v623
        %v627 = vld [vmem:[#allocation7] sm:$0xf]
        %v628 = vld [vmem:[#allocation7 + $0x4] sm:$0xf]
        %v629 = vld [vmem:[#allocation7 + $0x8] sm:$0xf]
        %v630 = vld [vmem:[#allocation7 + $0xc] sm:$0xf]
        %v631 = vld [vmem:[#allocation7 + $0x10] sm:$0xf]
        %v632 = vld [vmem:[#allocation7 + $0x14] sm:$0xf]
        %v633 = vld [vmem:[#allocation7 + $0x18] sm:$0xf]
        %v634 = vld [vmem:[#allocation7 + $0x1c] sm:$0xf]
        %v635 = vld [vmem:[#allocation7 + $0x20] sm:$0xf]
        %v636 = vld [vmem:[#allocation7 + $0x24] sm:$0xf]
        %v637 = vld [vmem:[#allocation7 + $0x28] sm:$0xf]
        %v638 = vld [vmem:[#allocation7 + $0x2c] sm:$0xf]
        %v639 = vld [vmem:[#allocation7 + $0x30] sm:$0xf]
        %v640 = vld [vmem:[#allocation7 + $0x34] sm:$0xf]
        %v641 = vld [vmem:[#allocation7 + $0x38] sm:$0xf]
        %v642 = vld [vmem:[#allocation7 + $0x3c] sm:$0xf]
        %v643 = vld [vmem:[#allocation7 + $0x40] sm:$0xf]
        %v644 = vld [vmem:[#allocation7 + $0x44] sm:$0xf]
        %v645 = vld [vmem:[#allocation7 + $0x48] sm:$0xf]
        %v646 = vld [vmem:[#allocation7 + $0x4c] sm:$0xf]
        %v647 = vld [vmem:[#allocation7 + $0x50] sm:$0xf]
        %v648 = vld [vmem:[#allocation7 + $0x54] sm:$0xf]
        %v649 = vld [vmem:[#allocation7 + $0x58] sm:$0xf]
        %v650 = vld [vmem:[#allocation7 + $0x5c] sm:$0xf]
        %v651 = vld [vmem:[#allocation7 + $0x60] sm:$0xf]
        %v652 = vld [vmem:[#allocation7 + $0x64] sm:$0xf]
        %v653 = vld [vmem:[#allocation7 + $0x68] sm:$0xf]
        %v654 = vld [vmem:[#allocation7 + $0x6c] sm:$0xf]
        %v655 = vld [vmem:[#allocation7 + $0x70] sm:$0xf]
        %v656 = vld [vmem:[#allocation7 + $0x74] sm:$0xf]
        %v657 = vld [vmem:[#allocation7 + $0x78] sm:$0xf]
        %v658 = vld [vmem:[#allocation7 + $0x7c] sm:$0xf]
        %v659 = vld [vmem:[#allocation7 + $0x80] sm:$0xf]
        %v660 = vld [vmem:[#allocation7 + $0x84] sm:$0xf]
        %v661 = vld [vmem:[#allocation7 + $0x88] sm:$0xf]
        %v662 = vld [vmem:[#allocation7 + $0x8c] sm:$0xf]
        %v663 = vld [vmem:[#allocation7 + $0x90] sm:$0xf]
        %v664 = vld [vmem:[#allocation7 + $0x94] sm:$0xf]
        %v665 = vld [vmem:[#allocation7 + $0x98] sm:$0xf]
        %v666 = vld [vmem:[#allocation7 + $0x9c] sm:$0xf]
        %v667 = vld [vmem:[#allocation7 + $0xa0] sm:$0xf]
        %v668 = vld [vmem:[#allocation7 + $0xa4] sm:$0xf]
        %v669 = vld [vmem:[#allocation7 + $0xa8] sm:$0xf]
        %v670 = vld [vmem:[#allocation7 + $0xac] sm:$0xf]
        %v671 = vld [vmem:[#allocation7 + $0xb0] sm:$0xf]
        %v672 = vld [vmem:[#allocation7 + $0xb4] sm:$0xf]
        %v673 = vld [vmem:[#allocation7 + $0xb8] sm:$0xf]
        %v674 = vld [vmem:[#allocation7 + $0xbc] sm:$0xf]
        %v723 = vunpack.c.l.b16 %v627
        %v724 = vunpack.c.l.b16 %v628
        %v725 = vunpack.c.l.b16 %v629
        %v726 = vunpack.c.l.b16 %v630
        %v727 = vunpack.c.l.b16 %v631
        %v728 = vunpack.c.l.b16 %v632
        %v729 = vunpack.c.l.b16 %v633
        %v730 = vunpack.c.l.b16 %v634
        %v731 = vunpack.c.l.b16 %v635
        %v732 = vunpack.c.l.b16 %v636
        %v733 = vunpack.c.l.b16 %v637
        %v734 = vunpack.c.l.b16 %v638
        %v735 = vunpack.c.l.b16 %v639
        %v736 = vunpack.c.l.b16 %v640
        %v737 = vunpack.c.l.b16 %v641
        %v738 = vunpack.c.l.b16 %v642
        %v739 = vunpack.c.l.b16 %v643
        %v740 = vunpack.c.l.b16 %v644
        %v741 = vunpack.c.l.b16 %v645
        %v742 = vunpack.c.l.b16 %v646
        %v743 = vunpack.c.l.b16 %v647
        %v744 = vunpack.c.l.b16 %v648
        %v745 = vunpack.c.l.b16 %v649
        %v746 = vunpack.c.l.b16 %v650
        %v747 = vunpack.c.l.b16 %v651
        %v748 = vunpack.c.l.b16 %v652
        %v749 = vunpack.c.l.b16 %v653
        %v750 = vunpack.c.l.b16 %v654
        %v751 = vunpack.c.l.b16 %v655
        %v752 = vunpack.c.l.b16 %v656
        %v753 = vunpack.c.l.b16 %v657
        %v754 = vunpack.c.l.b16 %v658
        %v755 = vunpack.c.l.b16 %v659
        %v756 = vunpack.c.l.b16 %v660
        %v757 = vunpack.c.l.b16 %v661
        %v758 = vunpack.c.l.b16 %v662
        %v759 = vunpack.c.l.b16 %v663
        %v760 = vunpack.c.l.b16 %v664
        %v761 = vunpack.c.l.b16 %v665
        %v762 = vunpack.c.l.b16 %v666
        %v763 = vunpack.c.l.b16 %v667
        %v764 = vunpack.c.l.b16 %v668
        %v765 = vunpack.c.l.b16 %v669
        %v766 = vunpack.c.l.b16 %v670
        %v767 = vunpack.c.l.b16 %v671
        %v768 = vunpack.c.l.b16 %v672
        %v769 = vunpack.c.l.b16 %v673
        %v770 = vunpack.c.l.b16 %v674
        %v771 = vpack.c.b16 %v724, %v723
        %v772 = vpack.c.b16 %v726, %v725
        %v773 = vpack.c.b16 %v728, %v727
        %v774 = vpack.c.b16 %v730, %v729
        %v775 = vpack.c.b16 %v732, %v731
        %v776 = vpack.c.b16 %v734, %v733
        %v777 = vpack.c.b16 %v736, %v735
        %v778 = vpack.c.b16 %v738, %v737
        %v779 = vpack.c.b16 %v740, %v739
        %v780 = vpack.c.b16 %v742, %v741
        %v781 = vpack.c.b16 %v744, %v743
        %v782 = vpack.c.b16 %v746, %v745
        %v783 = vpack.c.b16 %v748, %v747
        %v784 = vpack.c.b16 %v750, %v749
        %v785 = vpack.c.b16 %v752, %v751
        %v786 = vpack.c.b16 %v754, %v753
        %v787 = vpack.c.b16 %v756, %v755
        %v788 = vpack.c.b16 %v758, %v757
        %v789 = vpack.c.b16 %v760, %v759
        %v790 = vpack.c.b16 %v762, %v761
        %v791 = vpack.c.b16 %v764, %v763
        %v792 = vpack.c.b16 %v766, %v765
        %v793 = vpack.c.b16 %v768, %v767
        %v794 = vpack.c.b16 %v770, %v769
        %819 = vmatpush.bf16.msra.mxu0 %v778
        %820 = vmatpush.bf16.msra.mxu0 %v777
        %821 = vmatpush.bf16.msra.mxu0 %v776
        %822 = vmatpush.bf16.msra.mxu0 %v775
        %823 = vmatpush.bf16.msra.mxu0 %v774
        %824 = vmatpush.bf16.msra.mxu0 %v773
        %825 = vmatpush.bf16.msra.mxu0 %v772
        %826 = vmatpush.bf16.msra.mxu0 %v771
        %827 = vmatmul.bf16.gmra.mxu0 %v613
        %v828 = vpop.f32.mrf.mxu0
        %v829 = vadd.f32 0.0, %v828
        %v830 = vpop.f32.mrf.mxu0
        %v831 = vadd.f32 0.0, %v830
        %832 = vdwg.mxu0
        %833 = vmatpush.bf16.msra.mxu0 %v786
        %834 = vmatpush.bf16.msra.mxu0 %v785
        %835 = vmatpush.bf16.msra.mxu0 %v784
        %836 = vmatpush.bf16.msra.mxu0 %v783
        %837 = vmatpush.bf16.msra.mxu0 %v782
        %838 = vmatpush.bf16.msra.mxu0 %v781
        %839 = vmatpush.bf16.msra.mxu0 %v780
        %840 = vmatpush.bf16.msra.mxu0 %v779
        %841 = vmatmul.bf16.gmra.mxu0 %v619
        %v842 = vpop.f32.mrf.mxu0
        %v843 = vadd.f32 %v829, %v842
        %v844 = vpop.f32.mrf.mxu0
        %v845 = vadd.f32 %v831, %v844
        %846 = vdwg.mxu0
        %847 = vmatpush.bf16.msra.mxu0 %v794
        %848 = vmatpush.bf16.msra.mxu0 %v793
        %849 = vmatpush.bf16.msra.mxu0 %v792
        %850 = vmatpush.bf16.msra.mxu0 %v791
        %851 = vmatpush.bf16.msra.mxu0 %v790
        %852 = vmatpush.bf16.msra.mxu0 %v789
        %853 = vmatpush.bf16.msra.mxu0 %v788
        %854 = vmatpush.bf16.msra.mxu0 %v787
        %855 = vmatmul.bf16.gmra.mxu0 %v625
        %v856 = vpop.f32.mrf.mxu0
        %v857 = vadd.f32 %v843, %v856
        %v858 = vpop.f32.mrf.mxu0
        %v859 = vadd.f32 %v845, %v858
        %860 = vdwg.mxu0
        %v861 = vadd.f32 %v488, %v857
        %v862 = vadd.f32 %v489, %v859
        %v863 = vld [vmem:[%s3] sm:$0x1]
        %v864 = vld [vmem:[%s4] sm:$0x1]
        %865 = vadd.xlane.f32.xlu0 %v861
        %v866 = vpop.xlane.xlu0 %865
        %867 = vadd.xlane.f32.xlu0 %v862
        %v868 = vpop.xlane.xlu0 %867
        %v869 = vmul.f32 %v861, %v861
        %v870 = vmul.f32 %v862, %v862
        %871 = vadd.xlane.f32.xlu0 %v869
        %v872 = vpop.xlane.xlu0 %871
        %873 = vadd.xlane.f32.xlu0 %v870
        %v874 = vpop.xlane.xlu0 %873
        %v875 = vmul.f32 %v866, 0.03125
        %v876 = vmul.f32 %v868, 0.03125
        %v877 = vmul.f32 %v872, 0.03125
        %v878 = vmul.f32 %v874, 0.03125
        %v879 = vmul.f32 %v875, %v875
        %v880 = vmul.f32 %v876, %v876
        %v881 = vsub.f32 %v877, %v879
        %v882 = vsub.f32 %v878, %v880
        %v883 = vsub.f32 %v861, %v875
        %v884 = vsub.f32 %v862, %v876
        %v885 = vadd.f32 %v881, 1e-05
        %v886 = vadd.f32 %v882, 1e-05
        %v887 = vrsqrt.pop %v885
        %v888 = vmul.f32 %v887, %v885
        %v889 = vmul.f32 %v888, %v887
        %v890 = vmul.f32 0.5, %v889
        %v891 = vsub.f32 1.5, %v890
        %v892 = vmul.f32 %v887, %v891
        %vm893 = vweird.f32 %v885
        %vm894 = vweird.f32 %v887
        %vm895 = vmor %vm893, %vm894
        %v896 = vsel %vm895, %v887, %v892
        %v897 = vrsqrt.pop %v886
        %v898 = vmul.f32 %v897, %v886
        %v899 = vmul.f32 %v898, %v897
        %v900 = vmul.f32 0.5, %v899
        %v901 = vsub.f32 1.5, %v900
        %v902 = vmul.f32 %v897, %v901
        %vm903 = vweird.f32 %v886
        %vm904 = vweird.f32 %v897
        %vm905 = vmor %vm903, %vm904
        %v906 = vsel %vm905, %v897, %v902
        %v907 = vmul.f32 %v883, %v896
        %v908 = vmul.f32 %v884, %v906
        %v910 = vperm.slane %v863, 0
        %v912 = vmul.f32 %v907, %v910
        %v913 = vmul.f32 %v908, %v910
        %v915 = vperm.slane %v864, 0
        %v917 = vadd.f32 %v912, %v915
        %v918 = vadd.f32 %v913, %v915
        %v919 = vmul.f32 %v917, 0.01
        %v920 = vmul.f32 %v918, 0.01
        %v921 = vmax.f32 %v917, %v919
        %v922 = vmax.f32 %v918, %v920
        %v923 = vrot.slane %v921, 7
        %v924 = vrot.slane %v922, 7
        %v925 = vsel %vm583, %v923, %v924
        %v926 = vsel %vm583, %v924, %v923
        %v927 = vsel %vm588, %v926, 0.0
        %v928 = vsel %vm589, %v925, 0.0
        %v929 = vrot.slane %v921, 1
        %v930 = vrot.slane %v922, 1
        %v931 = vsel %vm594, %v929, %v930
        %v932 = vsel %vm594, %v930, %v929
        %v933 = vsel %vm599, %v931, 0.0
        %v934 = vsel %vm600, %v932, 0.0
        %v935 = vpack.c.bf16 %v927, %v927
        %v936 = vpack.c.bf16 %v928, %v928
        %v937 = vpack.c.bf16 %v921, %v921
        %v938 = vpack.c.bf16 %v922, %v922
        %v939 = vpack.c.bf16 %v933, %v933
        %v940 = vpack.c.bf16 %v934, %v934
        %v943 = vunpack.c.l.b16 %v935
        %v944 = vunpack.c.l.b16 %v936
        %v945 = vpack.c.b16 %v944, %v943
        %v949 = vunpack.c.l.b16 %v937
        %v950 = vunpack.c.l.b16 %v938
        %v951 = vpack.c.b16 %v950, %v949
        %v955 = vunpack.c.l.b16 %v939
        %v956 = vunpack.c.l.b16 %v940
        %v957 = vpack.c.b16 %v956, %v955
        %v959 = vld [vmem:[#allocation8] sm:$0xf]
        %v960 = vld [vmem:[#allocation8 + $0x4] sm:$0xf]
        %v961 = vld [vmem:[#allocation8 + $0x8] sm:$0xf]
        %v962 = vld [vmem:[#allocation8 + $0xc] sm:$0xf]
        %v963 = vld [vmem:[#allocation8 + $0x10] sm:$0xf]
        %v964 = vld [vmem:[#allocation8 + $0x14] sm:$0xf]
        %v965 = vld [vmem:[#allocation8 + $0x18] sm:$0xf]
        %v966 = vld [vmem:[#allocation8 + $0x1c] sm:$0xf]
        %v967 = vld [vmem:[#allocation8 + $0x20] sm:$0xf]
        %v968 = vld [vmem:[#allocation8 + $0x24] sm:$0xf]
        %v969 = vld [vmem:[#allocation8 + $0x28] sm:$0xf]
        %v970 = vld [vmem:[#allocation8 + $0x2c] sm:$0xf]
        %v971 = vld [vmem:[#allocation8 + $0x30] sm:$0xf]
        %v972 = vld [vmem:[#allocation8 + $0x34] sm:$0xf]
        %v973 = vld [vmem:[#allocation8 + $0x38] sm:$0xf]
        %v974 = vld [vmem:[#allocation8 + $0x3c] sm:$0xf]
        %v975 = vld [vmem:[#allocation8 + $0x40] sm:$0xf]
        %v976 = vld [vmem:[#allocation8 + $0x44] sm:$0xf]
        %v977 = vld [vmem:[#allocation8 + $0x48] sm:$0xf]
        %v978 = vld [vmem:[#allocation8 + $0x4c] sm:$0xf]
        %v979 = vld [vmem:[#allocation8 + $0x50] sm:$0xf]
        %v980 = vld [vmem:[#allocation8 + $0x54] sm:$0xf]
        %v981 = vld [vmem:[#allocation8 + $0x58] sm:$0xf]
        %v982 = vld [vmem:[#allocation8 + $0x5c] sm:$0xf]
        %v983 = vld [vmem:[#allocation8 + $0x60] sm:$0xf]
        %v984 = vld [vmem:[#allocation8 + $0x64] sm:$0xf]
        %v985 = vld [vmem:[#allocation8 + $0x68] sm:$0xf]
        %v986 = vld [vmem:[#allocation8 + $0x6c] sm:$0xf]
        %v987 = vld [vmem:[#allocation8 + $0x70] sm:$0xf]
        %v988 = vld [vmem:[#allocation8 + $0x74] sm:$0xf]
        %v989 = vld [vmem:[#allocation8 + $0x78] sm:$0xf]
        %v990 = vld [vmem:[#allocation8 + $0x7c] sm:$0xf]
        %v991 = vld [vmem:[#allocation8 + $0x80] sm:$0xf]
        %v992 = vld [vmem:[#allocation8 + $0x84] sm:$0xf]
        %v993 = vld [vmem:[#allocation8 + $0x88] sm:$0xf]
        %v994 = vld [vmem:[#allocation8 + $0x8c] sm:$0xf]
        %v995 = vld [vmem:[#allocation8 + $0x90] sm:$0xf]
        %v996 = vld [vmem:[#allocation8 + $0x94] sm:$0xf]
        %v997 = vld [vmem:[#allocation8 + $0x98] sm:$0xf]
        %v998 = vld [vmem:[#allocation8 + $0x9c] sm:$0xf]
        %v999 = vld [vmem:[#allocation8 + $0xa0] sm:$0xf]
        %v1000 = vld [vmem:[#allocation8 + $0xa4] sm:$0xf]
        %v1001 = vld [vmem:[#allocation8 + $0xa8] sm:$0xf]
        %v1002 = vld [vmem:[#allocation8 + $0xac] sm:$0xf]
        %v1003 = vld [vmem:[#allocation8 + $0xb0] sm:$0xf]
        %v1004 = vld [vmem:[#allocation8 + $0xb4] sm:$0xf]
        %v1005 = vld [vmem:[#allocation8 + $0xb8] sm:$0xf]
        %v1006 = vld [vmem:[#allocation8 + $0xbc] sm:$0xf]
        %v1055 = vunpack.c.l.b16 %v959
        %v1056 = vunpack.c.l.b16 %v960
        %v1057 = vunpack.c.l.b16 %v961
        %v1058 = vunpack.c.l.b16 %v962
        %v1059 = vunpack.c.l.b16 %v963
        %v1060 = vunpack.c.l.b16 %v964
        %v1061 = vunpack.c.l.b16 %v965
        %v1062 = vunpack.c.l.b16 %v966
        %v1063 = vunpack.c.l.b16 %v967
        %v1064 = vunpack.c.l.b16 %v968
        %v1065 = vunpack.c.l.b16 %v969
        %v1066 = vunpack.c.l.b16 %v970
        %v1067 = vunpack.c.l.b16 %v971
        %v1068 = vunpack.c.l.b16 %v972
        %v1069 = vunpack.c.l.b16 %v973
        %v1070 = vunpack.c.l.b16 %v974
        %v1071 = vunpack.c.l.b16 %v975
        %v1072 = vunpack.c.l.b16 %v976
        %v1073 = vunpack.c.l.b16 %v977
        %v1074 = vunpack.c.l.b16 %v978
        %v1075 = vunpack.c.l.b16 %v979
        %v1076 = vunpack.c.l.b16 %v980
        %v1077 = vunpack.c.l.b16 %v981
        %v1078 = vunpack.c.l.b16 %v982
        %v1079 = vunpack.c.l.b16 %v983
        %v1080 = vunpack.c.l.b16 %v984
        %v1081 = vunpack.c.l.b16 %v985
        %v1082 = vunpack.c.l.b16 %v986
        %v1083 = vunpack.c.l.b16 %v987
        %v1084 = vunpack.c.l.b16 %v988
        %v1085 = vunpack.c.l.b16 %v989
        %v1086 = vunpack.c.l.b16 %v990
        %v1087 = vunpack.c.l.b16 %v991
        %v1088 = vunpack.c.l.b16 %v992
        %v1089 = vunpack.c.l.b16 %v993
        %v1090 = vunpack.c.l.b16 %v994
        %v1091 = vunpack.c.l.b16 %v995
        %v1092 = vunpack.c.l.b16 %v996
        %v1093 = vunpack.c.l.b16 %v997
        %v1094 = vunpack.c.l.b16 %v998
        %v1095 = vunpack.c.l.b16 %v999
        %v1096 = vunpack.c.l.b16 %v1000
        %v1097 = vunpack.c.l.b16 %v1001
        %v1098 = vunpack.c.l.b16 %v1002
        %v1099 = vunpack.c.l.b16 %v1003
        %v1100 = vunpack.c.l.b16 %v1004
        %v1101 = vunpack.c.l.b16 %v1005
        %v1102 = vunpack.c.l.b16 %v1006
        %v1103 = vpack.c.b16 %v1056, %v1055
        %v1104 = vpack.c.b16 %v1058, %v1057
        %v1105 = vpack.c.b16 %v1060, %v1059
        %v1106 = vpack.c.b16 %v1062, %v1061
        %v1107 = vpack.c.b16 %v1064, %v1063
        %v1108 = vpack.c.b16 %v1066, %v1065
        %v1109 = vpack.c.b16 %v1068, %v1067
        %v1110 = vpack.c.b16 %v1070, %v1069
        %v1111 = vpack.c.b16 %v1072, %v1071
        %v1112 = vpack.c.b16 %v1074, %v1073
        %v1113 = vpack.c.b16 %v1076, %v1075
        %v1114 = vpack.c.b16 %v1078, %v1077
        %v1115 = vpack.c.b16 %v1080, %v1079
        %v1116 = vpack.c.b16 %v1082, %v1081
        %v1117 = vpack.c.b16 %v1084, %v1083
        %v1118 = vpack.c.b16 %v1086, %v1085
        %v1119 = vpack.c.b16 %v1088, %v1087
        %v1120 = vpack.c.b16 %v1090, %v1089
        %v1121 = vpack.c.b16 %v1092, %v1091
        %v1122 = vpack.c.b16 %v1094, %v1093
        %v1123 = vpack.c.b16 %v1096, %v1095
        %v1124 = vpack.c.b16 %v1098, %v1097
        %v1125 = vpack.c.b16 %v1100, %v1099
        %v1126 = vpack.c.b16 %v1102, %v1101
        %1151 = vmatpush.bf16.msra.mxu0 %v1110
        %1152 = vmatpush.bf16.msra.mxu0 %v1109
        %1153 = vmatpush.bf16.msra.mxu0 %v1108
        %1154 = vmatpush.bf16.msra.mxu0 %v1107
        %1155 = vmatpush.bf16.msra.mxu0 %v1106
        %1156 = vmatpush.bf16.msra.mxu0 %v1105
        %1157 = vmatpush.bf16.msra.mxu0 %v1104
        %1158 = vmatpush.bf16.msra.mxu0 %v1103
        %1159 = vmatmul.bf16.gmra.mxu0 %v945
        %v1160 = vpop.f32.mrf.mxu0
        %v1161 = vadd.f32 0.0, %v1160
        %v1162 = vpop.f32.mrf.mxu0
        %v1163 = vadd.f32 0.0, %v1162
        %1164 = vdwg.mxu0
        %1165 = vmatpush.bf16.msra.mxu0 %v1118
        %1166 = vmatpush.bf16.msra.mxu0 %v1117
        %1167 = vmatpush.bf16.msra.mxu0 %v1116
        %1168 = vmatpush.bf16.msra.mxu0 %v1115
        %1169 = vmatpush.bf16.msra.mxu0 %v1114
        %1170 = vmatpush.bf16.msra.mxu0 %v1113
        %1171 = vmatpush.bf16.msra.mxu0 %v1112
        %1172 = vmatpush.bf16.msra.mxu0 %v1111
        %1173 = vmatmul.bf16.gmra.mxu0 %v951
        %v1174 = vpop.f32.mrf.mxu0
        %v1175 = vadd.f32 %v1161, %v1174
        %v1176 = vpop.f32.mrf.mxu0
        %v1177 = vadd.f32 %v1163, %v1176
        %1178 = vdwg.mxu0
        %1179 = vmatpush.bf16.msra.mxu0 %v1126
        %1180 = vmatpush.bf16.msra.mxu0 %v1125
        %1181 = vmatpush.bf16.msra.mxu0 %v1124
        %1182 = vmatpush.bf16.msra.mxu0 %v1123
        %1183 = vmatpush.bf16.msra.mxu0 %v1122
        %1184 = vmatpush.bf16.msra.mxu0 %v1121
        %1185 = vmatpush.bf16.msra.mxu0 %v1120
        %1186 = vmatpush.bf16.msra.mxu0 %v1119
        %1187 = vmatmul.bf16.gmra.mxu0 %v957
        %v1188 = vpop.f32.mrf.mxu0
        %v1189 = vadd.f32 %v1175, %v1188
        %v1190 = vpop.f32.mrf.mxu0
        %v1191 = vadd.f32 %v1177, %v1190
        %1192 = vdwg.mxu0
        %v1193 = vadd.f32 %v861, %v1189
        %v1194 = vadd.f32 %v862, %v1191
        %v1195 = vld [vmem:[%s5] sm:$0x1]
        %v1196 = vld [vmem:[%s6] sm:$0x1]
        %1197 = vadd.xlane.f32.xlu0 %v1193
        %v1198 = vpop.xlane.xlu0 %1197
        %1199 = vadd.xlane.f32.xlu0 %v1194
        %v1200 = vpop.xlane.xlu0 %1199
        %v1201 = vmul.f32 %v1193, %v1193
        %v1202 = vmul.f32 %v1194, %v1194
        %1203 = vadd.xlane.f32.xlu0 %v1201
        %v1204 = vpop.xlane.xlu0 %1203
        %1205 = vadd.xlane.f32.xlu0 %v1202
        %v1206 = vpop.xlane.xlu0 %1205
        %v1207 = vmul.f32 %v1198, 0.03125
        %v1208 = vmul.f32 %v1200, 0.03125
        %v1209 = vmul.f32 %v1204, 0.03125
        %v1210 = vmul.f32 %v1206, 0.03125
        %v1211 = vmul.f32 %v1207, %v1207
        %v1212 = vmul.f32 %v1208, %v1208
        %v1213 = vsub.f32 %v1209, %v1211
        %v1214 = vsub.f32 %v1210, %v1212
        %v1215 = vsub.f32 %v1193, %v1207
        %v1216 = vsub.f32 %v1194, %v1208
        %v1217 = vadd.f32 %v1213, 1e-05
        %v1218 = vadd.f32 %v1214, 1e-05
        %v1219 = vrsqrt.pop %v1217
        %v1220 = vmul.f32 %v1219, %v1217
        %v1221 = vmul.f32 %v1220, %v1219
        %v1222 = vmul.f32 0.5, %v1221
        %v1223 = vsub.f32 1.5, %v1222
        %v1224 = vmul.f32 %v1219, %v1223
        %vm1225 = vweird.f32 %v1217
        %vm1226 = vweird.f32 %v1219
        %vm1227 = vmor %vm1225, %vm1226
        %v1228 = vsel %vm1227, %v1219, %v1224
        %v1229 = vrsqrt.pop %v1218
        %v1230 = vmul.f32 %v1229, %v1218
        %v1231 = vmul.f32 %v1230, %v1229
        %v1232 = vmul.f32 0.5, %v1231
        %v1233 = vsub.f32 1.5, %v1232
        %v1234 = vmul.f32 %v1229, %v1233
        %vm1235 = vweird.f32 %v1218
        %vm1236 = vweird.f32 %v1229
        %vm1237 = vmor %vm1235, %vm1236
        %v1238 = vsel %vm1237, %v1229, %v1234
        %v1239 = vmul.f32 %v1215, %v1228
        %v1240 = vmul.f32 %v1216, %v1238
        %v1242 = vperm.slane %v1195, 0
        %v1244 = vmul.f32 %v1239, %v1242
        %v1245 = vmul.f32 %v1240, %v1242
        %v1247 = vperm.slane %v1196, 0
        %v1249 = vadd.f32 %v1244, %v1247
        %v1250 = vadd.f32 %v1245, %v1247
        %v1251 = vmul.f32 %v1249, 0.01
        %v1252 = vmul.f32 %v1250, 0.01
        %v1253 = vmax.f32 %v1249, %v1251
        %v1254 = vmax.f32 %v1250, %v1252
        %v1255 = vrot.slane %v1253, 7
        %v1256 = vrot.slane %v1254, 7
        %v1257 = vsel %vm583, %v1255, %v1256
        %v1258 = vsel %vm583, %v1256, %v1255
        %v1259 = vsel %vm588, %v1258, 0.0
        %v1260 = vsel %vm589, %v1257, 0.0
        %v1261 = vrot.slane %v1253, 1
        %v1262 = vrot.slane %v1254, 1
        %v1263 = vsel %vm594, %v1261, %v1262
        %v1264 = vsel %vm594, %v1262, %v1261
        %v1265 = vsel %vm599, %v1263, 0.0
        %v1266 = vsel %vm600, %v1264, 0.0
        %v1267 = vpack.c.bf16 %v1259, %v1259
        %v1268 = vpack.c.bf16 %v1260, %v1260
        %v1269 = vpack.c.bf16 %v1253, %v1253
        %v1270 = vpack.c.bf16 %v1254, %v1254
        %v1271 = vpack.c.bf16 %v1265, %v1265
        %v1272 = vpack.c.bf16 %v1266, %v1266
        %v1275 = vunpack.c.l.b16 %v1267
        %v1276 = vunpack.c.l.b16 %v1268
        %v1277 = vpack.c.b16 %v1276, %v1275
        %v1281 = vunpack.c.l.b16 %v1269
        %v1282 = vunpack.c.l.b16 %v1270
        %v1283 = vpack.c.b16 %v1282, %v1281
        %v1285 = vld [vmem:[#allocation10] sm:$0xf]
        %v1286 = vld [vmem:[#allocation10 + $0x4] sm:$0xf]
        %v1287 = vld [vmem:[#allocation10 + $0x8] sm:$0xf]
        %v1288 = vld [vmem:[#allocation10 + $0xc] sm:$0xf]
        %v1289 = vld [vmem:[#allocation10 + $0x10] sm:$0xf]
        %v1290 = vld [vmem:[#allocation10 + $0x14] sm:$0xf]
        %v1291 = vld [vmem:[#allocation10 + $0x18] sm:$0xf]
        %v1292 = vld [vmem:[#allocation10 + $0x1c] sm:$0xf]
        %v1293 = vld [vmem:[#allocation10 + $0x20] sm:$0xf]
        %v1294 = vld [vmem:[#allocation10 + $0x24] sm:$0xf]
        %v1295 = vld [vmem:[#allocation10 + $0x28] sm:$0xf]
        %v1296 = vld [vmem:[#allocation10 + $0x2c] sm:$0xf]
        %v1297 = vld [vmem:[#allocation10 + $0x30] sm:$0xf]
        %v1298 = vld [vmem:[#allocation10 + $0x34] sm:$0xf]
        %v1299 = vld [vmem:[#allocation10 + $0x38] sm:$0xf]
        %v1300 = vld [vmem:[#allocation10 + $0x3c] sm:$0xf]
        %v1301 = vld [vmem:[#allocation10 + $0x40] sm:$0xf]
        %v1302 = vld [vmem:[#allocation10 + $0x44] sm:$0xf]
        %v1303 = vld [vmem:[#allocation10 + $0x48] sm:$0xf]
        %v1304 = vld [vmem:[#allocation10 + $0x4c] sm:$0xf]
        %v1305 = vld [vmem:[#allocation10 + $0x50] sm:$0xf]
        %v1306 = vld [vmem:[#allocation10 + $0x54] sm:$0xf]
        %v1307 = vld [vmem:[#allocation10 + $0x58] sm:$0xf]
        %v1308 = vld [vmem:[#allocation10 + $0x5c] sm:$0xf]
        %v1309 = vld [vmem:[#allocation10 + $0x60] sm:$0xf]
        %v1310 = vld [vmem:[#allocation10 + $0x64] sm:$0xf]
        %v1311 = vld [vmem:[#allocation10 + $0x68] sm:$0xf]
        %v1312 = vld [vmem:[#allocation10 + $0x6c] sm:$0xf]
        %v1313 = vld [vmem:[#allocation10 + $0x70] sm:$0xf]
        %v1314 = vld [vmem:[#allocation10 + $0x74] sm:$0xf]
        %v1315 = vld [vmem:[#allocation10 + $0x78] sm:$0xf]
        %v1316 = vld [vmem:[#allocation10 + $0x7c] sm:$0xf]
        %v1349 = vunpack.c.l.b16 %v1285
        %v1350 = vunpack.c.l.b16 %v1286
        %v1351 = vunpack.c.l.b16 %v1287
        %v1352 = vunpack.c.l.b16 %v1288
        %v1353 = vunpack.c.l.b16 %v1289
        %v1354 = vunpack.c.l.b16 %v1290
        %v1355 = vunpack.c.l.b16 %v1291
        %v1356 = vunpack.c.l.b16 %v1292
        %v1357 = vunpack.c.l.b16 %v1293
        %v1358 = vunpack.c.l.b16 %v1294
        %v1359 = vunpack.c.l.b16 %v1295
        %v1360 = vunpack.c.l.b16 %v1296
        %v1361 = vunpack.c.l.b16 %v1297
        %v1362 = vunpack.c.l.b16 %v1298
        %v1363 = vunpack.c.l.b16 %v1299
        %v1364 = vunpack.c.l.b16 %v1300
        %v1365 = vunpack.c.l.b16 %v1301
        %v1366 = vunpack.c.l.b16 %v1302
        %v1367 = vunpack.c.l.b16 %v1303
        %v1368 = vunpack.c.l.b16 %v1304
        %v1369 = vunpack.c.l.b16 %v1305
        %v1370 = vunpack.c.l.b16 %v1306
        %v1371 = vunpack.c.l.b16 %v1307
        %v1372 = vunpack.c.l.b16 %v1308
        %v1373 = vunpack.c.l.b16 %v1309
        %v1374 = vunpack.c.l.b16 %v1310
        %v1375 = vunpack.c.l.b16 %v1311
        %v1376 = vunpack.c.l.b16 %v1312
        %v1377 = vunpack.c.l.b16 %v1313
        %v1378 = vunpack.c.l.b16 %v1314
        %v1379 = vunpack.c.l.b16 %v1315
        %v1380 = vunpack.c.l.b16 %v1316
        %v1381 = vpack.c.b16 %v1350, %v1349
        %v1382 = vpack.c.b16 %v1352, %v1351
        %v1383 = vpack.c.b16 %v1354, %v1353
        %v1384 = vpack.c.b16 %v1356, %v1355
        %v1385 = vpack.c.b16 %v1358, %v1357
        %v1386 = vpack.c.b16 %v1360, %v1359
        %v1387 = vpack.c.b16 %v1362, %v1361
        %v1388 = vpack.c.b16 %v1364, %v1363
        %v1389 = vpack.c.b16 %v1366, %v1365
        %v1390 = vpack.c.b16 %v1368, %v1367
        %v1391 = vpack.c.b16 %v1370, %v1369
        %v1392 = vpack.c.b16 %v1372, %v1371
        %v1393 = vpack.c.b16 %v1374, %v1373
        %v1394 = vpack.c.b16 %v1376, %v1375
        %v1395 = vpack.c.b16 %v1378, %v1377
        %v1396 = vpack.c.b16 %v1380, %v1379
        %1413 = vmatpush.bf16.msra.mxu0 %v1388
        %1414 = vmatpush.bf16.msra.mxu0 %v1387
        %1415 = vmatpush.bf16.msra.mxu0 %v1386
        %1416 = vmatpush.bf16.msra.mxu0 %v1385
        %1417 = vmatpush.bf16.msra.mxu0 %v1384
        %1418 = vmatpush.bf16.msra.mxu0 %v1383
        %1419 = vmatpush.bf16.msra.mxu0 %v1382
        %1420 = vmatpush.bf16.msra.mxu0 %v1381
        %1421 = vmatmul.bf16.gmra.mxu0 %v1277
        %v1422 = vpop.f32.mrf.mxu0
        %v1423 = vadd.f32 0.0, %v1422
        %v1424 = vpop.f32.mrf.mxu0
        %v1425 = vadd.f32 0.0, %v1424
        %1426 = vdwg.mxu0
        %1427 = vmatpush.bf16.msra.mxu0 %v1396
        %1428 = vmatpush.bf16.msra.mxu0 %v1395
        %1429 = vmatpush.bf16.msra.mxu0 %v1394
        %1430 = vmatpush.bf16.msra.mxu0 %v1393
        %1431 = vmatpush.bf16.msra.mxu0 %v1392
        %1432 = vmatpush.bf16.msra.mxu0 %v1391
        %1433 = vmatpush.bf16.msra.mxu0 %v1390
        %1434 = vmatpush.bf16.msra.mxu0 %v1389
        %1435 = vmatmul.bf16.gmra.mxu0 %v1283
        %v1436 = vpop.f32.mrf.mxu0
        %v1437 = vadd.f32 %v1423, %v1436
        %v1438 = vpop.f32.mrf.mxu0
        %v1439 = vadd.f32 %v1425, %v1438
        %1440 = vdwg.mxu0
        %v1443 = vunpack.c.l.b16 %v1271
        %v1444 = vunpack.c.l.b16 %v1272
        %v1445 = vpack.c.b16 %v1444, %v1443
        %v1447 = vld [vmem:[#allocation11] sm:$0xf]
        %v1448 = vld [vmem:[#allocation11 + $0x4] sm:$0xf]
        %v1449 = vld [vmem:[#allocation11 + $0x8] sm:$0xf]
        %v1450 = vld [vmem:[#allocation11 + $0xc] sm:$0xf]
        %v1451 = vld [vmem:[#allocation11 + $0x10] sm:$0xf]
        %v1452 = vld [vmem:[#allocation11 + $0x14] sm:$0xf]
        %v1453 = vld [vmem:[#allocation11 + $0x18] sm:$0xf]
        %v1454 = vld [vmem:[#allocation11 + $0x1c] sm:$0xf]
        %v1455 = vld [vmem:[#allocation11 + $0x20] sm:$0xf]
        %v1456 = vld [vmem:[#allocation11 + $0x24] sm:$0xf]
        %v1457 = vld [vmem:[#allocation11 + $0x28] sm:$0xf]
        %v1458 = vld [vmem:[#allocation11 + $0x2c] sm:$0xf]
        %v1459 = vld [vmem:[#allocation11 + $0x30] sm:$0xf]
        %v1460 = vld [vmem:[#allocation11 + $0x34] sm:$0xf]
        %v1461 = vld [vmem:[#allocation11 + $0x38] sm:$0xf]
        %v1462 = vld [vmem:[#allocation11 + $0x3c] sm:$0xf]
        %v1463 = vld [vmem:[#allocation11 + $0x40] sm:$0xf]
        %v1464 = vld [vmem:[#allocation11 + $0x44] sm:$0xf]
        %v1465 = vld [vmem:[#allocation11 + $0x48] sm:$0xf]
        %v1466 = vld [vmem:[#allocation11 + $0x4c] sm:$0xf]
        %v1467 = vld [vmem:[#allocation11 + $0x50] sm:$0xf]
        %v1468 = vld [vmem:[#allocation11 + $0x54] sm:$0xf]
        %v1469 = vld [vmem:[#allocation11 + $0x58] sm:$0xf]
        %v1470 = vld [vmem:[#allocation11 + $0x5c] sm:$0xf]
        %v1471 = vld [vmem:[#allocation11 + $0x60] sm:$0xf]
        %v1472 = vld [vmem:[#allocation11 + $0x64] sm:$0xf]
        %v1473 = vld [vmem:[#allocation11 + $0x68] sm:$0xf]
        %v1474 = vld [vmem:[#allocation11 + $0x6c] sm:$0xf]
        %v1475 = vld [vmem:[#allocation11 + $0x70] sm:$0xf]
        %v1476 = vld [vmem:[#allocation11 + $0x74] sm:$0xf]
        %v1477 = vld [vmem:[#allocation11 + $0x78] sm:$0xf]
        %v1478 = vld [vmem:[#allocation11 + $0x7c] sm:$0xf]
        %v1511 = vunpack.c.l.b16 %v1447
        %v1512 = vunpack.c.l.b16 %v1448
        %v1513 = vunpack.c.l.b16 %v1449
        %v1514 = vunpack.c.l.b16 %v1450
        %v1515 = vunpack.c.l.b16 %v1451
        %v1516 = vunpack.c.l.b16 %v1452
        %v1517 = vunpack.c.l.b16 %v1453
        %v1518 = vunpack.c.l.b16 %v1454
        %v1519 = vunpack.c.l.b16 %v1455
        %v1520 = vunpack.c.l.b16 %v1456
        %v1521 = vunpack.c.l.b16 %v1457
        %v1522 = vunpack.c.l.b16 %v1458
        %v1523 = vunpack.c.l.b16 %v1459
        %v1524 = vunpack.c.l.b16 %v1460
        %v1525 = vunpack.c.l.b16 %v1461
        %v1526 = vunpack.c.l.b16 %v1462
        %v1527 = vunpack.c.l.b16 %v1463
        %v1528 = vunpack.c.l.b16 %v1464
        %v1529 = vunpack.c.l.b16 %v1465
        %v1530 = vunpack.c.l.b16 %v1466
        %v1531 = vunpack.c.l.b16 %v1467
        %v1532 = vunpack.c.l.b16 %v1468
        %v1533 = vunpack.c.l.b16 %v1469
        %v1534 = vunpack.c.l.b16 %v1470
        %v1535 = vunpack.c.l.b16 %v1471
        %v1536 = vunpack.c.l.b16 %v1472
        %v1537 = vunpack.c.l.b16 %v1473
        %v1538 = vunpack.c.l.b16 %v1474
        %v1539 = vunpack.c.l.b16 %v1475
        %v1540 = vunpack.c.l.b16 %v1476
        %v1541 = vunpack.c.l.b16 %v1477
        %v1542 = vunpack.c.l.b16 %v1478
        %v1543 = vpack.c.b16 %v1512, %v1511
        %v1544 = vpack.c.b16 %v1514, %v1513
        %v1545 = vpack.c.b16 %v1516, %v1515
        %v1546 = vpack.c.b16 %v1518, %v1517
        %v1547 = vpack.c.b16 %v1520, %v1519
        %v1548 = vpack.c.b16 %v1522, %v1521
        %v1549 = vpack.c.b16 %v1524, %v1523
        %v1550 = vpack.c.b16 %v1526, %v1525
        %v1551 = vpack.c.b16 %v1528, %v1527
        %v1552 = vpack.c.b16 %v1530, %v1529
        %v1553 = vpack.c.b16 %v1532, %v1531
        %v1554 = vpack.c.b16 %v1534, %v1533
        %v1555 = vpack.c.b16 %v1536, %v1535
        %v1556 = vpack.c.b16 %v1538, %v1537
        %v1557 = vpack.c.b16 %v1540, %v1539
        %v1558 = vpack.c.b16 %v1542, %v1541
        %1575 = vmatpush.bf16.msra.mxu0 %v1550
        %1576 = vmatpush.bf16.msra.mxu0 %v1549
        %1577 = vmatpush.bf16.msra.mxu0 %v1548
        %1578 = vmatpush.bf16.msra.mxu0 %v1547
        %1579 = vmatpush.bf16.msra.mxu0 %v1546
        %1580 = vmatpush.bf16.msra.mxu0 %v1545
        %1581 = vmatpush.bf16.msra.mxu0 %v1544
        %1582 = vmatpush.bf16.msra.mxu0 %v1543
        %1583 = vmatmul.bf16.gmra.mxu0 %v1283
        %v1584 = vpop.f32.mrf.mxu0
        %v1585 = vadd.f32 0.0, %v1584
        %v1586 = vpop.f32.mrf.mxu0
        %v1587 = vadd.f32 0.0, %v1586
        %1588 = vdwg.mxu0
        %1589 = vmatpush.bf16.msra.mxu0 %v1558
        %1590 = vmatpush.bf16.msra.mxu0 %v1557
        %1591 = vmatpush.bf16.msra.mxu0 %v1556
        %1592 = vmatpush.bf16.msra.mxu0 %v1555
        %1593 = vmatpush.bf16.msra.mxu0 %v1554
        %1594 = vmatpush.bf16.msra.mxu0 %v1553
        %1595 = vmatpush.bf16.msra.mxu0 %v1552
        %1596 = vmatpush.bf16.msra.mxu0 %v1551
        %1597 = vmatmul.bf16.gmra.mxu0 %v1445
        %v1598 = vpop.f32.mrf.mxu0
        %v1599 = vadd.f32 %v1585, %v1598
        %v1600 = vpop.f32.mrf.mxu0
        %v1601 = vadd.f32 %v1587, %v1600
        %1602 = vdwg.mxu0
        %1603 = vst [vmem:[%s487] sm:$0xff] %v1437
        %1604 = vst [vmem:[%s487 + $0x8] sm:$0xff] %v1599
        %1605 = vst [vmem:[%s487 + $0x10] sm:$0xff] %v1439
        %1606 = vst [vmem:[%s487 + $0x18] sm:$0xff] %v1601
        %s1607 = sand.u32 %s275, 1
        %s1608 = scalar_lea.sflag [#allocation4], %s1607
        %s1609 = sand.u32 %s275, 1
        %s1610 = smul.addr %s1609, 32
        %s1611 = scalar_lea.vmem [#allocation13], %s1610
        // Predicated region
        $region89: #{tpu_custom_call.1} parent=63 // pred_check
          %p1612 = pneg %p285
        $region90: #{tpu_custom_call.1} parent=63 // pred_check_branch
          %1614 = sbr.rel (%p1612) target = $region92
        $region91: #{tpu_custom_call.1} parent=63 // pred_region
          %1616 = vsyncadd %s1608, 0
          %s1617 = smul.addr %s31, 4
          %s1618 = smul.addr %s1617, 8
          %s1619 = scalar_lea.hbm %s11, %s1618
          %s1620 = sshll.u32 %s1611, 4
          %s1621 = int_to_ptr.vmem [resolvable:$true] %s1620
          %s1622 = sshll.u32 %s1619, 4
          %s1623 = int_to_ptr.hbm [resolvable:$true] %s1622
          %1628 = dma.vmem_to_hbm [thread:$0]  %s1621, 512, %s1623, %s1608, 256, 256, 16
        $region92: #{tpu_custom_call.1} parent=63 // pred_fallthru
          _
      $region64: #{tpu_custom_call.1} parent=5 // pred_fallthru
        _
      %p1629 = scmp.le.s32.totalorder 2, %s26
      // Predicated region
      $region93: #{tpu_custom_call.1} parent=5 // pred_check
        %p1630 = pneg %p1629
      $region94: #{tpu_custom_call.1} parent=5 // pred_check_branch
        %1632 = sbr.rel (%p1630) target = $region96
      $region95: #{tpu_custom_call.1} parent=5 // pred_region
        %s1633 = ssub.s32 %s26, 2
        // Predicated region
        $region97: #{tpu_custom_call.1} parent=95 // pred_check
          %p1634 = pneg %p291
        $region98: #{tpu_custom_call.1} parent=95 // pred_check_branch
          %1636 = sbr.rel (%p1634) target = $region100
        $region99: #{tpu_custom_call.1} parent=95 // pred_region
          %s1637 = sand.u32 %s276, 1
          %s1638 = scalar_lea.sflag [#allocation4], %s1637
          %s1639 = sand.u32 %s276, 1
          %s1640 = smul.addr %s1639, 32
          %s1641 = scalar_lea.vmem [#allocation13], %s1640
          %1643 = dma.done %s1638, 512
        $region100: #{tpu_custom_call.1} parent=95 // pred_fallthru
          _
      $region96: #{tpu_custom_call.1} parent=5 // pred_fallthru
        _
    $region6: #{tpu_custom_call.1} parent=1 // loop_footer
      %s30 = sadd.s32 1, %s26
    $region7: #{tpu_custom_call.1} parent=1 // loop_footer_branch
      %25 = sbr.rel target = $region3
    $region8: #{tpu_custom_call.1} parent=1 // loop_exit
      _
    %1644 = vsyncpa [#allocation3], 1
    %s1645 = scalar_lea.sflag [#allocation3], 1
    %1646 = vsyncpa %s1645, 1
    %1647 = vsyncpa [#allocation6], 1
    %1648 = vsyncpa [#allocation9], 1
    %1649 = vsyncpa [#allocation12], 1
    %1650 = vsyncpa [#allocation4], 1
    %s1651 = scalar_lea.sflag [#allocation4], 1
    %1652 = vsyncpa %s1651, 1

// kernel: tpu_custom_call.1
$region0: #{tpu_custom_call.1}
  #allocation0 [shape = 'u32[]', space=smem, size = 0x4, offset = 0x4, fixed_abs, tag = 'smem constant byte address 0x4 - core index']
  #allocation1 [shape = 'u32[72,128]{1,0:T(1,128)}', space=vmem, size = 0x9000, scoped, tag = 'internal scratch']
  %s0 = inlined_call_operand.hbm [shape: f32[2,16,128], index: 0, kind: input, shape index: {}]
  %s1 = inlined_call_operand.hbm [shape: f32[1,128], index: 1, kind: input, shape index: {}]
  %s2 = inlined_call_operand.vmem [shape: f32[1,128], index: 2, kind: input, shape index: {}]
  %s3 = inlined_call_operand.vmem [shape: f32[1,128], index: 3, kind: input, shape index: {}]
  %s4 = inlined_call_operand.vmem [shape: f32[1,128], index: 4, kind: input, shape index: {}]
  %s5 = inlined_call_operand.vmem [shape: f32[1,128], index: 5, kind: input, shape index: {}]
  %s6 = inlined_call_operand.vmem [shape: f32[1,128], index: 6, kind: input, shape index: {}]
  %s7 = inlined_call_operand.hbm [shape: bf16[384,128], index: 7, kind: input, shape index: {}]
  %s8 = inlined_call_operand.hbm [shape: bf16[384,128], index: 8, kind: input, shape index: {}]
  %s9 = inlined_call_operand.hbm [shape: bf16[256,128], index: 9, kind: input, shape index: {}]
  %s10 = inlined_call_operand.hbm [shape: bf16[256,128], index: 10, kind: input, shape index: {}]
  %s11 = inlined_call_operand.hbm [shape: f32[2,16,256], index: 11, kind: output, shape index: {}]
  %s12 = sld [smem:[#allocation0]]
  $region101: #{tpu_custom_call.1} parent=0
    _
  %s14 = ssub.s32 1, %s12
  %s15 = scalar_select 0, %s14, %s12
  $region1: #{tpu_custom_call.1} parent=0
    #allocation2 [shape = 'u8[16384]{0}', space=vmem, size = 0x4000, scoped, tag = 'input window, operand 0']
    #allocation3 [shape = 's32[2]{0}', space=sflag, size = 0x8, scoped, tag = 'scoped memory for tpu_custom_call.1']
    #allocation4 [shape = 's32[2]{0}', space=sflag, size = 0x8, scoped, tag = 'scoped memory for tpu_custom_call.1']
    #allocation5 [shape = 'u8[512]{0}', space=vmem, size = 0x400, scoped, tag = 'input window, operand 1, single buffered']
    #allocation6 [shape = 's32[1]{0}', space=sflag, size = 0x4, scoped, tag = 'scoped memory for tpu_custom_call.1']
    #allocation7 [shape = 'u8[98304]{0}', space=vmem, size = 0x18000, scoped, tag = 'input window, operand 7, single buffered']
    #allocation8 [shape = 'u8[98304]{0}', space=vmem, size = 0x18000, scoped, tag = 'input window, operand 8, single buffered']
    #allocation9 [shape = 's32[1]{0}', space=sflag, size = 0x4, scoped, tag = 'scoped memory for tpu_custom_call.1']
    #allocation10 [shape = 'u8[65536]{0}', space=vmem, size = 0x10000, scoped, tag = 'input window, operand 9, single buffered']
    #allocation11 [shape = 'u8[65536]{0}', space=vmem, size = 0x10000, scoped, tag = 'input window, operand 10, single buffered']
    #allocation12 [shape = 's32[1]{0}', space=sflag, size = 0x4, scoped, tag = 'scoped memory for tpu_custom_call.1']
    #allocation13 [shape = 'u8[32768]{0}', space=vmem, size = 0x8000, scoped, tag = 'output window, operand 0']
    %16 = vsyncpa [#allocation3], 0
    %s17 = scalar_lea.sflag [#allocation3], 1
    %18 = vsyncpa %s17, 0
    %19 = vsyncpa [#allocation6], 0
    %20 = vsyncpa [#allocation9], 0
    %21 = vsyncpa [#allocation12], 0
    %22 = vsyncpa [#allocation4], 0
    %s23 = scalar_lea.sflag [#allocation4], 1
    %24 = vsyncpa %s23, 0
    loop: start=0, step=1, limit=4
    $region2: #{tpu_custom_call.1} parent=1 // loop_pre_header
      _
    $region3: #{tpu_custom_call.1} parent=1 // loop_header
      %s26 = sphi 0, %s30
      %p27 = scmp.ge.s32.totalorder %s26, 4
      %s36 = sphi 0, %s38
      %s39 = sphi 0, %s36
      %s40 = sphi 0, %s39
      %s56 = sphi 0, %s40
      %s60 = sphi 0, %s60
      %s62 = sphi 0, %s60
      %s63 = sphi 0, %s62
      %s77 = sphi 0, %s63
      %s81 = sphi 0, %s81
      %s83 = sphi 0, %s81
      %s84 = sphi 0, %s83
      %s98 = sphi 0, %s84
      %s102 = sphi 0, %s102
      %s104 = sphi 0, %s102
      %s105 = sphi 0, %s104
      %s119 = sphi 0, %s105
      %s123 = sphi 0, %s123
      %s125 = sphi 0, %s123
      %s126 = sphi 0, %s125
      %s140 = sphi 0, %s126
      %s144 = sphi 0, %s144
      %s146 = sphi 0, %s144
      %s147 = sphi 0, %s146
      %s161 = sphi 0, %s147
      %s165 = sphi 0, %s165
      %s167 = sphi 0, %s165
      %s168 = sphi 0, %s167
      %s182 = sphi 0, %s168
      %s186 = sphi 0, %s186
      %s188 = sphi 0, %s186
      %s189 = sphi 0, %s188
      %s203 = sphi 0, %s189
      %s207 = sphi 0, %s207
      %s209 = sphi 0, %s207
      %s210 = sphi 0, %s209
      %s224 = sphi 0, %s210
      %s228 = sphi 0, %s228
      %s230 = sphi 0, %s228
      %s231 = sphi 0, %s230
      %s245 = sphi 0, %s231
      %s249 = sphi 0, %s249
      %s251 = sphi 0, %s249
      %s252 = sphi 0, %s251
      %s266 = sphi 0, %s252
      %s272 = sphi 0, %s274
      %s275 = sphi 0, %s272
      %s276 = sphi 0, %s275
      %s292 = sphi 0, %s276
    $region4: #{tpu_custom_call.1} parent=1 // loop_header_branch
      %29 = sbr.rel (%p27) target = $region8
    $region5: #{tpu_custom_call.1} parent=1 // loop_body
      %s31 = ssub.s32 %s26, 1
      %s32 = ssub.s32 %s26, 2
      %s33 = sadd.s32 %s26, 1
      %s34 = ssub.s32 %s26, %s33
      %p35 = scmp.eq.s32.totalorder %s34, 0
      %s37 = sadd.s32 %s36, 1
      %s38 = scalar_select %p35, %s36, %s37
      %p41 = pneg %p35
      %p42 = scmp.eq.s32.totalorder %s26, 1
      %p43 = por %p41, %p42
      %p44 = scmp.ne.s32.totalorder %s36, %s39
      %p45 = scmp.eq.s32.totalorder %s26, 0
      %p46 = por %p44, %p45
      %p47 = scmp.ne.s32.totalorder %s36, %s39
      %p48 = scmp.eq.s32.totalorder %s31, 1
      %p49 = por %p47, %p48
      %p50 = scmp.ne.s32.totalorder %s39, %s40
      %p51 = scmp.eq.s32.totalorder %s31, 0
      %p52 = por %p50, %p51
      %p53 = scmp.ne.s32.totalorder %s39, %s40
      %p54 = scmp.eq.s32.totalorder %s32, 1
      %p55 = por %p53, %p54
      %p57 = scmp.ne.s32.totalorder %s40, %s56
      %p58 = scmp.eq.s32.totalorder %s32, 0
      %p59 = por %p57, %p58
      %s61 = sadd.s32 %s60, 1
      %p64 = scmp.eq.s32.totalorder %s26, 1
      %p65 = scmp.ne.s32.totalorder %s60, %s62
      %p66 = scmp.eq.s32.totalorder %s26, 0
      %p67 = por %p65, %p66
      %p68 = scmp.ne.s32.totalorder %s60, %s62
      %p69 = scmp.eq.s32.totalorder %s31, 1
      %p70 = por %p68, %p69
      %p71 = scmp.ne.s32.totalorder %s62, %s63
      %p72 = scmp.eq.s32.totalorder %s31, 0
      %p73 = por %p71, %p72
      %p74 = scmp.ne.s32.totalorder %s62, %s63
      %p75 = scmp.eq.s32.totalorder %s32, 1
      %p76 = por %p74, %p75
      %p78 = scmp.ne.s32.totalorder %s63, %s77
      %p79 = scmp.eq.s32.totalorder %s32, 0
      %p80 = por %p78, %p79
      %s82 = sadd.s32 %s81, 1
      %p85 = scmp.eq.s32.totalorder %s26, 1
      %p86 = scmp.ne.s32.totalorder %s81, %s83
      %p87 = scmp.eq.s32.totalorder %s26, 0
      %p88 = por %p86, %p87
      %p89 = scmp.ne.s32.totalorder %s81, %s83
      %p90 = scmp.eq.s32.totalorder %s31, 1
      %p91 = por %p89, %p90
      %p92 = scmp.ne.s32.totalorder %s83, %s84
      %p93 = scmp.eq.s32.totalorder %s31, 0
      %p94 = por %p92, %p93
      %p95 = scmp.ne.s32.totalorder %s83, %s84
      %p96 = scmp.eq.s32.totalorder %s32, 1
      %p97 = por %p95, %p96
      %p99 = scmp.ne.s32.totalorder %s84, %s98
      %p100 = scmp.eq.s32.totalorder %s32, 0
      %p101 = por %p99, %p100
      %s103 = sadd.s32 %s102, 1
      %p106 = scmp.eq.s32.totalorder %s26, 1
      %p107 = scmp.ne.s32.totalorder %s102, %s104
      %p108 = scmp.eq.s32.totalorder %s26, 0
      %p109 = por %p107, %p108
      %p110 = scmp.ne.s32.totalorder %s102, %s104
      %p111 = scmp.eq.s32.totalorder %s31, 1
      %p112 = por %p110, %p111
      %p113 = scmp.ne.s32.totalorder %s104, %s105
      %p114 = scmp.eq.s32.totalorder %s31, 0
      %p115 = por %p113, %p114
      %p116 = scmp.ne.s32.totalorder %s104, %s105
      %p117 = scmp.eq.s32.totalorder %s32, 1
      %p118 = por %p116, %p117
      %p120 = scmp.ne.s32.totalorder %s105, %s119
      %p121 = scmp.eq.s32.totalorder %s32, 0
      %p122 = por %p120, %p121
      %s124 = sadd.s32 %s123, 1
      %p127 = scmp.eq.s32.totalorder %s26, 1
      %p128 = scmp.ne.s32.totalorder %s123, %s125
      %p129 = scmp.eq.s32.totalorder %s26, 0
      %p130 = por %p128, %p129
      %p131 = scmp.ne.s32.totalorder %s123, %s125
      %p132 = scmp.eq.s32.totalorder %s31, 1
      %p133 = por %p131, %p132
      %p134 = scmp.ne.s32.totalorder %s125, %s126
      %p135 = scmp.eq.s32.totalorder %s31, 0
      %p136 = por %p134, %p135
      %p137 = scmp.ne.s32.totalorder %s125, %s126
      %p138 = scmp.eq.s32.totalorder %s32, 1
      %p139 = por %p137, %p138
      %p141 = scmp.ne.s32.totalorder %s126, %s140
      %p142 = scmp.eq.s32.totalorder %s32, 0
      %p143 = por %p141, %p142
      %s145 = sadd.s32 %s144, 1
      %p148 = scmp.eq.s32.totalorder %s26, 1
      %p149 = scmp.ne.s32.totalorder %s144, %s146
      %p150 = scmp.eq.s32.totalorder %s26, 0
      %p151 = por %p149, %p150
      %p152 = scmp.ne.s32.totalorder %s144, %s146
      %p153 = scmp.eq.s32.totalorder %s31, 1
      %p154 = por %p152, %p153
      %p155 = scmp.ne.s32.totalorder %s146, %s147
      %p156 = scmp.eq.s32.totalorder %s31, 0
      %p157 = por %p155, %p156
      %p158 = scmp.ne.s32.totalorder %s146, %s147
      %p159 = scmp.eq.s32.totalorder %s32, 1
      %p160 = por %p158, %p159
      %p162 = scmp.ne.s32.totalorder %s147, %s161
      %p163 = scmp.eq.s32.totalorder %s32, 0
      %p164 = por %p162, %p163
      %s166 = sadd.s32 %s165, 1
      %p169 = scmp.eq.s32.totalorder %s26, 1
      %p170 = scmp.ne.s32.totalorder %s165, %s167
      %p171 = scmp.eq.s32.totalorder %s26, 0
      %p172 = por %p170, %p171
      %p173 = scmp.ne.s32.totalorder %s165, %s167
      %p174 = scmp.eq.s32.totalorder %s31, 1
      %p175 = por %p173, %p174
      %p176 = scmp.ne.s32.totalorder %s167, %s168
      %p177 = scmp.eq.s32.totalorder %s31, 0
      %p178 = por %p176, %p177
      %p179 = scmp.ne.s32.totalorder %s167, %s168
      %p180 = scmp.eq.s32.totalorder %s32, 1
      %p181 = por %p179, %p180
      %p183 = scmp.ne.s32.totalorder %s168, %s182
      %p184 = scmp.eq.s32.totalorder %s32, 0
      %p185 = por %p183, %p184
      %s187 = sadd.s32 %s186, 1
      %p190 = scmp.eq.s32.totalorder %s26, 1
      %p191 = scmp.ne.s32.totalorder %s186, %s188
      %p192 = scmp.eq.s32.totalorder %s26, 0
      %p193 = por %p191, %p192
      %p194 = scmp.ne.s32.totalorder %s186, %s188
      %p195 = scmp.eq.s32.totalorder %s31, 1
      %p196 = por %p194, %p195
      %p197 = scmp.ne.s32.totalorder %s188, %s189
      %p198 = scmp.eq.s32.totalorder %s31, 0
      %p199 = por %p197, %p198
      %p200 = scmp.ne.s32.totalorder %s188, %s189
      %p201 = scmp.eq.s32.totalorder %s32, 1
      %p202 = por %p200, %p201
      %p204 = scmp.ne.s32.totalorder %s189, %s203
      %p205 = scmp.eq.s32.totalorder %s32, 0
      %p206 = por %p204, %p205
      %s208 = sadd.s32 %s207, 1
      %p211 = scmp.eq.s32.totalorder %s26, 1
      %p212 = scmp.ne.s32.totalorder %s207, %s209
      %p213 = scmp.eq.s32.totalorder %s26, 0
      %p214 = por %p212, %p213
      %p215 = scmp.ne.s32.totalorder %s207, %s209
      %p216 = scmp.eq.s32.totalorder %s31, 1
      %p217 = por %p215, %p216
      %p218 = scmp.ne.s32.totalorder %s209, %s210
      %p219 = scmp.eq.s32.totalorder %s31, 0
      %p220 = por %p218, %p219
      %p221 = scmp.ne.s32.totalorder %s209, %s210
      %p222 = scmp.eq.s32.totalorder %s32, 1
      %p223 = por %p221, %p222
      %p225 = scmp.ne.s32.totalorder %s210, %s224
      %p226 = scmp.eq.s32.totalorder %s32, 0
      %p227 = por %p225, %p226
      %s229 = sadd.s32 %s228, 1
      %p232 = scmp.eq.s32.totalorder %s26, 1
      %p233 = scmp.ne.s32.totalorder %s228, %s230
      %p234 = scmp.eq.s32.totalorder %s26, 0
      %p235 = por %p233, %p234
      %p236 = scmp.ne.s32.totalorder %s228, %s230
      %p237 = scmp.eq.s32.totalorder %s31, 1
      %p238 = por %p236, %p237
      %p239 = scmp.ne.s32.totalorder %s230, %s231
      %p240 = scmp.eq.s32.totalorder %s31, 0
      %p241 = por %p239, %p240
      %p242 = scmp.ne.s32.totalorder %s230, %s231
      %p243 = scmp.eq.s32.totalorder %s32, 1
      %p244 = por %p242, %p243
      %p246 = scmp.ne.s32.totalorder %s231, %s245
      %p247 = scmp.eq.s32.totalorder %s32, 0
      %p248 = por %p246, %p247
      %s250 = sadd.s32 %s249, 1
      %p253 = scmp.eq.s32.totalorder %s26, 1
      %p254 = scmp.ne.s32.totalorder %s249, %s251
      %p255 = scmp.eq.s32.totalorder %s26, 0
      %p256 = por %p254, %p255
      %p257 = scmp.ne.s32.totalorder %s249, %s251
      %p258 = scmp.eq.s32.totalorder %s31, 1
      %p259 = por %p257, %p258
      %p260 = scmp.ne.s32.totalorder %s251, %s252
      %p261 = scmp.eq.s32.totalorder %s31, 0
      %p262 = por %p260, %p261
      %p263 = scmp.ne.s32.totalorder %s251, %s252
      %p264 = scmp.eq.s32.totalorder %s32, 1
      %p265 = por %p263, %p264
      %p267 = scmp.ne.s32.totalorder %s252, %s266
      %p268 = scmp.eq.s32.totalorder %s32, 0
      %p269 = por %p267, %p268
      %s270 = ssub.s32 %s26, %s33
      %p271 = scmp.eq.s32.totalorder %s270, 0
      %s273 = sadd.s32 %s272, 1
      %s274 = scalar_select %p271, %s272, %s273
      %p277 = pneg %p271
      %p278 = scmp.eq.s32.totalorder %s26, 1
      %p279 = por %p277, %p278
      %p280 = scmp.ne.s32.totalorder %s272, %s275
      %p281 = scmp.eq.s32.totalorder %s26, 0
      %p282 = por %p280, %p281
      %p283 = scmp.ne.s32.totalorder %s272, %s275
      %p284 = scmp.eq.s32.totalorder %s31, 1
      %p285 = por %p283, %p284
      %p286 = scmp.ne.s32.totalorder %s275, %s276
      %p287 = scmp.eq.s32.totalorder %s31, 0
      %p288 = por %p286, %p287
      %p289 = scmp.ne.s32.totalorder %s275, %s276
      %p290 = scmp.eq.s32.totalorder %s32, 1
      %p291 = por %p289, %p290
      %p293 = scmp.ne.s32.totalorder %s276, %s292
      %p294 = scmp.eq.s32.totalorder %s32, 0
      %p295 = por %p293, %p294
      %p296 = scmp.le.s32.totalorder 1, %s26
      %p297 = scmp.lt.s32.totalorder %s26, 3
      %p298 = pnand %p296, %p297
      %p299 = pneg %p298
      // Predicated region
      $region9: #{tpu_custom_call.1} parent=5 // pred_check
        _
      $region10: #{tpu_custom_call.1} parent=5 // pred_check_branch
        %301 = sbr.rel (%p298) target = $region12
      $region11: #{tpu_custom_call.1} parent=5 // pred_region
        %s302 = ssub.s32 %s26, 1
        // Predicated region
        $region13: #{tpu_custom_call.1} parent=11 // pred_check
          %p303 = pneg %p73
        $region14: #{tpu_custom_call.1} parent=11 // pred_check_branch
          %305 = sbr.rel (%p303) target = $region16
        $region15: #{tpu_custom_call.1} parent=11 // pred_region
          %307 = vsyncadd [#allocation6], 0
          %s309 = sshll.u32 %s1, 4
          %s310 = int_to_ptr.hbm [resolvable:$true] %s309
          %s311 = sshll.u32 [#allocation5], 4
          %s312 = int_to_ptr.vmem [resolvable:$true] %s311
          %314 = dma.hbm_to_vmem [thread:$0]  %s310, 16, %s312, [#allocation6]
        $region16: #{tpu_custom_call.1} parent=11 // pred_fallthru
          _
        // Predicated region
        $region17: #{tpu_custom_call.1} parent=11 // pred_check
          %p315 = pneg %p94
        $region18: #{tpu_custom_call.1} parent=11 // pred_check_branch
          %317 = sbr.rel (%p315) target = $region20
        $region19: #{tpu_custom_call.1} parent=11 // pred_region
          _
        $region20: #{tpu_custom_call.1} parent=11 // pred_fallthru
          _
        // Predicated region
        $region21: #{tpu_custom_call.1} parent=11 // pred_check
          %p318 = pneg %p115
        $region22: #{tpu_custom_call.1} parent=11 // pred_check_branch
          %320 = sbr.rel (%p318) target = $region24
        $region23: #{tpu_custom_call.1} parent=11 // pred_region
          _
        $region24: #{tpu_custom_call.1} parent=11 // pred_fallthru
          _
        // Predicated region
        $region25: #{tpu_custom_call.1} parent=11 // pred_check
          %p321 = pneg %p136
        $region26: #{tpu_custom_call.1} parent=11 // pred_check_branch
          %323 = sbr.rel (%p321) target = $region28
        $region27: #{tpu_custom_call.1} parent=11 // pred_region
          _
        $region28: #{tpu_custom_call.1} parent=11 // pred_fallthru
          _
        // Predicated region
        $region29: #{tpu_custom_call.1} parent=11 // pred_check
          %p324 = pneg %p157
        $region30: #{tpu_custom_call.1} parent=11 // pred_check_branch
          %326 = sbr.rel (%p324) target = $region32
        $region31: #{tpu_custom_call.1} parent=11 // pred_region
          _
        $region32: #{tpu_custom_call.1} parent=11 // pred_fallthru
          _
        // Predicated region
        $region33: #{tpu_custom_call.1} parent=11 // pred_check
          %p327 = pneg %p178
        $region34: #{tpu_custom_call.1} parent=11 // pred_check_branch
          %329 = sbr.rel (%p327) target = $region36
        $region35: #{tpu_custom_call.1} parent=11 // pred_region
          _
        $region36: #{tpu_custom_call.1} parent=11 // pred_fallthru
          _
        // Predicated region
        $region37: #{tpu_custom_call.1} parent=11 // pred_check
          %p330 = pneg %p199
        $region38: #{tpu_custom_call.1} parent=11 // pred_check_branch
          %332 = sbr.rel (%p330) target = $region40
        $region39: #{tpu_custom_call.1} parent=11 // pred_region
          %334 = vsyncadd [#allocation6], 0
          %s335 = sshll.u32 %s7, 4
          %s336 = int_to_ptr.hbm [resolvable:$true] %s335
          %s337 = sshll.u32 [#allocation7], 4
          %s338 = int_to_ptr.vmem [resolvable:$true] %s337
          %343 = dma.hbm_to_vmem [thread:$0]  %s336, 3072, %s338, [#allocation6], 64, 64, 4
        $region40: #{tpu_custom_call.1} parent=11 // pred_fallthru
          _
        // Predicated region
        $region41: #{tpu_custom_call.1} parent=11 // pred_check
          %p344 = pneg %p220
        $region42: #{tpu_custom_call.1} parent=11 // pred_check_branch
          %346 = sbr.rel (%p344) target = $region44
        $region43: #{tpu_custom_call.1} parent=11 // pred_region
          %348 = vsyncadd [#allocation9], 0
          %s349 = sshll.u32 %s8, 4
          %s350 = int_to_ptr.hbm [resolvable:$true] %s349
          %s351 = sshll.u32 [#allocation8], 4
          %s352 = int_to_ptr.vmem [resolvable:$true] %s351
          %357 = dma.hbm_to_vmem [thread:$0]  %s350, 3072, %s352, [#allocation9], 64, 64, 4
        $region44: #{tpu_custom_call.1} parent=11 // pred_fallthru
          _
        // Predicated region
        $region45: #{tpu_custom_call.1} parent=11 // pred_check
          %p358 = pneg %p241
        $region46: #{tpu_custom_call.1} parent=11 // pred_check_branch
          %360 = sbr.rel (%p358) target = $region48
        $region47: #{tpu_custom_call.1} parent=11 // pred_region
          %362 = vsyncadd [#allocation9], 0
          %s363 = sshll.u32 %s9, 4
          %s364 = int_to_ptr.hbm [resolvable:$true] %s363
          %s365 = sshll.u32 [#allocation10], 4
          %s366 = int_to_ptr.vmem [resolvable:$true] %s365
          %371 = dma.hbm_to_vmem [thread:$0]  %s364, 2048, %s366, [#allocation9], 64, 64, 4
        $region48: #{tpu_custom_call.1} parent=11 // pred_fallthru
          _
        // Predicated region
        $region49: #{tpu_custom_call.1} parent=11 // pred_check
          %p372 = pneg %p262
        $region50: #{tpu_custom_call.1} parent=11 // pred_check_branch
          %374 = sbr.rel (%p372) target = $region52
        $region51: #{tpu_custom_call.1} parent=11 // pred_region
          %376 = vsyncadd [#allocation12], 0
          %s377 = sshll.u32 %s10, 4
          %s378 = int_to_ptr.hbm [resolvable:$true] %s377
          %s379 = sshll.u32 [#allocation11], 4
          %s380 = int_to_ptr.vmem [resolvable:$true] %s379
          %385 = dma.hbm_to_vmem [thread:$0]  %s378, 2048, %s380, [#allocation12], 64, 64, 4
        $region52: #{tpu_custom_call.1} parent=11 // pred_fallthru
          _
      $region12: #{tpu_custom_call.1} parent=5 // pred_fallthru
        _
      %p386 = scmp.lt.s32.totalorder %s26, 2
      // Predicated region
      $region53: #{tpu_custom_call.1} parent=5 // pred_check
        %p387 = pneg %p386
      $region54: #{tpu_custom_call.1} parent=5 // pred_check_branch
        %389 = sbr.rel (%p387) target = $region56
      $region55: #{tpu_custom_call.1} parent=5 // pred_region
        // Predicated region
        $region57: #{tpu_custom_call.1} parent=55 // pred_check
          %p390 = pneg %p46
        $region58: #{tpu_custom_call.1} parent=55 // pred_check_branch
          %392 = sbr.rel (%p390) target = $region60
        $region59: #{tpu_custom_call.1} parent=55 // pred_region
          %s393 = sand.u32 %s36, 1
          %s394 = scalar_lea.sflag [#allocation3], %s393
          %s395 = sand.u32 %s36, 1
          %s396 = smul.addr %s395, 16
          %s397 = scalar_lea.vmem [#allocation2], %s396
          %399 = vsyncadd %s394, 0
          %s400 = smul.addr %s26, 2
          %s401 = smul.addr %s400, 8
          %s402 = scalar_lea.hbm %s0, %s401
          %s403 = sshll.u32 %s402, 4
          %s404 = int_to_ptr.hbm [resolvable:$true] %s403
          %s405 = sshll.u32 %s397, 4
          %s406 = int_to_ptr.vmem [resolvable:$true] %s405
          %411 = dma.hbm_to_vmem [thread:$0]  %s404, 256, %s406, %s394, 128, 128, 8
        $region60: #{tpu_custom_call.1} parent=55 // pred_fallthru
          _
      $region56: #{tpu_custom_call.1} parent=5 // pred_fallthru
        _
      %p412 = scmp.le.s32.totalorder 1, %s26
      %p413 = scmp.lt.s32.totalorder %s26, 3
      %p414 = pnand %p412, %p413
      %p415 = pneg %p414
      // Predicated region
      $region61: #{tpu_custom_call.1} parent=5 // pred_check
        _
      $region62: #{tpu_custom_call.1} parent=5 // pred_check_branch
        %417 = sbr.rel (%p414) target = $region64
      $region63: #{tpu_custom_call.1} parent=5 // pred_region
        %s418 = ssub.s32 %s26, 1
        %s419 = sand.u32 %s39, 1
        %s420 = scalar_lea.sflag [#allocation3], %s419
        %s421 = sand.u32 %s39, 1
        %s422 = smul.addr %s421, 16
        %s423 = scalar_lea.vmem [#allocation2], %s422
        // Predicated region
        $region65: #{tpu_custom_call.1} parent=63 // pred_check
          %p424 = pneg %p52
        $region66: #{tpu_custom_call.1} parent=63 // pred_check_branch
          %426 = sbr.rel (%p424) target = $region68
        $region67: #{tpu_custom_call.1} parent=63 // pred_region
          %428 = dma.done %s420, 256
        $region68: #{tpu_custom_call.1} parent=63 // pred_fallthru
          _
        // Predicated region
        $region69: #{tpu_custom_call.1} parent=63 // pred_check
          %p429 = pneg %p73
        $region70: #{tpu_custom_call.1} parent=63 // pred_check_branch
          %431 = sbr.rel (%p429) target = $region72
        $region71: #{tpu_custom_call.1} parent=63 // pred_region
          %433 = dma.done [#allocation6], 16
        $region72: #{tpu_custom_call.1} parent=63 // pred_fallthru
          _
        // Predicated region
        $region73: #{tpu_custom_call.1} parent=63 // pred_check
          %p434 = pneg %p199
        $region74: #{tpu_custom_call.1} parent=63 // pred_check_branch
          %436 = sbr.rel (%p434) target = $region76
        $region75: #{tpu_custom_call.1} parent=63 // pred_region
          %438 = dma.done [#allocation6], 3072
        $region76: #{tpu_custom_call.1} parent=63 // pred_fallthru
          _
        // Predicated region
        $region77: #{tpu_custom_call.1} parent=63 // pred_check
          %p439 = pneg %p220
        $region78: #{tpu_custom_call.1} parent=63 // pred_check_branch
          %441 = sbr.rel (%p439) target = $region80
        $region79: #{tpu_custom_call.1} parent=63 // pred_region
          %443 = dma.done [#allocation9], 3072
        $region80: #{tpu_custom_call.1} parent=63 // pred_fallthru
          _
        // Predicated region
        $region81: #{tpu_custom_call.1} parent=63 // pred_check
          %p444 = pneg %p241
        $region82: #{tpu_custom_call.1} parent=63 // pred_check_branch
          %446 = sbr.rel (%p444) target = $region84
        $region83: #{tpu_custom_call.1} parent=63 // pred_region
          %448 = dma.done [#allocation9], 2048
        $region84: #{tpu_custom_call.1} parent=63 // pred_fallthru
          _
        // Predicated region
        $region85: #{tpu_custom_call.1} parent=63 // pred_check
          %p449 = pneg %p262
        $region86: #{tpu_custom_call.1} parent=63 // pred_check_branch
          %451 = sbr.rel (%p449) target = $region88
        $region87: #{tpu_custom_call.1} parent=63 // pred_region
          %453 = dma.done [#allocation12], 2048
        $region88: #{tpu_custom_call.1} parent=63 // pred_fallthru
          _
        %s454 = sand.u32 %s39, 1
        %s455 = scalar_lea.sflag [#allocation3], %s454
        %s456 = sand.u32 %s39, 1
        %s457 = smul.addr %s456, 16
        %s458 = scalar_lea.vmem [#allocation2], %s457
        %p459 = pneg %p52
        %p460 = pneg %p49
        %p461 = pneg %p73
        %p462 = pneg %p70
        %p463 = pneg %p94
        %p464 = pneg %p91
        %p465 = pneg %p115
        %p466 = pneg %p112
        %p467 = pneg %p136
        %p468 = pneg %p133
        %p469 = pneg %p157
        %p470 = pneg %p154
        %p471 = pneg %p178
        %p472 = pneg %p175
        %p473 = pneg %p199
        %p474 = pneg %p196
        %p475 = pneg %p220
        %p476 = pneg %p217
        %p477 = pneg %p241
        %p478 = pneg %p238
        %p479 = pneg %p262
        %p480 = pneg %p259
        %p481 = pneg %p288
        %p482 = pneg %p285
        %s483 = sand.u32 %s275, 1
        %s484 = scalar_lea.sflag [#allocation4], %s483
        %s485 = sand.u32 %s275, 1
        %s486 = smul.addr %s485, 32
        %s487 = scalar_lea.vmem [#allocation13], %s486
        %v488 = vld [vmem:[%s423] sm:$0xff]
        %v489 = vld [vmem:[%s423 + $0x8] sm:$0xff]
        %v490 = vlaneseq
        %v491 = vshrl.u32 %v490, 7
        %v492 = vadd.s32 %v491, 8
        %vm493 = vcmp.lt.s32.totalorder %v491, 0
        %v494 = vsub.s32 0, %v491
        %v495 = vsel %vm493, %v494, %v491
        %v496 = vshrl.u32 %v495, 4
        %v497 = vand.u32 %v495, 15
        %v498 = vsub.s32 0, %v497
        %v499 = vsel %vm493, %v498, %v497
        %vm500 = vcmp.lt.s32.totalorder %v492, 0
        %v501 = vsub.s32 0, %v492
        %v502 = vsel %vm500, %v501, %v492
        %v503 = vshrl.u32 %v502, 4
        %v504 = vand.u32 %v502, 15
        %v505 = vsub.s32 0, %v504
        %v506 = vsel %vm500, %v505, %v504
        %vm507 = vcmp.ne.s32.totalorder %v499, 0
        %vm508 = vcmp.ne.s32.totalorder %v506, 0
        %vm509 = vcmp.lt.s32.totalorder %v499, 0
        %vm510 = vcmp.lt.s32.totalorder %v506, 0
        %vm511 = vmand %vm509, %vm507
        %vm512 = vmand %vm510, %vm508
        %v513 = vadd.s32 %v499, 16
        %v514 = vadd.s32 %v506, 16
        %v515 = vsel %vm511, %v513, %v499
        %v516 = vsel %vm512, %v514, %v506
        %vm517 = vcmp.ne.s32.totalorder %v515, 0
        %vm518 = vcmp.ne.s32.totalorder %v516, 0
        %vm519 = vcmp.ne.s32.totalorder %v515, 15
        %vm520 = vcmp.ne.s32.totalorder %v516, 15
        %v521 = vld [vmem:[#allocation5] sm:$0x1]
        %v522 = vld [vmem:[%s2] sm:$0x1]
        %523 = vadd.xlane.f32.xlu0 %v488
        %v524 = vpop.xlane.xlu0 %523
        %525 = vadd.xlane.f32.xlu0 %v489
        %v526 = vpop.xlane.xlu0 %525
        %v527 = vmul.f32 %v488, %v488
        %v528 = vmul.f32 %v489, %v489
        %529 = vadd.xlane.f32.xlu0 %v527
        %v530 = vpop.xlane.xlu0 %529
        %531 = vadd.xlane.f32.xlu0 %v528
        %v532 = vpop.xlane.xlu0 %531
        %v533 = vmul.f32 %v524, 0.03125
        %v534 = vmul.f32 %v526, 0.03125
        %v535 = vmul.f32 %v530, 0.03125
        %v536 = vmul.f32 %v532, 0.03125
        %v537 = vmul.f32 %v533, %v533
        %v538 = vmul.f32 %v534, %v534
        %v539 = vsub.f32 %v535, %v537
        %v540 = vsub.f32 %v536, %v538
        %v541 = vsub.f32 %v488, %v533
        %v542 = vsub.f32 %v489, %v534
        %v543 = vadd.f32 %v539, 1e-05
        %v544 = vadd.f32 %v540, 1e-05
        %v545 = vrsqrt.pop %v543
        %v546 = vmul.f32 %v545, %v543
        %v547 = vmul.f32 %v546, %v545
        %v548 = vmul.f32 0.5, %v547
        %v549 = vsub.f32 1.5, %v548
        %v550 = vmul.f32 %v545, %v549
        %vm551 = vweird.f32 %v543
        %vm552 = vweird.f32 %v545
        %vm553 = vmor %vm551, %vm552
        %v554 = vsel %vm553, %v545, %v550
        %v555 = vrsqrt.pop %v544
        %v556 = vmul.f32 %v555, %v544
        %v557 = vmul.f32 %v556, %v555
        %v558 = vmul.f32 0.5, %v557
        %v559 = vsub.f32 1.5, %v558
        %v560 = vmul.f32 %v555, %v559
        %vm561 = vweird.f32 %v544
        %vm562 = vweird.f32 %v555
        %vm563 = vmor %vm561, %vm562
        %v564 = vsel %vm563, %v555, %v560
        %v565 = vmul.f32 %v541, %v554
        %v566 = vmul.f32 %v542, %v564
        %v568 = vperm.slane %v521, 0
        %v570 = vmul.f32 %v565, %v568
        %v571 = vmul.f32 %v566, %v568
        %v573 = vperm.slane %v522, 0
        %v575 = vadd.f32 %v570, %v573
        %v576 = vadd.f32 %v571, %v573
        %v577 = vmul.f32 %v575, 0.01
        %v578 = vmul.f32 %v576, 0.01
        %v579 = vmax.f32 %v575, %v577
        %v580 = vmax.f32 %v576, %v578
        %v581 = vrot.slane %v579, 7
        %v582 = vrot.slane %v580, 7
        %vm583 = vcmp.lt.s32.totalorder %v491, 1
        %v584 = vsel %vm583, %v581, %v582
        %v585 = vsel %vm583, %v582, %v581
        %v586 = vsel %vm517, 1, 0
        %v587 = vsel %vm518, 1, 0
        %vm588 = vcmp.eq.s32.totalorder %v586, 1
        %vm589 = vcmp.eq.s32.totalorder %v587, 1
        %v590 = vsel %vm588, %v585, 0.0
        %v591 = vsel %vm589, %v584, 0.0
        %v592 = vrot.slane %v579, 1
        %v593 = vrot.slane %v580, 1
        %vm594 = vcmp.lt.s32.totalorder %v491, 7
        %v595 = vsel %vm594, %v592, %v593
        %v596 = vsel %vm594, %v593, %v592
        %v597 = vsel %vm519, 1, 0
        %v598 = vsel %vm520, 1, 0
        %vm599 = vcmp.eq.s32.totalorder %v597, 1
        %vm600 = vcmp.eq.s32.totalorder %v598, 1
        %v601 = vsel %vm599, %v595, 0.0
        %v602 = vsel %vm600, %v596, 0.0
        %v603 = vpack.c.bf16 %v590, %v590
        %v604 = vpack.c.bf16 %v591, %v591
        %v605 = vpack.c.bf16 %v579, %v579
        %v606 = vpack.c.bf16 %v580, %v580
        %v607 = vpack.c.bf16 %v601, %v601
        %v608 = vpack.c.bf16 %v602, %v602
        %v611 = vunpack.c.l.b16 %v603
        %v612 = vunpack.c.l.b16 %v604
        %v613 = vpack.c.b16 %v612, %v611
        %v617 = vunpack.c.l.b16 %v605
        %v618 = vunpack.c.l.b16 %v606
        %v619 = vpack.c.b16 %v618, %v617
        %v623 = vunpack.c.l.b16 %v607
        %v624 = vunpack.c.l.b16 %v608
        %v625 = vpack.c.b16 %v624, %v623
        %v627 = vld [vmem:[#allocation7] sm:$0xf]
        %v628 = vld [vmem:[#allocation7 + $0x4] sm:$0xf]
        %v629 = vld [vmem:[#allocation7 + $0x8] sm:$0xf]
        %v630 = vld [vmem:[#allocation7 + $0xc] sm:$0xf]
        %v631 = vld [vmem:[#allocation7 + $0x10] sm:$0xf]
        %v632 = vld [vmem:[#allocation7 + $0x14] sm:$0xf]
        %v633 = vld [vmem:[#allocation7 + $0x18] sm:$0xf]
        %v634 = vld [vmem:[#allocation7 + $0x1c] sm:$0xf]
        %v635 = vld [vmem:[#allocation7 + $0x20] sm:$0xf]
        %v636 = vld [vmem:[#allocation7 + $0x24] sm:$0xf]
        %v637 = vld [vmem:[#allocation7 + $0x28] sm:$0xf]
        %v638 = vld [vmem:[#allocation7 + $0x2c] sm:$0xf]
        %v639 = vld [vmem:[#allocation7 + $0x30] sm:$0xf]
        %v640 = vld [vmem:[#allocation7 + $0x34] sm:$0xf]
        %v641 = vld [vmem:[#allocation7 + $0x38] sm:$0xf]
        %v642 = vld [vmem:[#allocation7 + $0x3c] sm:$0xf]
        %v643 = vld [vmem:[#allocation7 + $0x40] sm:$0xf]
        %v644 = vld [vmem:[#allocation7 + $0x44] sm:$0xf]
        %v645 = vld [vmem:[#allocation7 + $0x48] sm:$0xf]
        %v646 = vld [vmem:[#allocation7 + $0x4c] sm:$0xf]
        %v647 = vld [vmem:[#allocation7 + $0x50] sm:$0xf]
        %v648 = vld [vmem:[#allocation7 + $0x54] sm:$0xf]
        %v649 = vld [vmem:[#allocation7 + $0x58] sm:$0xf]
        %v650 = vld [vmem:[#allocation7 + $0x5c] sm:$0xf]
        %v651 = vld [vmem:[#allocation7 + $0x60] sm:$0xf]
        %v652 = vld [vmem:[#allocation7 + $0x64] sm:$0xf]
        %v653 = vld [vmem:[#allocation7 + $0x68] sm:$0xf]
        %v654 = vld [vmem:[#allocation7 + $0x6c] sm:$0xf]
        %v655 = vld [vmem:[#allocation7 + $0x70] sm:$0xf]
        %v656 = vld [vmem:[#allocation7 + $0x74] sm:$0xf]
        %v657 = vld [vmem:[#allocation7 + $0x78] sm:$0xf]
        %v658 = vld [vmem:[#allocation7 + $0x7c] sm:$0xf]
        %v659 = vld [vmem:[#allocation7 + $0x80] sm:$0xf]
        %v660 = vld [vmem:[#allocation7 + $0x84] sm:$0xf]
        %v661 = vld [vmem:[#allocation7 + $0x88] sm:$0xf]
        %v662 = vld [vmem:[#allocation7 + $0x8c] sm:$0xf]
        %v663 = vld [vmem:[#allocation7 + $0x90] sm:$0xf]
        %v664 = vld [vmem:[#allocation7 + $0x94] sm:$0xf]
        %v665 = vld [vmem:[#allocation7 + $0x98] sm:$0xf]
        %v666 = vld [vmem:[#allocation7 + $0x9c] sm:$0xf]
        %v667 = vld [vmem:[#allocation7 + $0xa0] sm:$0xf]
        %v668 = vld [vmem:[#allocation7 + $0xa4] sm:$0xf]
        %v669 = vld [vmem:[#allocation7 + $0xa8] sm:$0xf]
        %v670 = vld [vmem:[#allocation7 + $0xac] sm:$0xf]
        %v671 = vld [vmem:[#allocation7 + $0xb0] sm:$0xf]
        %v672 = vld [vmem:[#allocation7 + $0xb4] sm:$0xf]
        %v673 = vld [vmem:[#allocation7 + $0xb8] sm:$0xf]
        %v674 = vld [vmem:[#allocation7 + $0xbc] sm:$0xf]
        %v723 = vunpack.c.l.b16 %v627
        %v724 = vunpack.c.l.b16 %v628
        %v725 = vunpack.c.l.b16 %v629
        %v726 = vunpack.c.l.b16 %v630
        %v727 = vunpack.c.l.b16 %v631
        %v728 = vunpack.c.l.b16 %v632
        %v729 = vunpack.c.l.b16 %v633
        %v730 = vunpack.c.l.b16 %v634
        %v731 = vunpack.c.l.b16 %v635
        %v732 = vunpack.c.l.b16 %v636
        %v733 = vunpack.c.l.b16 %v637
        %v734 = vunpack.c.l.b16 %v638
        %v735 = vunpack.c.l.b16 %v639
        %v736 = vunpack.c.l.b16 %v640
        %v737 = vunpack.c.l.b16 %v641
        %v738 = vunpack.c.l.b16 %v642
        %v739 = vunpack.c.l.b16 %v643
        %v740 = vunpack.c.l.b16 %v644
        %v741 = vunpack.c.l.b16 %v645
        %v742 = vunpack.c.l.b16 %v646
        %v743 = vunpack.c.l.b16 %v647
        %v744 = vunpack.c.l.b16 %v648
        %v745 = vunpack.c.l.b16 %v649
        %v746 = vunpack.c.l.b16 %v650
        %v747 = vunpack.c.l.b16 %v651
        %v748 = vunpack.c.l.b16 %v652
        %v749 = vunpack.c.l.b16 %v653
        %v750 = vunpack.c.l.b16 %v654
        %v751 = vunpack.c.l.b16 %v655
        %v752 = vunpack.c.l.b16 %v656
        %v753 = vunpack.c.l.b16 %v657
        %v754 = vunpack.c.l.b16 %v658
        %v755 = vunpack.c.l.b16 %v659
        %v756 = vunpack.c.l.b16 %v660
        %v757 = vunpack.c.l.b16 %v661
        %v758 = vunpack.c.l.b16 %v662
        %v759 = vunpack.c.l.b16 %v663
        %v760 = vunpack.c.l.b16 %v664
        %v761 = vunpack.c.l.b16 %v665
        %v762 = vunpack.c.l.b16 %v666
        %v763 = vunpack.c.l.b16 %v667
        %v764 = vunpack.c.l.b16 %v668
        %v765 = vunpack.c.l.b16 %v669
        %v766 = vunpack.c.l.b16 %v670
        %v767 = vunpack.c.l.b16 %v671
        %v768 = vunpack.c.l.b16 %v672
        %v769 = vunpack.c.l.b16 %v673
        %v770 = vunpack.c.l.b16 %v674
        %v771 = vpack.c.b16 %v724, %v723
        %v772 = vpack.c.b16 %v726, %v725
        %v773 = vpack.c.b16 %v728, %v727
        %v774 = vpack.c.b16 %v730, %v729
        %v775 = vpack.c.b16 %v732, %v731
        %v776 = vpack.c.b16 %v734, %v733
        %v777 = vpack.c.b16 %v736, %v735
        %v778 = vpack.c.b16 %v738, %v737
        %v779 = vpack.c.b16 %v740, %v739
        %v780 = vpack.c.b16 %v742, %v741
        %v781 = vpack.c.b16 %v744, %v743
        %v782 = vpack.c.b16 %v746, %v745
        %v783 = vpack.c.b16 %v748, %v747
        %v784 = vpack.c.b16 %v750, %v749
        %v785 = vpack.c.b16 %v752, %v751
        %v786 = vpack.c.b16 %v754, %v753
        %v787 = vpack.c.b16 %v756, %v755
        %v788 = vpack.c.b16 %v758, %v757
        %v789 = vpack.c.b16 %v760, %v759
        %v790 = vpack.c.b16 %v762, %v761
        %v791 = vpack.c.b16 %v764, %v763
        %v792 = vpack.c.b16 %v766, %v765
        %v793 = vpack.c.b16 %v768, %v767
        %v794 = vpack.c.b16 %v770, %v769
        %819 = vmatpush.bf16.msra.mxu0 %v778
        %820 = vmatpush.bf16.msra.mxu0 %v777
        %821 = vmatpush.bf16.msra.mxu0 %v776
        %822 = vmatpush.bf16.msra.mxu0 %v775
        %823 = vmatpush.bf16.msra.mxu0 %v774
        %824 = vmatpush.bf16.msra.mxu0 %v773
        %825 = vmatpush.bf16.msra.mxu0 %v772
        %826 = vmatpush.bf16.msra.mxu0 %v771
        %827 = vmatmul.bf16.gmra.mxu0 %v613
        %v828 = vpop.f32.mrf.mxu0
        %v829 = vadd.f32 0.0, %v828
        %v830 = vpop.f32.mrf.mxu0
        %v831 = vadd.f32 0.0, %v830
        %832 = vdwg.mxu0
        %833 = vmatpush.bf16.msra.mxu0 %v786
        %834 = vmatpush.bf16.msra.mxu0 %v785
        %835 = vmatpush.bf16.msra.mxu0 %v784
        %836 = vmatpush.bf16.msra.mxu0 %v783
        %837 = vmatpush.bf16.msra.mxu0 %v782
        %838 = vmatpush.bf16.msra.mxu0 %v781
        %839 = vmatpush.bf16.msra.mxu0 %v780
        %840 = vmatpush.bf16.msra.mxu0 %v779
        %841 = vmatmul.bf16.gmra.mxu0 %v619
        %v842 = vpop.f32.mrf.mxu0
        %v843 = vadd.f32 %v829, %v842
        %v844 = vpop.f32.mrf.mxu0
        %v845 = vadd.f32 %v831, %v844
        %846 = vdwg.mxu0
        %847 = vmatpush.bf16.msra.mxu0 %v794
        %848 = vmatpush.bf16.msra.mxu0 %v793
        %849 = vmatpush.bf16.msra.mxu0 %v792
        %850 = vmatpush.bf16.msra.mxu0 %v791
        %851 = vmatpush.bf16.msra.mxu0 %v790
        %852 = vmatpush.bf16.msra.mxu0 %v789
        %853 = vmatpush.bf16.msra.mxu0 %v788
        %854 = vmatpush.bf16.msra.mxu0 %v787
        %855 = vmatmul.bf16.gmra.mxu0 %v625
        %v856 = vpop.f32.mrf.mxu0
        %v857 = vadd.f32 %v843, %v856
        %v858 = vpop.f32.mrf.mxu0
        %v859 = vadd.f32 %v845, %v858
        %860 = vdwg.mxu0
        %v861 = vadd.f32 %v488, %v857
        %v862 = vadd.f32 %v489, %v859
        %v863 = vld [vmem:[%s3] sm:$0x1]
        %v864 = vld [vmem:[%s4] sm:$0x1]
        %865 = vadd.xlane.f32.xlu0 %v861
        %v866 = vpop.xlane.xlu0 %865
        %867 = vadd.xlane.f32.xlu0 %v862
        %v868 = vpop.xlane.xlu0 %867
        %v869 = vmul.f32 %v861, %v861
        %v870 = vmul.f32 %v862, %v862
        %871 = vadd.xlane.f32.xlu0 %v869
        %v872 = vpop.xlane.xlu0 %871
        %873 = vadd.xlane.f32.xlu0 %v870
        %v874 = vpop.xlane.xlu0 %873
        %v875 = vmul.f32 %v866, 0.03125
        %v876 = vmul.f32 %v868, 0.03125
        %v877 = vmul.f32 %v872, 0.03125
        %v878 = vmul.f32 %v874, 0.03125
        %v879 = vmul.f32 %v875, %v875
        %v880 = vmul.f32 %v876, %v876
        %v881 = vsub.f32 %v877, %v879
        %v882 = vsub.f32 %v878, %v880
        %v883 = vsub.f32 %v861, %v875
        %v884 = vsub.f32 %v862, %v876
        %v885 = vadd.f32 %v881, 1e-05
        %v886 = vadd.f32 %v882, 1e-05
        %v887 = vrsqrt.pop %v885
        %v888 = vmul.f32 %v887, %v885
        %v889 = vmul.f32 %v888, %v887
        %v890 = vmul.f32 0.5, %v889
        %v891 = vsub.f32 1.5, %v890
        %v892 = vmul.f32 %v887, %v891
        %vm893 = vweird.f32 %v885
        %vm894 = vweird.f32 %v887
        %vm895 = vmor %vm893, %vm894
        %v896 = vsel %vm895, %v887, %v892
        %v897 = vrsqrt.pop %v886
        %v898 = vmul.f32 %v897, %v886
        %v899 = vmul.f32 %v898, %v897
        %v900 = vmul.f32 0.5, %v899
        %v901 = vsub.f32 1.5, %v900
        %v902 = vmul.f32 %v897, %v901
        %vm903 = vweird.f32 %v886
        %vm904 = vweird.f32 %v897
        %vm905 = vmor %vm903, %vm904
        %v906 = vsel %vm905, %v897, %v902
        %v907 = vmul.f32 %v883, %v896
        %v908 = vmul.f32 %v884, %v906
        %v910 = vperm.slane %v863, 0
        %v912 = vmul.f32 %v907, %v910
        %v913 = vmul.f32 %v908, %v910
        %v915 = vperm.slane %v864, 0
        %v917 = vadd.f32 %v912, %v915
        %v918 = vadd.f32 %v913, %v915
        %v919 = vmul.f32 %v917, 0.01
        %v920 = vmul.f32 %v918, 0.01
        %v921 = vmax.f32 %v917, %v919
        %v922 = vmax.f32 %v918, %v920
        %v923 = vrot.slane %v921, 7
        %v924 = vrot.slane %v922, 7
        %v925 = vsel %vm583, %v923, %v924
        %v926 = vsel %vm583, %v924, %v923
        %v927 = vsel %vm588, %v926, 0.0
        %v928 = vsel %vm589, %v925, 0.0
        %v929 = vrot.slane %v921, 1
        %v930 = vrot.slane %v922, 1
        %v931 = vsel %vm594, %v929, %v930
        %v932 = vsel %vm594, %v930, %v929
        %v933 = vsel %vm599, %v931, 0.0
        %v934 = vsel %vm600, %v932, 0.0
        %v935 = vpack.c.bf16 %v927, %v927
        %v936 = vpack.c.bf16 %v928, %v928
        %v937 = vpack.c.bf16 %v921, %v921
        %v938 = vpack.c.bf16 %v922, %v922
        %v939 = vpack.c.bf16 %v933, %v933
        %v940 = vpack.c.bf16 %v934, %v934
        %v943 = vunpack.c.l.b16 %v935
        %v944 = vunpack.c.l.b16 %v936
        %v945 = vpack.c.b16 %v944, %v943
        %v949 = vunpack.c.l.b16 %v937
        %v950 = vunpack.c.l.b16 %v938
        %v951 = vpack.c.b16 %v950, %v949
        %v955 = vunpack.c.l.b16 %v939
        %v956 = vunpack.c.l.b16 %v940
        %v957 = vpack.c.b16 %v956, %v955
        %v959 = vld [vmem:[#allocation8] sm:$0xf]
        %v960 = vld [vmem:[#allocation8 + $0x4] sm:$0xf]
        %v961 = vld [vmem:[#allocation8 + $0x8] sm:$0xf]
        %v962 = vld [vmem:[#allocation8 + $0xc] sm:$0xf]
        %v963 = vld [vmem:[#allocation8 + $0x10] sm:$0xf]
        %v964 = vld [vmem:[#allocation8 + $0x14] sm:$0xf]
        %v965 = vld [vmem:[#allocation8 + $0x18] sm:$0xf]
        %v966 = vld [vmem:[#allocation8 + $0x1c] sm:$0xf]
        %v967 = vld [vmem:[#allocation8 + $0x20] sm:$0xf]
        %v968 = vld [vmem:[#allocation8 + $0x24] sm:$0xf]
        %v969 = vld [vmem:[#allocation8 + $0x28] sm:$0xf]
        %v970 = vld [vmem:[#allocation8 + $0x2c] sm:$0xf]
        %v971 = vld [vmem:[#allocation8 + $0x30] sm:$0xf]
        %v972 = vld [vmem:[#allocation8 + $0x34] sm:$0xf]
        %v973 = vld [vmem:[#allocation8 + $0x38] sm:$0xf]
        %v974 = vld [vmem:[#allocation8 + $0x3c] sm:$0xf]
        %v975 = vld [vmem:[#allocation8 + $0x40] sm:$0xf]
        %v976 = vld [vmem:[#allocation8 + $0x44] sm:$0xf]
        %v977 = vld [vmem:[#allocation8 + $0x48] sm:$0xf]
        %v978 = vld [vmem:[#allocation8 + $0x4c] sm:$0xf]
        %v979 = vld [vmem:[#allocation8 + $0x50] sm:$0xf]
        %v980 = vld [vmem:[#allocation8 + $0x54] sm:$0xf]
        %v981 = vld [vmem:[#allocation8 + $0x58] sm:$0xf]
        %v982 = vld [vmem:[#allocation8 + $0x5c] sm:$0xf]
        %v983 = vld [vmem:[#allocation8 + $0x60] sm:$0xf]
        %v984 = vld [vmem:[#allocation8 + $0x64] sm:$0xf]
        %v985 = vld [vmem:[#allocation8 + $0x68] sm:$0xf]
        %v986 = vld [vmem:[#allocation8 + $0x6c] sm:$0xf]
        %v987 = vld [vmem:[#allocation8 + $0x70] sm:$0xf]
        %v988 = vld [vmem:[#allocation8 + $0x74] sm:$0xf]
        %v989 = vld [vmem:[#allocation8 + $0x78] sm:$0xf]
        %v990 = vld [vmem:[#allocation8 + $0x7c] sm:$0xf]
        %v991 = vld [vmem:[#allocation8 + $0x80] sm:$0xf]
        %v992 = vld [vmem:[#allocation8 + $0x84] sm:$0xf]
        %v993 = vld [vmem:[#allocation8 + $0x88] sm:$0xf]
        %v994 = vld [vmem:[#allocation8 + $0x8c] sm:$0xf]
        %v995 = vld [vmem:[#allocation8 + $0x90] sm:$0xf]
        %v996 = vld [vmem:[#allocation8 + $0x94] sm:$0xf]
        %v997 = vld [vmem:[#allocation8 + $0x98] sm:$0xf]
        %v998 = vld [vmem:[#allocation8 + $0x9c] sm:$0xf]
        %v999 = vld [vmem:[#allocation8 + $0xa0] sm:$0xf]
        %v1000 = vld [vmem:[#allocation8 + $0xa4] sm:$0xf]
        %v1001 = vld [vmem:[#allocation8 + $0xa8] sm:$0xf]
        %v1002 = vld [vmem:[#allocation8 + $0xac] sm:$0xf]
        %v1003 = vld [vmem:[#allocation8 + $0xb0] sm:$0xf]
        %v1004 = vld [vmem:[#allocation8 + $0xb4] sm:$0xf]
        %v1005 = vld [vmem:[#allocation8 + $0xb8] sm:$0xf]
        %v1006 = vld [vmem:[#allocation8 + $0xbc] sm:$0xf]
        %v1055 = vunpack.c.l.b16 %v959
        %v1056 = vunpack.c.l.b16 %v960
        %v1057 = vunpack.c.l.b16 %v961
        %v1058 = vunpack.c.l.b16 %v962
        %v1059 = vunpack.c.l.b16 %v963
        %v1060 = vunpack.c.l.b16 %v964
        %v1061 = vunpack.c.l.b16 %v965
        %v1062 = vunpack.c.l.b16 %v966
        %v1063 = vunpack.c.l.b16 %v967
        %v1064 = vunpack.c.l.b16 %v968
        %v1065 = vunpack.c.l.b16 %v969
        %v1066 = vunpack.c.l.b16 %v970
        %v1067 = vunpack.c.l.b16 %v971
        %v1068 = vunpack.c.l.b16 %v972
        %v1069 = vunpack.c.l.b16 %v973
        %v1070 = vunpack.c.l.b16 %v974
        %v1071 = vunpack.c.l.b16 %v975
        %v1072 = vunpack.c.l.b16 %v976
        %v1073 = vunpack.c.l.b16 %v977
        %v1074 = vunpack.c.l.b16 %v978
        %v1075 = vunpack.c.l.b16 %v979
        %v1076 = vunpack.c.l.b16 %v980
        %v1077 = vunpack.c.l.b16 %v981
        %v1078 = vunpack.c.l.b16 %v982
        %v1079 = vunpack.c.l.b16 %v983
        %v1080 = vunpack.c.l.b16 %v984
        %v1081 = vunpack.c.l.b16 %v985
        %v1082 = vunpack.c.l.b16 %v986
        %v1083 = vunpack.c.l.b16 %v987
        %v1084 = vunpack.c.l.b16 %v988
        %v1085 = vunpack.c.l.b16 %v989
        %v1086 = vunpack.c.l.b16 %v990
        %v1087 = vunpack.c.l.b16 %v991
        %v1088 = vunpack.c.l.b16 %v992
        %v1089 = vunpack.c.l.b16 %v993
        %v1090 = vunpack.c.l.b16 %v994
        %v1091 = vunpack.c.l.b16 %v995
        %v1092 = vunpack.c.l.b16 %v996
        %v1093 = vunpack.c.l.b16 %v997
        %v1094 = vunpack.c.l.b16 %v998
        %v1095 = vunpack.c.l.b16 %v999
        %v1096 = vunpack.c.l.b16 %v1000
        %v1097 = vunpack.c.l.b16 %v1001
        %v1098 = vunpack.c.l.b16 %v1002
        %v1099 = vunpack.c.l.b16 %v1003
        %v1100 = vunpack.c.l.b16 %v1004
        %v1101 = vunpack.c.l.b16 %v1005
        %v1102 = vunpack.c.l.b16 %v1006
        %v1103 = vpack.c.b16 %v1056, %v1055
        %v1104 = vpack.c.b16 %v1058, %v1057
        %v1105 = vpack.c.b16 %v1060, %v1059
        %v1106 = vpack.c.b16 %v1062, %v1061
        %v1107 = vpack.c.b16 %v1064, %v1063
        %v1108 = vpack.c.b16 %v1066, %v1065
        %v1109 = vpack.c.b16 %v1068, %v1067
        %v1110 = vpack.c.b16 %v1070, %v1069
        %v1111 = vpack.c.b16 %v1072, %v1071
        %v1112 = vpack.c.b16 %v1074, %v1073
        %v1113 = vpack.c.b16 %v1076, %v1075
        %v1114 = vpack.c.b16 %v1078, %v1077
        %v1115 = vpack.c.b16 %v1080, %v1079
        %v1116 = vpack.c.b16 %v1082, %v1081
        %v1117 = vpack.c.b16 %v1084, %v1083
        %v1118 = vpack.c.b16 %v1086, %v1085
        %v1119 = vpack.c.b16 %v1088, %v1087
        %v1120 = vpack.c.b16 %v1090, %v1089
        %v1121 = vpack.c.b16 %v1092, %v1091
        %v1122 = vpack.c.b16 %v1094, %v1093
        %v1123 = vpack.c.b16 %v1096, %v1095
        %v1124 = vpack.c.b16 %v1098, %v1097
        %v1125 = vpack.c.b16 %v1100, %v1099
        %v1126 = vpack.c.b16 %v1102, %v1101
        %1151 = vmatpush.bf16.msra.mxu0 %v1110
        %1152 = vmatpush.bf16.msra.mxu0 %v1109
        %1153 = vmatpush.bf16.msra.mxu0 %v1108
        %1154 = vmatpush.bf16.msra.mxu0 %v1107
        %1155 = vmatpush.bf16.msra.mxu0 %v1106
        %1156 = vmatpush.bf16.msra.mxu0 %v1105
        %1157 = vmatpush.bf16.msra.mxu0 %v1104
        %1158 = vmatpush.bf16.msra.mxu0 %v1103
        %1159 = vmatmul.bf16.gmra.mxu0 %v945
        %v1160 = vpop.f32.mrf.mxu0
        %v1161 = vadd.f32 0.0, %v1160
        %v1162 = vpop.f32.mrf.mxu0
        %v1163 = vadd.f32 0.0, %v1162
        %1164 = vdwg.mxu0
        %1165 = vmatpush.bf16.msra.mxu0 %v1118
        %1166 = vmatpush.bf16.msra.mxu0 %v1117
        %1167 = vmatpush.bf16.msra.mxu0 %v1116
        %1168 = vmatpush.bf16.msra.mxu0 %v1115
        %1169 = vmatpush.bf16.msra.mxu0 %v1114
        %1170 = vmatpush.bf16.msra.mxu0 %v1113
        %1171 = vmatpush.bf16.msra.mxu0 %v1112
        %1172 = vmatpush.bf16.msra.mxu0 %v1111
        %1173 = vmatmul.bf16.gmra.mxu0 %v951
        %v1174 = vpop.f32.mrf.mxu0
        %v1175 = vadd.f32 %v1161, %v1174
        %v1176 = vpop.f32.mrf.mxu0
        %v1177 = vadd.f32 %v1163, %v1176
        %1178 = vdwg.mxu0
        %1179 = vmatpush.bf16.msra.mxu0 %v1126
        %1180 = vmatpush.bf16.msra.mxu0 %v1125
        %1181 = vmatpush.bf16.msra.mxu0 %v1124
        %1182 = vmatpush.bf16.msra.mxu0 %v1123
        %1183 = vmatpush.bf16.msra.mxu0 %v1122
        %1184 = vmatpush.bf16.msra.mxu0 %v1121
        %1185 = vmatpush.bf16.msra.mxu0 %v1120
        %1186 = vmatpush.bf16.msra.mxu0 %v1119
        %1187 = vmatmul.bf16.gmra.mxu0 %v957
        %v1188 = vpop.f32.mrf.mxu0
        %v1189 = vadd.f32 %v1175, %v1188
        %v1190 = vpop.f32.mrf.mxu0
        %v1191 = vadd.f32 %v1177, %v1190
        %1192 = vdwg.mxu0
        %v1193 = vadd.f32 %v861, %v1189
        %v1194 = vadd.f32 %v862, %v1191
        %v1195 = vld [vmem:[%s5] sm:$0x1]
        %v1196 = vld [vmem:[%s6] sm:$0x1]
        %1197 = vadd.xlane.f32.xlu0 %v1193
        %v1198 = vpop.xlane.xlu0 %1197
        %1199 = vadd.xlane.f32.xlu0 %v1194
        %v1200 = vpop.xlane.xlu0 %1199
        %v1201 = vmul.f32 %v1193, %v1193
        %v1202 = vmul.f32 %v1194, %v1194
        %1203 = vadd.xlane.f32.xlu0 %v1201
        %v1204 = vpop.xlane.xlu0 %1203
        %1205 = vadd.xlane.f32.xlu0 %v1202
        %v1206 = vpop.xlane.xlu0 %1205
        %v1207 = vmul.f32 %v1198, 0.03125
        %v1208 = vmul.f32 %v1200, 0.03125
        %v1209 = vmul.f32 %v1204, 0.03125
        %v1210 = vmul.f32 %v1206, 0.03125
        %v1211 = vmul.f32 %v1207, %v1207
        %v1212 = vmul.f32 %v1208, %v1208
        %v1213 = vsub.f32 %v1209, %v1211
        %v1214 = vsub.f32 %v1210, %v1212
        %v1215 = vsub.f32 %v1193, %v1207
        %v1216 = vsub.f32 %v1194, %v1208
        %v1217 = vadd.f32 %v1213, 1e-05
        %v1218 = vadd.f32 %v1214, 1e-05
        %v1219 = vrsqrt.pop %v1217
        %v1220 = vmul.f32 %v1219, %v1217
        %v1221 = vmul.f32 %v1220, %v1219
        %v1222 = vmul.f32 0.5, %v1221
        %v1223 = vsub.f32 1.5, %v1222
        %v1224 = vmul.f32 %v1219, %v1223
        %vm1225 = vweird.f32 %v1217
        %vm1226 = vweird.f32 %v1219
        %vm1227 = vmor %vm1225, %vm1226
        %v1228 = vsel %vm1227, %v1219, %v1224
        %v1229 = vrsqrt.pop %v1218
        %v1230 = vmul.f32 %v1229, %v1218
        %v1231 = vmul.f32 %v1230, %v1229
        %v1232 = vmul.f32 0.5, %v1231
        %v1233 = vsub.f32 1.5, %v1232
        %v1234 = vmul.f32 %v1229, %v1233
        %vm1235 = vweird.f32 %v1218
        %vm1236 = vweird.f32 %v1229
        %vm1237 = vmor %vm1235, %vm1236
        %v1238 = vsel %vm1237, %v1229, %v1234
        %v1239 = vmul.f32 %v1215, %v1228
        %v1240 = vmul.f32 %v1216, %v1238
        %v1242 = vperm.slane %v1195, 0
        %v1244 = vmul.f32 %v1239, %v1242
        %v1245 = vmul.f32 %v1240, %v1242
        %v1247 = vperm.slane %v1196, 0
        %v1249 = vadd.f32 %v1244, %v1247
        %v1250 = vadd.f32 %v1245, %v1247
        %v1251 = vmul.f32 %v1249, 0.01
        %v1252 = vmul.f32 %v1250, 0.01
        %v1253 = vmax.f32 %v1249, %v1251
        %v1254 = vmax.f32 %v1250, %v1252
        %v1255 = vrot.slane %v1253, 7
        %v1256 = vrot.slane %v1254, 7
        %v1257 = vsel %vm583, %v1255, %v1256
        %v1258 = vsel %vm583, %v1256, %v1255
        %v1259 = vsel %vm588, %v1258, 0.0
        %v1260 = vsel %vm589, %v1257, 0.0
        %v1261 = vrot.slane %v1253, 1
        %v1262 = vrot.slane %v1254, 1
        %v1263 = vsel %vm594, %v1261, %v1262
        %v1264 = vsel %vm594, %v1262, %v1261
        %v1265 = vsel %vm599, %v1263, 0.0
        %v1266 = vsel %vm600, %v1264, 0.0
        %v1267 = vpack.c.bf16 %v1259, %v1259
        %v1268 = vpack.c.bf16 %v1260, %v1260
        %v1269 = vpack.c.bf16 %v1253, %v1253
        %v1270 = vpack.c.bf16 %v1254, %v1254
        %v1271 = vpack.c.bf16 %v1265, %v1265
        %v1272 = vpack.c.bf16 %v1266, %v1266
        %v1275 = vunpack.c.l.b16 %v1267
        %v1276 = vunpack.c.l.b16 %v1268
        %v1277 = vpack.c.b16 %v1276, %v1275
        %v1281 = vunpack.c.l.b16 %v1269
        %v1282 = vunpack.c.l.b16 %v1270
        %v1283 = vpack.c.b16 %v1282, %v1281
        %v1285 = vld [vmem:[#allocation10] sm:$0xf]
        %v1286 = vld [vmem:[#allocation10 + $0x4] sm:$0xf]
        %v1287 = vld [vmem:[#allocation10 + $0x8] sm:$0xf]
        %v1288 = vld [vmem:[#allocation10 + $0xc] sm:$0xf]
        %v1289 = vld [vmem:[#allocation10 + $0x10] sm:$0xf]
        %v1290 = vld [vmem:[#allocation10 + $0x14] sm:$0xf]
        %v1291 = vld [vmem:[#allocation10 + $0x18] sm:$0xf]
        %v1292 = vld [vmem:[#allocation10 + $0x1c] sm:$0xf]
        %v1293 = vld [vmem:[#allocation10 + $0x20] sm:$0xf]
        %v1294 = vld [vmem:[#allocation10 + $0x24] sm:$0xf]
        %v1295 = vld [vmem:[#allocation10 + $0x28] sm:$0xf]
        %v1296 = vld [vmem:[#allocation10 + $0x2c] sm:$0xf]
        %v1297 = vld [vmem:[#allocation10 + $0x30] sm:$0xf]
        %v1298 = vld [vmem:[#allocation10 + $0x34] sm:$0xf]
        %v1299 = vld [vmem:[#allocation10 + $0x38] sm:$0xf]
        %v1300 = vld [vmem:[#allocation10 + $0x3c] sm:$0xf]
        %v1301 = vld [vmem:[#allocation10 + $0x40] sm:$0xf]
        %v1302 = vld [vmem:[#allocation10 + $0x44] sm:$0xf]
        %v1303 = vld [vmem:[#allocation10 + $0x48] sm:$0xf]
        %v1304 = vld [vmem:[#allocation10 + $0x4c] sm:$0xf]
        %v1305 = vld [vmem:[#allocation10 + $0x50] sm:$0xf]
        %v1306 = vld [vmem:[#allocation10 + $0x54] sm:$0xf]
        %v1307 = vld [vmem:[#allocation10 + $0x58] sm:$0xf]
        %v1308 = vld [vmem:[#allocation10 + $0x5c] sm:$0xf]
        %v1309 = vld [vmem:[#allocation10 + $0x60] sm:$0xf]
        %v1310 = vld [vmem:[#allocation10 + $0x64] sm:$0xf]
        %v1311 = vld [vmem:[#allocation10 + $0x68] sm:$0xf]
        %v1312 = vld [vmem:[#allocation10 + $0x6c] sm:$0xf]
        %v1313 = vld [vmem:[#allocation10 + $0x70] sm:$0xf]
        %v1314 = vld [vmem:[#allocation10 + $0x74] sm:$0xf]
        %v1315 = vld [vmem:[#allocation10 + $0x78] sm:$0xf]
        %v1316 = vld [vmem:[#allocation10 + $0x7c] sm:$0xf]
        %v1349 = vunpack.c.l.b16 %v1285
        %v1350 = vunpack.c.l.b16 %v1286
        %v1351 = vunpack.c.l.b16 %v1287
        %v1352 = vunpack.c.l.b16 %v1288
        %v1353 = vunpack.c.l.b16 %v1289
        %v1354 = vunpack.c.l.b16 %v1290
        %v1355 = vunpack.c.l.b16 %v1291
        %v1356 = vunpack.c.l.b16 %v1292
        %v1357 = vunpack.c.l.b16 %v1293
        %v1358 = vunpack.c.l.b16 %v1294
        %v1359 = vunpack.c.l.b16 %v1295
        %v1360 = vunpack.c.l.b16 %v1296
        %v1361 = vunpack.c.l.b16 %v1297
        %v1362 = vunpack.c.l.b16 %v1298
        %v1363 = vunpack.c.l.b16 %v1299
        %v1364 = vunpack.c.l.b16 %v1300
        %v1365 = vunpack.c.l.b16 %v1301
        %v1366 = vunpack.c.l.b16 %v1302
        %v1367 = vunpack.c.l.b16 %v1303
        %v1368 = vunpack.c.l.b16 %v1304
        %v1369 = vunpack.c.l.b16 %v1305
        %v1370 = vunpack.c.l.b16 %v1306
        %v1371 = vunpack.c.l.b16 %v1307
        %v1372 = vunpack.c.l.b16 %v1308
        %v1373 = vunpack.c.l.b16 %v1309
        %v1374 = vunpack.c.l.b16 %v1310
        %v1375 = vunpack.c.l.b16 %v1311
        %v1376 = vunpack.c.l.b16 %v1312
        %v1377 = vunpack.c.l.b16 %v1313
        %v1378 = vunpack.c.l.b16 %v1314
        %v1379 = vunpack.c.l.b16 %v1315
        %v1380 = vunpack.c.l.b16 %v1316
        %v1381 = vpack.c.b16 %v1350, %v1349
        %v1382 = vpack.c.b16 %v1352, %v1351
        %v1383 = vpack.c.b16 %v1354, %v1353
        %v1384 = vpack.c.b16 %v1356, %v1355
        %v1385 = vpack.c.b16 %v1358, %v1357
        %v1386 = vpack.c.b16 %v1360, %v1359
        %v1387 = vpack.c.b16 %v1362, %v1361
        %v1388 = vpack.c.b16 %v1364, %v1363
        %v1389 = vpack.c.b16 %v1366, %v1365
        %v1390 = vpack.c.b16 %v1368, %v1367
        %v1391 = vpack.c.b16 %v1370, %v1369
        %v1392 = vpack.c.b16 %v1372, %v1371
        %v1393 = vpack.c.b16 %v1374, %v1373
        %v1394 = vpack.c.b16 %v1376, %v1375
        %v1395 = vpack.c.b16 %v1378, %v1377
        %v1396 = vpack.c.b16 %v1380, %v1379
        %1413 = vmatpush.bf16.msra.mxu0 %v1388
        %1414 = vmatpush.bf16.msra.mxu0 %v1387
        %1415 = vmatpush.bf16.msra.mxu0 %v1386
        %1416 = vmatpush.bf16.msra.mxu0 %v1385
        %1417 = vmatpush.bf16.msra.mxu0 %v1384
        %1418 = vmatpush.bf16.msra.mxu0 %v1383
        %1419 = vmatpush.bf16.msra.mxu0 %v1382
        %1420 = vmatpush.bf16.msra.mxu0 %v1381
        %1421 = vmatmul.bf16.gmra.mxu0 %v1277
        %v1422 = vpop.f32.mrf.mxu0
        %v1423 = vadd.f32 0.0, %v1422
        %v1424 = vpop.f32.mrf.mxu0
        %v1425 = vadd.f32 0.0, %v1424
        %1426 = vdwg.mxu0
        %1427 = vmatpush.bf16.msra.mxu0 %v1396
        %1428 = vmatpush.bf16.msra.mxu0 %v1395
        %1429 = vmatpush.bf16.msra.mxu0 %v1394
        %1430 = vmatpush.bf16.msra.mxu0 %v1393
        %1431 = vmatpush.bf16.msra.mxu0 %v1392
        %1432 = vmatpush.bf16.msra.mxu0 %v1391
        %1433 = vmatpush.bf16.msra.mxu0 %v1390
        %1434 = vmatpush.bf16.msra.mxu0 %v1389
        %1435 = vmatmul.bf16.gmra.mxu0 %v1283
        %v1436 = vpop.f32.mrf.mxu0
        %v1437 = vadd.f32 %v1423, %v1436
        %v1438 = vpop.f32.mrf.mxu0
        %v1439 = vadd.f32 %v1425, %v1438
        %1440 = vdwg.mxu0
        %v1443 = vunpack.c.l.b16 %v1271
        %v1444 = vunpack.c.l.b16 %v1272
        %v1445 = vpack.c.b16 %v1444, %v1443
        %v1447 = vld [vmem:[#allocation11] sm:$0xf]
        %v1448 = vld [vmem:[#allocation11 + $0x4] sm:$0xf]
        %v1449 = vld [vmem:[#allocation11 + $0x8] sm:$0xf]
        %v1450 = vld [vmem:[#allocation11 + $0xc] sm:$0xf]
        %v1451 = vld [vmem:[#allocation11 + $0x10] sm:$0xf]
        %v1452 = vld [vmem:[#allocation11 + $0x14] sm:$0xf]
        %v1453 = vld [vmem:[#allocation11 + $0x18] sm:$0xf]
        %v1454 = vld [vmem:[#allocation11 + $0x1c] sm:$0xf]
        %v1455 = vld [vmem:[#allocation11 + $0x20] sm:$0xf]
        %v1456 = vld [vmem:[#allocation11 + $0x24] sm:$0xf]
        %v1457 = vld [vmem:[#allocation11 + $0x28] sm:$0xf]
        %v1458 = vld [vmem:[#allocation11 + $0x2c] sm:$0xf]
        %v1459 = vld [vmem:[#allocation11 + $0x30] sm:$0xf]
        %v1460 = vld [vmem:[#allocation11 + $0x34] sm:$0xf]
        %v1461 = vld [vmem:[#allocation11 + $0x38] sm:$0xf]
        %v1462 = vld [vmem:[#allocation11 + $0x3c] sm:$0xf]
        %v1463 = vld [vmem:[#allocation11 + $0x40] sm:$0xf]
        %v1464 = vld [vmem:[#allocation11 + $0x44] sm:$0xf]
        %v1465 = vld [vmem:[#allocation11 + $0x48] sm:$0xf]
        %v1466 = vld [vmem:[#allocation11 + $0x4c] sm:$0xf]
        %v1467 = vld [vmem:[#allocation11 + $0x50] sm:$0xf]
        %v1468 = vld [vmem:[#allocation11 + $0x54] sm:$0xf]
        %v1469 = vld [vmem:[#allocation11 + $0x58] sm:$0xf]
        %v1470 = vld [vmem:[#allocation11 + $0x5c] sm:$0xf]
        %v1471 = vld [vmem:[#allocation11 + $0x60] sm:$0xf]
        %v1472 = vld [vmem:[#allocation11 + $0x64] sm:$0xf]
        %v1473 = vld [vmem:[#allocation11 + $0x68] sm:$0xf]
        %v1474 = vld [vmem:[#allocation11 + $0x6c] sm:$0xf]
        %v1475 = vld [vmem:[#allocation11 + $0x70] sm:$0xf]
        %v1476 = vld [vmem:[#allocation11 + $0x74] sm:$0xf]
        %v1477 = vld [vmem:[#allocation11 + $0x78] sm:$0xf]
        %v1478 = vld [vmem:[#allocation11 + $0x7c] sm:$0xf]
        %v1511 = vunpack.c.l.b16 %v1447
        %v1512 = vunpack.c.l.b16 %v1448
        %v1513 = vunpack.c.l.b16 %v1449
        %v1514 = vunpack.c.l.b16 %v1450
        %v1515 = vunpack.c.l.b16 %v1451
        %v1516 = vunpack.c.l.b16 %v1452
        %v1517 = vunpack.c.l.b16 %v1453
        %v1518 = vunpack.c.l.b16 %v1454
        %v1519 = vunpack.c.l.b16 %v1455
        %v1520 = vunpack.c.l.b16 %v1456
        %v1521 = vunpack.c.l.b16 %v1457
        %v1522 = vunpack.c.l.b16 %v1458
        %v1523 = vunpack.c.l.b16 %v1459
        %v1524 = vunpack.c.l.b16 %v1460
        %v1525 = vunpack.c.l.b16 %v1461
        %v1526 = vunpack.c.l.b16 %v1462
        %v1527 = vunpack.c.l.b16 %v1463
        %v1528 = vunpack.c.l.b16 %v1464
        %v1529 = vunpack.c.l.b16 %v1465
        %v1530 = vunpack.c.l.b16 %v1466
        %v1531 = vunpack.c.l.b16 %v1467
        %v1532 = vunpack.c.l.b16 %v1468
        %v1533 = vunpack.c.l.b16 %v1469
        %v1534 = vunpack.c.l.b16 %v1470
        %v1535 = vunpack.c.l.b16 %v1471
        %v1536 = vunpack.c.l.b16 %v1472
        %v1537 = vunpack.c.l.b16 %v1473
        %v1538 = vunpack.c.l.b16 %v1474
        %v1539 = vunpack.c.l.b16 %v1475
        %v1540 = vunpack.c.l.b16 %v1476
        %v1541 = vunpack.c.l.b16 %v1477
        %v1542 = vunpack.c.l.b16 %v1478
        %v1543 = vpack.c.b16 %v1512, %v1511
        %v1544 = vpack.c.b16 %v1514, %v1513
        %v1545 = vpack.c.b16 %v1516, %v1515
        %v1546 = vpack.c.b16 %v1518, %v1517
        %v1547 = vpack.c.b16 %v1520, %v1519
        %v1548 = vpack.c.b16 %v1522, %v1521
        %v1549 = vpack.c.b16 %v1524, %v1523
        %v1550 = vpack.c.b16 %v1526, %v1525
        %v1551 = vpack.c.b16 %v1528, %v1527
        %v1552 = vpack.c.b16 %v1530, %v1529
        %v1553 = vpack.c.b16 %v1532, %v1531
        %v1554 = vpack.c.b16 %v1534, %v1533
        %v1555 = vpack.c.b16 %v1536, %v1535
        %v1556 = vpack.c.b16 %v1538, %v1537
        %v1557 = vpack.c.b16 %v1540, %v1539
        %v1558 = vpack.c.b16 %v1542, %v1541
        %1575 = vmatpush.bf16.msra.mxu0 %v1550
        %1576 = vmatpush.bf16.msra.mxu0 %v1549
        %1577 = vmatpush.bf16.msra.mxu0 %v1548
        %1578 = vmatpush.bf16.msra.mxu0 %v1547
        %1579 = vmatpush.bf16.msra.mxu0 %v1546
        %1580 = vmatpush.bf16.msra.mxu0 %v1545
        %1581 = vmatpush.bf16.msra.mxu0 %v1544
        %1582 = vmatpush.bf16.msra.mxu0 %v1543
        %1583 = vmatmul.bf16.gmra.mxu0 %v1283
        %v1584 = vpop.f32.mrf.mxu0
        %v1585 = vadd.f32 0.0, %v1584
        %v1586 = vpop.f32.mrf.mxu0
        %v1587 = vadd.f32 0.0, %v1586
        %1588 = vdwg.mxu0
        %1589 = vmatpush.bf16.msra.mxu0 %v1558
        %1590 = vmatpush.bf16.msra.mxu0 %v1557
        %1591 = vmatpush.bf16.msra.mxu0 %v1556
        %1592 = vmatpush.bf16.msra.mxu0 %v1555
        %1593 = vmatpush.bf16.msra.mxu0 %v1554
        %1594 = vmatpush.bf16.msra.mxu0 %v1553
        %1595 = vmatpush.bf16.msra.mxu0 %v1552
        %1596 = vmatpush.bf16.msra.mxu0 %v1551
        %1597 = vmatmul.bf16.gmra.mxu0 %v1445
        %v1598 = vpop.f32.mrf.mxu0
        %v1599 = vadd.f32 %v1585, %v1598
        %v1600 = vpop.f32.mrf.mxu0
        %v1601 = vadd.f32 %v1587, %v1600
        %1602 = vdwg.mxu0
        %1603 = vst [vmem:[%s487] sm:$0xff] %v1437
        %1604 = vst [vmem:[%s487 + $0x8] sm:$0xff] %v1599
        %1605 = vst [vmem:[%s487 + $0x10] sm:$0xff] %v1439
        %1606 = vst [vmem:[%s487 + $0x18] sm:$0xff] %v1601
        %s1607 = sand.u32 %s275, 1
        %s1608 = scalar_lea.sflag [#allocation4], %s1607
        %s1609 = sand.u32 %s275, 1
        %s1610 = smul.addr %s1609, 32
        %s1611 = scalar_lea.vmem [#allocation13], %s1610
        // Predicated region
        $region89: #{tpu_custom_call.1} parent=63 // pred_check
          %p1612 = pneg %p285
        $region90: #{tpu_custom_call.1} parent=63 // pred_check_branch
          %1614 = sbr.rel (%p1612) target = $region92
        $region91: #{tpu_custom_call.1} parent=63 // pred_region
          %1616 = vsyncadd %s1608, 0
          %s1617 = smul.addr %s31, 4
          %s1618 = smul.addr %s1617, 8
          %s1619 = scalar_lea.hbm %s11, %s1618
          %s1620 = sshll.u32 %s1611, 4
          %s1621 = int_to_ptr.vmem [resolvable:$true] %s1620
          %s1622 = sshll.u32 %s1619, 4
          %s1623 = int_to_ptr.hbm [resolvable:$true] %s1622
          %1628 = dma.vmem_to_hbm [thread:$0]  %s1621, 512, %s1623, %s1608, 256, 256, 16
        $region92: #{tpu_custom_call.1} parent=63 // pred_fallthru
          _
      $region64: #{tpu_custom_call.1} parent=5 // pred_fallthru
        _
      %p1629 = scmp.le.s32.totalorder 2, %s26
      // Predicated region
      $region93: #{tpu_custom_call.1} parent=5 // pred_check
        %p1630 = pneg %p1629
      $region94: #{tpu_custom_call.1} parent=5 // pred_check_branch
        %1632 = sbr.rel (%p1630) target = $region96
      $region95: #{tpu_custom_call.1} parent=5 // pred_region
        %s1633 = ssub.s32 %s26, 2
        // Predicated region
        $region97: #{tpu_custom_call.1} parent=95 // pred_check
          %p1634 = pneg %p291
        $region98: #{tpu_custom_call.1} parent=95 // pred_check_branch
          %1636 = sbr.rel (%p1634) target = $region100
        $region99: #{tpu_custom_call.1} parent=95 // pred_region
          %s1637 = sand.u32 %s276, 1
          %s1638 = scalar_lea.sflag [#allocation4], %s1637
          %s1639 = sand.u32 %s276, 1
          %s1640 = smul.addr %s1639, 32
          %s1641 = scalar_lea.vmem [#allocation13], %s1640
          %1643 = dma.done %s1638, 512
        $region100: #{tpu_custom_call.1} parent=95 // pred_fallthru
          _
      $region96: #{tpu_custom_call.1} parent=5 // pred_fallthru
        _
    $region6: #{tpu_custom_call.1} parent=1 // loop_footer
      %s30 = sadd.s32 1, %s26
    $region7: #{tpu_custom_call.1} parent=1 // loop_footer_branch
      %25 = sbr.rel target = $region3
    $region8: #{tpu_custom_call.1} parent=1 // loop_exit
      _
    %1644 = vsyncpa [#allocation3], 1
    %s1645 = scalar_lea.sflag [#allocation3], 1
    %1646 = vsyncpa %s1645, 1
    %1647 = vsyncpa [#allocation6], 1
    %1648 = vsyncpa [#allocation9], 1
    %1649 = vsyncpa [#allocation12], 1
    %1650 = vsyncpa [#allocation4], 1
    %s1651 = scalar_lea.sflag [#allocation4], 1
    %1652 = vsyncpa %s1651, 1

</llo_original>
